<compile_context>
chip_gen: v7x
topology: tpu7x:2x2x1
jax: 0.10.0
libtpu: 0.0.40
codegen_flags: <defaults>
</compile_context>

<pallas_src>
import functools

import jax
import jax.numpy as jnp
from jax.experimental import pallas as pl
from jax.experimental.pallas import tpu as pltpu


# ----------------------------------------------------------------------------
# Synthetic CLIP vision config
# ----------------------------------------------------------------------------
IMAGE_SIZE = 16
PATCH_SIZE = 8
CHANNELS = 3
HIDDEN = 32
HEADS = 4
HEAD_DIM = HIDDEN // HEADS
INTERMEDIATE = 64
NUM_LAYERS = 3
SELECT_LAYER = -2          # args.mm_vision_select_layer
SELECT_FEATURE = "patch"   # args.mm_vision_select_feature
LN_EPS = 1e-5

# hidden_states list = [post-pre-layernorm embeddings, layer1_out, ..., layerL_out]
SELECT_IDX = (NUM_LAYERS + 1 + SELECT_LAYER) % (NUM_LAYERS + 1)


# ----------------------------------------------------------------------------
# Parameters (PyTorch-like layout) + packing for the fused kernel
# ----------------------------------------------------------------------------
def init_params(key):
    num_patches = (IMAGE_SIZE // PATCH_SIZE) ** 2
    seq = num_patches + 1
    keys = iter(jax.random.split(key, 8 + 12 * NUM_LAYERS))

    def nrm(shape, scale=0.02):
        return (scale * jax.random.normal(next(keys), shape)).astype(jnp.float32)

    params = {
        # conv weight stored as (C*P*P, hidden)  (im2col matmul form, bias=False)
        "patch_w": nrm((CHANNELS * PATCH_SIZE * PATCH_SIZE, HIDDEN)),
        "class_embedding": nrm((HIDDEN,)),
        "pos_emb": nrm((seq, HIDDEN)),
        "pre_ln_g": jnp.ones((HIDDEN,), jnp.float32),
        "pre_ln_b": jnp.zeros((HIDDEN,), jnp.float32),
        "layers": [],
    }
    for _ in range(NUM_LAYERS):
        params["layers"].append({
            "ln1_g": jnp.ones((HIDDEN,), jnp.float32),
            "ln1_b": jnp.zeros((HIDDEN,), jnp.float32),
            "q_w": nrm((HIDDEN, HIDDEN)), "q_b": nrm((HIDDEN,)),
            "k_w": nrm((HIDDEN, HIDDEN)), "k_b": nrm((HIDDEN,)),
            "v_w": nrm((HIDDEN, HIDDEN)), "v_b": nrm((HIDDEN,)),
            "o_w": nrm((HIDDEN, HIDDEN)), "o_b": nrm((HIDDEN,)),
            "ln2_g": jnp.ones((HIDDEN,), jnp.float32),
            "ln2_b": jnp.zeros((HIDDEN,), jnp.float32),
            "fc1_w": nrm((HIDDEN, INTERMEDIATE)), "fc1_b": nrm((INTERMEDIATE,)),
            "fc2_w": nrm((INTERMEDIATE, HIDDEN)), "fc2_b": nrm((HIDDEN,)),
        })
    return params


def pack_params(params):
    """Fold/stack/cast parameters for the fused tower kernel (off the hot path).

    Matmul weights are pre-cast to bf16 (MXU-native on v5e/v6e/v7x, halves their
    DMA/VMEM footprint); biases and layernorm params stay f32 for f32 VPU math.
    """
    scale = HEAD_DIM ** -0.5
    layers = params["layers"]

    def stack(name):
        return jnp.stack([lyr[name] for lyr in layers])

    # Fused QKV weights/bias; head-dim scale folded into the Q part.
    qkv_w = jnp.concatenate(
        [stack("q_w") * scale, stack("k_w"), stack("v_w")], axis=-1)          # (L, D, 3D)
    qkv_b = jnp.concatenate(
        [stack("q_b") * scale, stack("k_b"), stack("v_b")], axis=-1)[:, None, :]  # (L, 1, 3D)

    bf16 = jnp.bfloat16
    return {
        "patch_w": params["patch_w"].astype(bf16),                             # (C*P*P, D)
        # class_embedding folded into row 0 of the position-embedding table
        "embed_bias": params["pos_emb"].at[0].add(params["class_embedding"]),  # (S, D) f32
        "pre_ln": jnp.stack([params["pre_ln_g"], params["pre_ln_b"]]),         # (2, D)
        "ln1": jnp.stack([jnp.stack([l["ln1_g"], l["ln1_b"]]) for l in layers]),   # (L, 2, D)
        "qkv_w": qkv_w.astype(bf16),                                           # (L, D, 3D)
        "qkv_b": qkv_b,                                                        # (L, 1, 3D) f32
        "o_w": stack("o_w").astype(bf16),                                      # (L, D, D)
        "o_b": stack("o_b")[:, None, :],                                       # (L, 1, D) f32
        "ln2": jnp.stack([jnp.stack([l["ln2_g"], l["ln2_b"]]) for l in layers]),
        "fc1_w": stack("fc1_w").astype(bf16), "fc1_b": stack("fc1_b")[:, None, :],
        "fc2_w": stack("fc2_w").astype(bf16), "fc2_b": stack("fc2_b")[:, None, :],
    }


# ----------------------------------------------------------------------------
# Fused tower kernel: one grid step per PACK of B_blk images
# ----------------------------------------------------------------------------
def _tower_kernel(patches_ref, mask_ref, patch_w_ref, embed_ref, pre_ln_ref,
                  ln1_ref, qkv_w_ref, qkv_b_ref, o_w_ref, o_b_ref,
                  ln2_ref, fc1_w_ref, fc1_b_ref, fc2_w_ref, fc2_b_ref,
                  out_ref, ctx_ref, *, num_layers, heads, head_dim,
                  select_idx, eps):
    R, D = embed_ref.shape                       # R = B_blk * S packed token rows

    def layer_norm(x, gb):                       # gb: (2, D) -> row0 gamma, row1 beta
        mean = jnp.mean(x, axis=-1, keepdims=True)
        var = jnp.mean((x - mean) ** 2, axis=-1, keepdims=True)
        return (x - mean) * jax.lax.rsqrt(var + eps) * gb[0:1, :] + gb[1:2, :]

    def mm(a, b):                                # bf16 MXU operands, f32 accumulate
        return jnp.dot(a.astype(jnp.bfloat16), b.astype(jnp.bfloat16),
                       preferred_element_type=jnp.float32)

    mask = mask_ref[...]                         # (R, R) additive segment mask (f32)

    # Patch embedding: im2col matmul over all packed rows (each image's row 0 is
    # a zero CLS slot), then add (class_embedding-folded) position embeddings.
    hs = mm(patches_ref[0], patch_w_ref[...]) + embed_ref[...]                 # (R, D)
    hs = layer_norm(hs, pre_ln_ref[...])                                       # pre_layrnorm

    selected = hs if select_idx == 0 else None

    # NOTE: static unroll is fine at L=3; at real CLIP depths switch to
    # lax.fori_loop (or a layer grid axis) to bound live ranges / compile time.
    for l in range(num_layers):
        # ---- self-attention block ----
        residual = hs
        h = layer_norm(hs, ln1_ref[l])
        qkv = mm(h, qkv_w_ref[l]) + qkv_b_ref[l]                               # (R, 3D)

        for hh in range(heads):                  # static unroll over heads
            lo, hi = hh * head_dim, (hh + 1) * head_dim
            qh = qkv[:, lo:hi]                   # Q already scaled by head_dim**-0.5
            kh = qkv[:, D + lo:D + hi]
            vh = qkv[:, 2 * D + lo:2 * D + hi]
            # scores over ALL packed rows; segment mask removes cross-image pairs
            s = jax.lax.dot_general(qh.astype(jnp.bfloat16), kh.astype(jnp.bfloat16),
                                    (((1,), (1,)), ((), ())),
                                    preferred_element_type=jnp.float32)        # (R, R)
            s = s + mask
            s = s - jnp.max(s, axis=-1, keepdims=True)
            p = jnp.exp(s)
            p = p * pl.reciprocal(jnp.sum(p, axis=-1, keepdims=True), approx=True)
            # head-concat via the VMEM scratch: each head writes its lane slice
            ctx_ref[:, lo:hi] = mm(p, vh)                                      # (R, Dh)

        # single (R, D) @ (D, D) output projection over the concatenated heads
        hs = residual + mm(ctx_ref[...], o_w_ref[l]) + o_b_ref[l]

        # ---- MLP block (quick_gelu) ----
        residual = hs
        h = layer_norm(hs, ln2_ref[l])
        h = mm(h, fc1_w_ref[l]) + fc1_b_ref[l]
        h = h * jax.nn.sigmoid(1.702 * h)        # CLIP "quick_gelu"
        h = mm(h, fc2_w_ref[l]) + fc2_b_ref[l]
        hs = residual + h

        if select_idx == l + 1:
            selected = hs

    # Store the FULL block (no sublane-shifting row slice here); the CLS rows
    # are dropped in the XLA wrapper where it is free.
    out_ref[0] = selected


def _full_spec(arr):
    """Whole-array BlockSpec whose block index ignores the grid position.

    TODO(synk): at real CLIP-L scale on v7x (64 MiB VMEM) these all-layers
    resident weight specs should become per-layer streamed blocks (layer grid
    axis, "arbitrary") and/or pipeline_mode=pl.Buffered(1); at this toy size the
    stacked weights are a few KiB so it is irrelevant.
    """
    idx = (0,) * arr.ndim
    return pl.BlockSpec(arr.shape, lambda b, _i=idx: _i)


def _batch_split(batch):
    """Pick (num_grid_steps, images_per_step).

    Prefer >= 2 grid steps so both v7x TensorCores get work, while packing as
    many images per step as possible (fills sublanes / MXU rows).  Cap the pack
    size so per-step buffers and the (R, R) packed score tiles stay small.
    """
    nsteps = 2 if (batch >= 2 and batch % 2 == 0) else 1
    b_blk = batch // nsteps
    while b_blk > 64 and b_blk % 2 == 0:
        b_blk //= 2
        nsteps *= 2
    return nsteps, b_blk


# ----------------------------------------------------------------------------
# Forward pass (== CLIPVisionTower.forward)
# ----------------------------------------------------------------------------
def clip_vision_tower_forward(images, packed):
    """images: (B, C, H, W) NCHW array, or a list of (C, H, W)/(1, C, H, W) images."""
    if isinstance(images, (list, tuple)):
        feats = []
        for im in images:
            im = jnp.asarray(im)
            if im.ndim == 3:
                im = im[None]
            feats.append(clip_vision_tower_forward(im, packed))
        return feats

    if SELECT_FEATURE not in ("patch", "cls_patch"):
        raise ValueError(f"Unexpected select feature: {SELECT_FEATURE}")

    in_dtype = images.dtype
    x = images.astype(jnp.float32)
    B, C, H, W = x.shape
    P = PATCH_SIZE
    gh, gw = H // P, W // P
    num_patches = gh * gw
    S = num_patches + 1
    CPP = C * P * P
    D = HIDDEN

    nsteps, b_blk = _batch_split(B)
    R = b_blk * S                                     # packed token rows per grid step

    # im2col for the stride==kernel conv; prepend one zero row per image (CLS
    # slot) and pack b_blk images per grid step along the token axis.
    patches = (x.reshape(B, C, gh, P, gw, P)
                .transpose(0, 2, 4, 1, 3, 5)
                .reshape(B, num_patches, CPP))
    patches = jnp.pad(patches, ((0, 0), (1, 0), (0, 0)))          # (B, S, CPP)
    patches = patches.reshape(nsteps, R, CPP).astype(jnp.bfloat16)

    # Position (+class) embedding tiled over the packed images; additive segment
    # mask that removes cross-image attention inside a packed step.
    embed_bias = jnp.tile(packed["embed_bias"], (b_blk, 1))        # (R, D) f32
    seg = jnp.repeat(jnp.arange(b_blk, dtype=jnp.int32), S)        # (R,)
    attn_mask = jnp.where(seg[:, None] == seg[None, :], 0.0, -1e30).astype(jnp.float32)

    kernel = functools.partial(
        _tower_kernel,
        num_layers=NUM_LAYERS, heads=HEADS, head_dim=HEAD_DIM,
        select_idx=SELECT_IDX, eps=LN_EPS)

    weight_names = ("patch_w", "pre_ln", "ln1", "qkv_w", "qkv_b",
                    "o_w", "o_b", "ln2", "fc1_w", "fc1_b", "fc2_w", "fc2_b")
    weights = [packed[n] for n in weight_names]

    out = pl.pallas_call(
        kernel,
        out_shape=jax.ShapeDtypeStruct((nsteps, R, D), jnp.float32),
        grid=(nsteps,),
        in_specs=[pl.BlockSpec((1, R, CPP), lambda b: (b, 0, 0)),    # packed patches
                  _full_spec(attn_mask),                             # segment mask
                  _full_spec(weights[0]),                            # patch_w
                  _full_spec(embed_bias)]                            # tiled pos emb
                 + [_full_spec(w) for w in weights[1:]],
        out_specs=pl.BlockSpec((1, R, D), lambda b: (b, 0, 0)),
        scratch_shapes=[pltpu.VMEM((R, D), jnp.float32)],            # head-concat buffer
        compiler_params=pltpu.CompilerParams(
            dimension_semantics=("parallel",)),      # shards steps over v7x's 2 TCs
    )(patches, attn_mask, weights[0], embed_bias, *weights[1:])

    # Unpack (nsteps, B_blk*S, D) -> (B, S, D) and do feature_select in XLA
    # (dropping the CLS row here is free; in-kernel it cost a sublane shift).
    out = out.reshape(B, S, D)
    if SELECT_FEATURE == "patch":
        out = out[:, 1:, :]
    return out.astype(in_dtype)


if __name__ == "__main__":
    key = jax.random.PRNGKey(0)
    pkey, xkey = jax.random.split(key)
    params = init_params(pkey)
    packed = pack_params(params)

    B = 4   # even batch -> 2 grid steps x 2 packed images per step
    images = jax.random.normal(xkey, (B, CHANNELS, IMAGE_SIZE, IMAGE_SIZE), jnp.float32)

    fwd = jax.jit(clip_vision_tower_forward)
    out = fwd(images, packed)
    out = jax.block_until_ready(out)

    num_patches = (IMAGE_SIZE // PATCH_SIZE) ** 2
    assert out.shape == (B, num_patches, HIDDEN), out.shape
    assert bool(jnp.all(jnp.isfinite(out)))
    print("KERNEL_OK")
</pallas_src>

<mosaic_0001>
module attributes {stable_mosaic.version = 11 : i64} {
  func.func @_tower_kernel(%arg0: i32, %arg1: memref<1x10x192xbf16, #tpu.memory_space<vmem>>, %arg2: memref<10x10xf32, #tpu.memory_space<vmem>>, %arg3: memref<192x32xbf16, #tpu.memory_space<vmem>>, %arg4: memref<10x32xf32, #tpu.memory_space<vmem>>, %arg5: memref<2x32xf32, #tpu.memory_space<vmem>>, %arg6: memref<3x2x32xf32, #tpu.memory_space<vmem>>, %arg7: memref<3x32x96xbf16, #tpu.memory_space<vmem>>, %arg8: memref<3x1x96xf32, #tpu.memory_space<vmem>>, %arg9: memref<3x32x32xbf16, #tpu.memory_space<vmem>>, %arg10: memref<3x1x32xf32, #tpu.memory_space<vmem>>, %arg11: memref<3x2x32xf32, #tpu.memory_space<vmem>>, %arg12: memref<3x32x64xbf16, #tpu.memory_space<vmem>>, %arg13: memref<3x1x64xf32, #tpu.memory_space<vmem>>, %arg14: memref<3x64x32xbf16, #tpu.memory_space<vmem>>, %arg15: memref<3x1x32xf32, #tpu.memory_space<vmem>>, %arg16: memref<1x10x32xf32, #tpu.memory_space<vmem>>, %arg17: memref<10x32xf32, #tpu.memory_space<vmem>>) attributes {dimension_semantics = [#tpu.dimension_semantics<parallel>], iteration_bounds = array<i64: 2>, scalar_prefetch = 0 : i64, scratch_operands = 1 : i64, tpu.core_type = #tpu.core_type<tc>, window_params = [{transform_indices = @transform_0, window_bounds = array<i64: 1, 10, 192>}, {pipeline_mode = #tpu.pipeline_mode<synchronous>, transform_indices = @transform_1, window_bounds = array<i64: 10, 10>}, {pipeline_mode = #tpu.pipeline_mode<synchronous>, transform_indices = @transform_2, window_bounds = array<i64: 192, 32>}, {pipeline_mode = #tpu.pipeline_mode<synchronous>, transform_indices = @transform_3, window_bounds = array<i64: 10, 32>}, {pipeline_mode = #tpu.pipeline_mode<synchronous>, transform_indices = @transform_4, window_bounds = array<i64: 2, 32>}, {pipeline_mode = #tpu.pipeline_mode<synchronous>, transform_indices = @transform_5, window_bounds = array<i64: 3, 2, 32>}, {pipeline_mode = #tpu.pipeline_mode<synchronous>, transform_indices = @transform_6, window_bounds = array<i64: 3, 32, 96>}, {pipeline_mode = #tpu.pipeline_mode<synchronous>, transform_indices = @transform_7, window_bounds = array<i64: 3, 1, 96>}, {pipeline_mode = #tpu.pipeline_mode<synchronous>, transform_indices = @transform_8, window_bounds = array<i64: 3, 32, 32>}, {pipeline_mode = #tpu.pipeline_mode<synchronous>, transform_indices = @transform_9, window_bounds = array<i64: 3, 1, 32>}, {pipeline_mode = #tpu.pipeline_mode<synchronous>, transform_indices = @transform_10, window_bounds = array<i64: 3, 2, 32>}, {pipeline_mode = #tpu.pipeline_mode<synchronous>, transform_indices = @transform_11, window_bounds = array<i64: 3, 32, 64>}, {pipeline_mode = #tpu.pipeline_mode<synchronous>, transform_indices = @transform_12, window_bounds = array<i64: 3, 1, 64>}, {pipeline_mode = #tpu.pipeline_mode<synchronous>, transform_indices = @transform_13, window_bounds = array<i64: 3, 64, 32>}, {pipeline_mode = #tpu.pipeline_mode<synchronous>, transform_indices = @transform_14, window_bounds = array<i64: 3, 1, 32>}, {transform_indices = @transform_15, window_bounds = array<i64: 1, 10, 32>}]} {
    %c0 = arith.constant 0 : index
    %c0_0 = arith.constant 0 : index
    %0 = vector.load %arg2[%c0, %c0_0] : memref<10x10xf32, #tpu.memory_space<vmem>>, vector<10x10xf32>
    %c0_1 = arith.constant 0 : index
    %c0_2 = arith.constant 0 : index
    %c0_3 = arith.constant 0 : index
    %1 = vector.load %arg1[%c0_1, %c0_2, %c0_3] : memref<1x10x192xbf16, #tpu.memory_space<vmem>>, vector<1x10x192xbf16>
    %2 = vector.shape_cast %1 : vector<1x10x192xbf16> to vector<10x192xbf16>
    %c0_4 = arith.constant 0 : index
    %c0_5 = arith.constant 0 : index
    %3 = vector.load %arg3[%c0_4, %c0_5] : memref<192x32xbf16, #tpu.memory_space<vmem>>, vector<192x32xbf16>
    %cst = arith.constant dense<0.000000e+00> : vector<10x32xf32>
    %4 = tpu.matmul %2, %3, %cst {dimension_numbers = #tpu.dot_dimension_numbers<[1], [0], [0], [1], [0, 0, 1, 1], [], []>} : vector<10x192xbf16>, vector<192x32xbf16>, vector<10x32xf32> -> vector<10x32xf32>
    %c0_6 = arith.constant 0 : index
    %c0_7 = arith.constant 0 : index
    %5 = vector.load %arg4[%c0_6, %c0_7] : memref<10x32xf32, #tpu.memory_space<vmem>>, vector<10x32xf32>
    %6 = arith.addf %4, %5 : vector<10x32xf32>
    %c0_8 = arith.constant 0 : index
    %c0_9 = arith.constant 0 : index
    %7 = vector.load %arg5[%c0_8, %c0_9] : memref<2x32xf32, #tpu.memory_space<vmem>>, vector<2x32xf32>
    %cst_10 = arith.constant dense<0.000000e+00> : vector<10xf32>
    %8 = vector.multi_reduction <add>, %6, %cst_10 [1] : vector<10x32xf32> to vector<10xf32>
    %9 = vector.shape_cast %8 : vector<10xf32> to vector<10x1xf32>
    %cst_11 = arith.constant 3.200000e+01 : f32
    %10 = vector.broadcast %cst_11 : f32 to vector<10x1xf32>
    %11 = arith.divf %9, %10 : vector<10x1xf32>
    %12 = vector.broadcast %11 : vector<10x1xf32> to vector<10x32xf32>
    %13 = arith.subf %6, %12 : vector<10x32xf32>
    %14 = arith.mulf %13, %13 : vector<10x32xf32>
    %cst_12 = arith.constant dense<0.000000e+00> : vector<10xf32>
    %15 = vector.multi_reduction <add>, %14, %cst_12 [1] : vector<10x32xf32> to vector<10xf32>
    %16 = vector.shape_cast %15 : vector<10xf32> to vector<10x1xf32>
    %cst_13 = arith.constant 3.200000e+01 : f32
    %17 = vector.broadcast %cst_13 : f32 to vector<10x1xf32>
    %18 = arith.divf %16, %17 : vector<10x1xf32>
    %19 = vector.broadcast %11 : vector<10x1xf32> to vector<10x32xf32>
    %20 = arith.subf %6, %19 : vector<10x32xf32>
    %cst_14 = arith.constant 9.99999974E-6 : f32
    %21 = vector.broadcast %cst_14 : f32 to vector<10x1xf32>
    %22 = arith.addf %18, %21 : vector<10x1xf32>
    %23 = math.rsqrt %22 : vector<10x1xf32>
    %24 = vector.broadcast %23 : vector<10x1xf32> to vector<10x32xf32>
    %25 = arith.mulf %20, %24 : vector<10x32xf32>
    %26 = vector.extract_strided_slice %7 {offsets = [0, 0], sizes = [1, 32], strides = [1, 1]} : vector<2x32xf32> to vector<1x32xf32>
    %27 = vector.broadcast %26 : vector<1x32xf32> to vector<10x32xf32>
    %28 = arith.mulf %25, %27 : vector<10x32xf32>
    %29 = vector.extract_strided_slice %7 {offsets = [1, 0], sizes = [1, 32], strides = [1, 1]} : vector<2x32xf32> to vector<1x32xf32>
    %30 = vector.broadcast %29 : vector<1x32xf32> to vector<10x32xf32>
    %31 = arith.addf %28, %30 : vector<10x32xf32>
    %c0_15 = arith.constant 0 : index
    %c0_16 = arith.constant 0 : index
    %c0_17 = arith.constant 0 : index
    %32 = vector.load %arg6[%c0_15, %c0_16, %c0_17] : memref<3x2x32xf32, #tpu.memory_space<vmem>>, vector<1x2x32xf32>
    %33 = vector.shape_cast %32 : vector<1x2x32xf32> to vector<2x32xf32>
    %cst_18 = arith.constant dense<0.000000e+00> : vector<10xf32>
    %34 = vector.multi_reduction <add>, %31, %cst_18 [1] : vector<10x32xf32> to vector<10xf32>
    %35 = vector.shape_cast %34 : vector<10xf32> to vector<10x1xf32>
    %cst_19 = arith.constant 3.200000e+01 : f32
    %36 = vector.broadcast %cst_19 : f32 to vector<10x1xf32>
    %37 = arith.divf %35, %36 : vector<10x1xf32>
    %38 = vector.broadcast %37 : vector<10x1xf32> to vector<10x32xf32>
    %39 = arith.subf %31, %38 : vector<10x32xf32>
    %40 = arith.mulf %39, %39 : vector<10x32xf32>
    %cst_20 = arith.constant dense<0.000000e+00> : vector<10xf32>
    %41 = vector.multi_reduction <add>, %40, %cst_20 [1] : vector<10x32xf32> to vector<10xf32>
    %42 = vector.shape_cast %41 : vector<10xf32> to vector<10x1xf32>
    %cst_21 = arith.constant 3.200000e+01 : f32
    %43 = vector.broadcast %cst_21 : f32 to vector<10x1xf32>
    %44 = arith.divf %42, %43 : vector<10x1xf32>
    %45 = vector.broadcast %37 : vector<10x1xf32> to vector<10x32xf32>
    %46 = arith.subf %31, %45 : vector<10x32xf32>
    %cst_22 = arith.constant 9.99999974E-6 : f32
    %47 = vector.broadcast %cst_22 : f32 to vector<10x1xf32>
    %48 = arith.addf %44, %47 : vector<10x1xf32>
    %49 = math.rsqrt %48 : vector<10x1xf32>
    %50 = vector.broadcast %49 : vector<10x1xf32> to vector<10x32xf32>
    %51 = arith.mulf %46, %50 : vector<10x32xf32>
    %52 = vector.extract_strided_slice %33 {offsets = [0, 0], sizes = [1, 32], strides = [1, 1]} : vector<2x32xf32> to vector<1x32xf32>
    %53 = vector.broadcast %52 : vector<1x32xf32> to vector<10x32xf32>
    %54 = arith.mulf %51, %53 : vector<10x32xf32>
    %55 = vector.extract_strided_slice %33 {offsets = [1, 0], sizes = [1, 32], strides = [1, 1]} : vector<2x32xf32> to vector<1x32xf32>
    %56 = vector.broadcast %55 : vector<1x32xf32> to vector<10x32xf32>
    %57 = arith.addf %54, %56 : vector<10x32xf32>
    %c0_23 = arith.constant 0 : index
    %c0_24 = arith.constant 0 : index
    %c0_25 = arith.constant 0 : index
    %58 = vector.load %arg7[%c0_23, %c0_24, %c0_25] : memref<3x32x96xbf16, #tpu.memory_space<vmem>>, vector<1x32x96xbf16>
    %59 = vector.shape_cast %58 : vector<1x32x96xbf16> to vector<32x96xbf16>
    %60 = arith.truncf %57 : vector<10x32xf32> to vector<10x32xbf16>
    %cst_26 = arith.constant dense<0.000000e+00> : vector<10x96xf32>
    %61 = tpu.matmul %60, %59, %cst_26 {dimension_numbers = #tpu.dot_dimension_numbers<[1], [0], [0], [1], [0, 0, 1, 1], [], []>} : vector<10x32xbf16>, vector<32x96xbf16>, vector<10x96xf32> -> vector<10x96xf32>
    %c0_27 = arith.constant 0 : index
    %c0_28 = arith.constant 0 : index
    %c0_29 = arith.constant 0 : index
    %62 = vector.load %arg8[%c0_27, %c0_28, %c0_29] : memref<3x1x96xf32, #tpu.memory_space<vmem>>, vector<1x1x96xf32>
    %63 = vector.shape_cast %62 : vector<1x1x96xf32> to vector<1x96xf32>
    %64 = vector.broadcast %63 : vector<1x96xf32> to vector<10x96xf32>
    %65 = arith.addf %61, %64 : vector<10x96xf32>
    %66 = vector.extract_strided_slice %65 {offsets = [0, 0], sizes = [10, 8], strides = [1, 1]} : vector<10x96xf32> to vector<10x8xf32>
    %67 = vector.extract_strided_slice %65 {offsets = [0, 32], sizes = [10, 8], strides = [1, 1]} : vector<10x96xf32> to vector<10x8xf32>
    %68 = vector.extract_strided_slice %65 {offsets = [0, 64], sizes = [10, 8], strides = [1, 1]} : vector<10x96xf32> to vector<10x8xf32>
    %69 = arith.truncf %66 : vector<10x8xf32> to vector<10x8xbf16>
    %70 = arith.truncf %67 : vector<10x8xf32> to vector<10x8xbf16>
    %cst_30 = arith.constant dense<0.000000e+00> : vector<10x10xf32>
    %71 = tpu.matmul %69, %70, %cst_30 {dimension_numbers = #tpu.dot_dimension_numbers<[1], [1], [0], [0], [0, 0, 1, 0], [], []>} : vector<10x8xbf16>, vector<10x8xbf16>, vector<10x10xf32> -> vector<10x10xf32>
    %72 = arith.addf %71, %0 : vector<10x10xf32>
    %cst_31 = arith.constant dense<0xFF800000> : vector<10xf32>
    %73 = vector.multi_reduction <maximumf>, %72, %cst_31 [1] : vector<10x10xf32> to vector<10xf32>
    %74 = vector.shape_cast %73 : vector<10xf32> to vector<10x1xf32>
    %75 = vector.broadcast %74 : vector<10x1xf32> to vector<10x10xf32>
    %76 = arith.subf %72, %75 : vector<10x10xf32>
    %77 = math.exp %76 : vector<10x10xf32>
    %cst_32 = arith.constant dense<0.000000e+00> : vector<10xf32>
    %78 = vector.multi_reduction <add>, %77, %cst_32 [1] : vector<10x10xf32> to vector<10xf32>
    %79 = vector.shape_cast %78 : vector<10xf32> to vector<10x1xf32>
    %80 = tpu.reciprocal %79 {approx = true} : vector<10x1xf32> -> vector<10x1xf32>
    %81 = vector.broadcast %80 : vector<10x1xf32> to vector<10x10xf32>
    %82 = arith.mulf %77, %81 : vector<10x10xf32>
    %83 = arith.truncf %82 : vector<10x10xf32> to vector<10x10xbf16>
    %84 = arith.truncf %68 : vector<10x8xf32> to vector<10x8xbf16>
    %cst_33 = arith.constant dense<0.000000e+00> : vector<10x8xf32>
    %85 = tpu.matmul %83, %84, %cst_33 {dimension_numbers = #tpu.dot_dimension_numbers<[1], [0], [0], [1], [0, 0, 1, 1], [], []>} : vector<10x10xbf16>, vector<10x8xbf16>, vector<10x8xf32> -> vector<10x8xf32>
    %c0_34 = arith.constant 0 : index
    %c0_35 = arith.constant 0 : index
    %86 = vector.load %arg17[%c0_34, %c0_35] : memref<10x32xf32, #tpu.memory_space<vmem>>, vector<10x8xf32>
    tpu.vector_store %arg17[%c0_34, %c0_35], %85 {strides = array<i32>} : memref<10x32xf32, #tpu.memory_space<vmem>>, vector<10x8xf32>,
    %87 = vector.extract_strided_slice %65 {offsets = [0, 8], sizes = [10, 8], strides = [1, 1]} : vector<10x96xf32> to vector<10x8xf32>
    %88 = vector.extract_strided_slice %65 {offsets = [0, 40], sizes = [10, 8], strides = [1, 1]} : vector<10x96xf32> to vector<10x8xf32>
    %89 = vector.extract_strided_slice %65 {offsets = [0, 72], sizes = [10, 8], strides = [1, 1]} : vector<10x96xf32> to vector<10x8xf32>
    %90 = arith.truncf %87 : vector<10x8xf32> to vector<10x8xbf16>
    %91 = arith.truncf %88 : vector<10x8xf32> to vector<10x8xbf16>
    %cst_36 = arith.constant dense<0.000000e+00> : vector<10x10xf32>
    %92 = tpu.matmul %90, %91, %cst_36 {dimension_numbers = #tpu.dot_dimension_numbers<[1], [1], [0], [0], [0, 0, 1, 0], [], []>} : vector<10x8xbf16>, vector<10x8xbf16>, vector<10x10xf32> -> vector<10x10xf32>
    %93 = arith.addf %92, %0 : vector<10x10xf32>
    %cst_37 = arith.constant dense<0xFF800000> : vector<10xf32>
    %94 = vector.multi_reduction <maximumf>, %93, %cst_37 [1] : vector<10x10xf32> to vector<10xf32>
    %95 = vector.shape_cast %94 : vector<10xf32> to vector<10x1xf32>
    %96 = vector.broadcast %95 : vector<10x1xf32> to vector<10x10xf32>
    %97 = arith.subf %93, %96 : vector<10x10xf32>
    %98 = math.exp %97 : vector<10x10xf32>
    %cst_38 = arith.constant dense<0.000000e+00> : vector<10xf32>
    %99 = vector.multi_reduction <add>, %98, %cst_38 [1] : vector<10x10xf32> to vector<10xf32>
    %100 = vector.shape_cast %99 : vector<10xf32> to vector<10x1xf32>
    %101 = tpu.reciprocal %100 {approx = true} : vector<10x1xf32> -> vector<10x1xf32>
    %102 = vector.broadcast %101 : vector<10x1xf32> to vector<10x10xf32>
    %103 = arith.mulf %98, %102 : vector<10x10xf32>
    %104 = arith.truncf %103 : vector<10x10xf32> to vector<10x10xbf16>
    %105 = arith.truncf %89 : vector<10x8xf32> to vector<10x8xbf16>
    %cst_39 = arith.constant dense<0.000000e+00> : vector<10x8xf32>
    %106 = tpu.matmul %104, %105, %cst_39 {dimension_numbers = #tpu.dot_dimension_numbers<[1], [0], [0], [1], [0, 0, 1, 1], [], []>} : vector<10x10xbf16>, vector<10x8xbf16>, vector<10x8xf32> -> vector<10x8xf32>
    %c0_40 = arith.constant 0 : index
    %c8 = arith.constant 8 : index
    %107 = vector.load %arg17[%c0_40, %c8] : memref<10x32xf32, #tpu.memory_space<vmem>>, vector<10x8xf32>
    tpu.vector_store %arg17[%c0_40, %c8], %106 {strides = array<i32>} : memref<10x32xf32, #tpu.memory_space<vmem>>, vector<10x8xf32>,
    %108 = vector.extract_strided_slice %65 {offsets = [0, 16], sizes = [10, 8], strides = [1, 1]} : vector<10x96xf32> to vector<10x8xf32>
    %109 = vector.extract_strided_slice %65 {offsets = [0, 48], sizes = [10, 8], strides = [1, 1]} : vector<10x96xf32> to vector<10x8xf32>
    %110 = vector.extract_strided_slice %65 {offsets = [0, 80], sizes = [10, 8], strides = [1, 1]} : vector<10x96xf32> to vector<10x8xf32>
    %111 = arith.truncf %108 : vector<10x8xf32> to vector<10x8xbf16>
    %112 = arith.truncf %109 : vector<10x8xf32> to vector<10x8xbf16>
    %cst_41 = arith.constant dense<0.000000e+00> : vector<10x10xf32>
    %113 = tpu.matmul %111, %112, %cst_41 {dimension_numbers = #tpu.dot_dimension_numbers<[1], [1], [0], [0], [0, 0, 1, 0], [], []>} : vector<10x8xbf16>, vector<10x8xbf16>, vector<10x10xf32> -> vector<10x10xf32>
    %114 = arith.addf %113, %0 : vector<10x10xf32>
    %cst_42 = arith.constant dense<0xFF800000> : vector<10xf32>
    %115 = vector.multi_reduction <maximumf>, %114, %cst_42 [1] : vector<10x10xf32> to vector<10xf32>
    %116 = vector.shape_cast %115 : vector<10xf32> to vector<10x1xf32>
    %117 = vector.broadcast %116 : vector<10x1xf32> to vector<10x10xf32>
    %118 = arith.subf %114, %117 : vector<10x10xf32>
    %119 = math.exp %118 : vector<10x10xf32>
    %cst_43 = arith.constant dense<0.000000e+00> : vector<10xf32>
    %120 = vector.multi_reduction <add>, %119, %cst_43 [1] : vector<10x10xf32> to vector<10xf32>
    %121 = vector.shape_cast %120 : vector<10xf32> to vector<10x1xf32>
    %122 = tpu.reciprocal %121 {approx = true} : vector<10x1xf32> -> vector<10x1xf32>
    %123 = vector.broadcast %122 : vector<10x1xf32> to vector<10x10xf32>
    %124 = arith.mulf %119, %123 : vector<10x10xf32>
    %125 = arith.truncf %124 : vector<10x10xf32> to vector<10x10xbf16>
    %126 = arith.truncf %110 : vector<10x8xf32> to vector<10x8xbf16>
    %cst_44 = arith.constant dense<0.000000e+00> : vector<10x8xf32>
    %127 = tpu.matmul %125, %126, %cst_44 {dimension_numbers = #tpu.dot_dimension_numbers<[1], [0], [0], [1], [0, 0, 1, 1], [], []>} : vector<10x10xbf16>, vector<10x8xbf16>, vector<10x8xf32> -> vector<10x8xf32>
    %c0_45 = arith.constant 0 : index
    %c16 = arith.constant 16 : index
    %128 = vector.load %arg17[%c0_45, %c16] : memref<10x32xf32, #tpu.memory_space<vmem>>, vector<10x8xf32>
    tpu.vector_store %arg17[%c0_45, %c16], %127 {strides = array<i32>} : memref<10x32xf32, #tpu.memory_space<vmem>>, vector<10x8xf32>,
    %129 = vector.extract_strided_slice %65 {offsets = [0, 24], sizes = [10, 8], strides = [1, 1]} : vector<10x96xf32> to vector<10x8xf32>
    %130 = vector.extract_strided_slice %65 {offsets = [0, 56], sizes = [10, 8], strides = [1, 1]} : vector<10x96xf32> to vector<10x8xf32>
    %131 = vector.extract_strided_slice %65 {offsets = [0, 88], sizes = [10, 8], strides = [1, 1]} : vector<10x96xf32> to vector<10x8xf32>
    %132 = arith.truncf %129 : vector<10x8xf32> to vector<10x8xbf16>
    %133 = arith.truncf %130 : vector<10x8xf32> to vector<10x8xbf16>
    %cst_46 = arith.constant dense<0.000000e+00> : vector<10x10xf32>
    %134 = tpu.matmul %132, %133, %cst_46 {dimension_numbers = #tpu.dot_dimension_numbers<[1], [1], [0], [0], [0, 0, 1, 0], [], []>} : vector<10x8xbf16>, vector<10x8xbf16>, vector<10x10xf32> -> vector<10x10xf32>
    %135 = arith.addf %134, %0 : vector<10x10xf32>
    %cst_47 = arith.constant dense<0xFF800000> : vector<10xf32>
    %136 = vector.multi_reduction <maximumf>, %135, %cst_47 [1] : vector<10x10xf32> to vector<10xf32>
    %137 = vector.shape_cast %136 : vector<10xf32> to vector<10x1xf32>
    %138 = vector.broadcast %137 : vector<10x1xf32> to vector<10x10xf32>
    %139 = arith.subf %135, %138 : vector<10x10xf32>
    %140 = math.exp %139 : vector<10x10xf32>
    %cst_48 = arith.constant dense<0.000000e+00> : vector<10xf32>
    %141 = vector.multi_reduction <add>, %140, %cst_48 [1] : vector<10x10xf32> to vector<10xf32>
    %142 = vector.shape_cast %141 : vector<10xf32> to vector<10x1xf32>
    %143 = tpu.reciprocal %142 {approx = true} : vector<10x1xf32> -> vector<10x1xf32>
    %144 = vector.broadcast %143 : vector<10x1xf32> to vector<10x10xf32>
    %145 = arith.mulf %140, %144 : vector<10x10xf32>
    %146 = arith.truncf %145 : vector<10x10xf32> to vector<10x10xbf16>
    %147 = arith.truncf %131 : vector<10x8xf32> to vector<10x8xbf16>
    %cst_49 = arith.constant dense<0.000000e+00> : vector<10x8xf32>
    %148 = tpu.matmul %146, %147, %cst_49 {dimension_numbers = #tpu.dot_dimension_numbers<[1], [0], [0], [1], [0, 0, 1, 1], [], []>} : vector<10x10xbf16>, vector<10x8xbf16>, vector<10x8xf32> -> vector<10x8xf32>
    %c0_50 = arith.constant 0 : index
    %c24 = arith.constant 24 : index
    %149 = vector.load %arg17[%c0_50, %c24] : memref<10x32xf32, #tpu.memory_space<vmem>>, vector<10x8xf32>
    tpu.vector_store %arg17[%c0_50, %c24], %148 {strides = array<i32>} : memref<10x32xf32, #tpu.memory_space<vmem>>, vector<10x8xf32>,
    %c0_51 = arith.constant 0 : index
    %c0_52 = arith.constant 0 : index
    %150 = vector.load %arg17[%c0_51, %c0_52] : memref<10x32xf32, #tpu.memory_space<vmem>>, vector<10x32xf32>
    %c0_53 = arith.constant 0 : index
    %c0_54 = arith.constant 0 : index
    %c0_55 = arith.constant 0 : index
    %151 = vector.load %arg9[%c0_53, %c0_54, %c0_55] : memref<3x32x32xbf16, #tpu.memory_space<vmem>>, vector<1x32x32xbf16>
    %152 = vector.shape_cast %151 : vector<1x32x32xbf16> to vector<32x32xbf16>
    %153 = arith.truncf %150 : vector<10x32xf32> to vector<10x32xbf16>
    %cst_56 = arith.constant dense<0.000000e+00> : vector<10x32xf32>
    %154 = tpu.matmul %153, %152, %cst_56 {dimension_numbers = #tpu.dot_dimension_numbers<[1], [0], [0], [1], [0, 0, 1, 1], [], []>} : vector<10x32xbf16>, vector<32x32xbf16>, vector<10x32xf32> -> vector<10x32xf32>
    %155 = arith.addf %31, %154 : vector<10x32xf32>
    %c0_57 = arith.constant 0 : index
    %c0_58 = arith.constant 0 : index
    %c0_59 = arith.constant 0 : index
    %156 = vector.load %arg10[%c0_57, %c0_58, %c0_59] : memref<3x1x32xf32, #tpu.memory_space<vmem>>, vector<1x1x32xf32>
    %157 = vector.shape_cast %156 : vector<1x1x32xf32> to vector<1x32xf32>
    %158 = vector.broadcast %157 : vector<1x32xf32> to vector<10x32xf32>
    %159 = arith.addf %155, %158 : vector<10x32xf32>
    %c0_60 = arith.constant 0 : index
    %c0_61 = arith.constant 0 : index
    %c0_62 = arith.constant 0 : index
    %160 = vector.load %arg11[%c0_60, %c0_61, %c0_62] : memref<3x2x32xf32, #tpu.memory_space<vmem>>, vector<1x2x32xf32>
    %161 = vector.shape_cast %160 : vector<1x2x32xf32> to vector<2x32xf32>
    %cst_63 = arith.constant dense<0.000000e+00> : vector<10xf32>
    %162 = vector.multi_reduction <add>, %159, %cst_63 [1] : vector<10x32xf32> to vector<10xf32>
    %163 = vector.shape_cast %162 : vector<10xf32> to vector<10x1xf32>
    %cst_64 = arith.constant 3.200000e+01 : f32
    %164 = vector.broadcast %cst_64 : f32 to vector<10x1xf32>
    %165 = arith.divf %163, %164 : vector<10x1xf32>
    %166 = vector.broadcast %165 : vector<10x1xf32> to vector<10x32xf32>
    %167 = arith.subf %159, %166 : vector<10x32xf32>
    %168 = arith.mulf %167, %167 : vector<10x32xf32>
    %cst_65 = arith.constant dense<0.000000e+00> : vector<10xf32>
    %169 = vector.multi_reduction <add>, %168, %cst_65 [1] : vector<10x32xf32> to vector<10xf32>
    %170 = vector.shape_cast %169 : vector<10xf32> to vector<10x1xf32>
    %cst_66 = arith.constant 3.200000e+01 : f32
    %171 = vector.broadcast %cst_66 : f32 to vector<10x1xf32>
    %172 = arith.divf %170, %171 : vector<10x1xf32>
    %173 = vector.broadcast %165 : vector<10x1xf32> to vector<10x32xf32>
    %174 = arith.subf %159, %173 : vector<10x32xf32>
    %cst_67 = arith.constant 9.99999974E-6 : f32
    %175 = vector.broadcast %cst_67 : f32 to vector<10x1xf32>
    %176 = arith.addf %172, %175 : vector<10x1xf32>
    %177 = math.rsqrt %176 : vector<10x1xf32>
    %178 = vector.broadcast %177 : vector<10x1xf32> to vector<10x32xf32>
    %179 = arith.mulf %174, %178 : vector<10x32xf32>
    %180 = vector.extract_strided_slice %161 {offsets = [0, 0], sizes = [1, 32], strides = [1, 1]} : vector<2x32xf32> to vector<1x32xf32>
    %181 = vector.broadcast %180 : vector<1x32xf32> to vector<10x32xf32>
    %182 = arith.mulf %179, %181 : vector<10x32xf32>
    %183 = vector.extract_strided_slice %161 {offsets = [1, 0], sizes = [1, 32], strides = [1, 1]} : vector<2x32xf32> to vector<1x32xf32>
    %184 = vector.broadcast %183 : vector<1x32xf32> to vector<10x32xf32>
    %185 = arith.addf %182, %184 : vector<10x32xf32>
    %c0_68 = arith.constant 0 : index
    %c0_69 = arith.constant 0 : index
    %c0_70 = arith.constant 0 : index
    %186 = vector.load %arg12[%c0_68, %c0_69, %c0_70] : memref<3x32x64xbf16, #tpu.memory_space<vmem>>, vector<1x32x64xbf16>
    %187 = vector.shape_cast %186 : vector<1x32x64xbf16> to vector<32x64xbf16>
    %188 = arith.truncf %185 : vector<10x32xf32> to vector<10x32xbf16>
    %cst_71 = arith.constant dense<0.000000e+00> : vector<10x64xf32>
    %189 = tpu.matmul %188, %187, %cst_71 {dimension_numbers = #tpu.dot_dimension_numbers<[1], [0], [0], [1], [0, 0, 1, 1], [], []>} : vector<10x32xbf16>, vector<32x64xbf16>, vector<10x64xf32> -> vector<10x64xf32>
    %c0_72 = arith.constant 0 : index
    %c0_73 = arith.constant 0 : index
    %c0_74 = arith.constant 0 : index
    %190 = vector.load %arg13[%c0_72, %c0_73, %c0_74] : memref<3x1x64xf32, #tpu.memory_space<vmem>>, vector<1x1x64xf32>
    %191 = vector.shape_cast %190 : vector<1x1x64xf32> to vector<1x64xf32>
    %192 = vector.broadcast %191 : vector<1x64xf32> to vector<10x64xf32>
    %193 = arith.addf %189, %192 : vector<10x64xf32>
    %cst_75 = arith.constant 1.702000e+00 : f32
    %194 = vector.broadcast %cst_75 : f32 to vector<10x64xf32>
    %195 = arith.mulf %194, %193 : vector<10x64xf32>
    %196 = arith.negf %195 : vector<10x64xf32>
    %197 = math.exp %196 : vector<10x64xf32>
    %cst_76 = arith.constant 1.000000e+00 : f32
    %198 = vector.broadcast %cst_76 : f32 to vector<10x64xf32>
    %199 = arith.addf %198, %197 : vector<10x64xf32>
    %200 = arith.divf %198, %199 : vector<10x64xf32>
    %201 = arith.mulf %193, %200 : vector<10x64xf32>
    %c0_77 = arith.constant 0 : index
    %c0_78 = arith.constant 0 : index
    %c0_79 = arith.constant 0 : index
    %202 = vector.load %arg14[%c0_77, %c0_78, %c0_79] : memref<3x64x32xbf16, #tpu.memory_space<vmem>>, vector<1x64x32xbf16>
    %203 = vector.shape_cast %202 : vector<1x64x32xbf16> to vector<64x32xbf16>
    %204 = arith.truncf %201 : vector<10x64xf32> to vector<10x64xbf16>
    %cst_80 = arith.constant dense<0.000000e+00> : vector<10x32xf32>
    %205 = tpu.matmul %204, %203, %cst_80 {dimension_numbers = #tpu.dot_dimension_numbers<[1], [0], [0], [1], [0, 0, 1, 1], [], []>} : vector<10x64xbf16>, vector<64x32xbf16>, vector<10x32xf32> -> vector<10x32xf32>
    %c0_81 = arith.constant 0 : index
    %c0_82 = arith.constant 0 : index
    %c0_83 = arith.constant 0 : index
    %206 = vector.load %arg15[%c0_81, %c0_82, %c0_83] : memref<3x1x32xf32, #tpu.memory_space<vmem>>, vector<1x1x32xf32>
    %207 = vector.shape_cast %206 : vector<1x1x32xf32> to vector<1x32xf32>
    %208 = vector.broadcast %207 : vector<1x32xf32> to vector<10x32xf32>
    %209 = arith.addf %205, %208 : vector<10x32xf32>
    %210 = arith.addf %159, %209 : vector<10x32xf32>
    %c1 = arith.constant 1 : index
    %c0_84 = arith.constant 0 : index
    %c0_85 = arith.constant 0 : index
    %211 = vector.load %arg6[%c1, %c0_84, %c0_85] : memref<3x2x32xf32, #tpu.memory_space<vmem>>, vector<1x2x32xf32>
    %212 = vector.shape_cast %211 : vector<1x2x32xf32> to vector<2x32xf32>
    %cst_86 = arith.constant dense<0.000000e+00> : vector<10xf32>
    %213 = vector.multi_reduction <add>, %210, %cst_86 [1] : vector<10x32xf32> to vector<10xf32>
    %214 = vector.shape_cast %213 : vector<10xf32> to vector<10x1xf32>
    %cst_87 = arith.constant 3.200000e+01 : f32
    %215 = vector.broadcast %cst_87 : f32 to vector<10x1xf32>
    %216 = arith.divf %214, %215 : vector<10x1xf32>
    %217 = vector.broadcast %216 : vector<10x1xf32> to vector<10x32xf32>
    %218 = arith.subf %210, %217 : vector<10x32xf32>
    %219 = arith.mulf %218, %218 : vector<10x32xf32>
    %cst_88 = arith.constant dense<0.000000e+00> : vector<10xf32>
    %220 = vector.multi_reduction <add>, %219, %cst_88 [1] : vector<10x32xf32> to vector<10xf32>
    %221 = vector.shape_cast %220 : vector<10xf32> to vector<10x1xf32>
    %cst_89 = arith.constant 3.200000e+01 : f32
    %222 = vector.broadcast %cst_89 : f32 to vector<10x1xf32>
    %223 = arith.divf %221, %222 : vector<10x1xf32>
    %224 = vector.broadcast %216 : vector<10x1xf32> to vector<10x32xf32>
    %225 = arith.subf %210, %224 : vector<10x32xf32>
    %cst_90 = arith.constant 9.99999974E-6 : f32
    %226 = vector.broadcast %cst_90 : f32 to vector<10x1xf32>
    %227 = arith.addf %223, %226 : vector<10x1xf32>
    %228 = math.rsqrt %227 : vector<10x1xf32>
    %229 = vector.broadcast %228 : vector<10x1xf32> to vector<10x32xf32>
    %230 = arith.mulf %225, %229 : vector<10x32xf32>
    %231 = vector.extract_strided_slice %212 {offsets = [0, 0], sizes = [1, 32], strides = [1, 1]} : vector<2x32xf32> to vector<1x32xf32>
    %232 = vector.broadcast %231 : vector<1x32xf32> to vector<10x32xf32>
    %233 = arith.mulf %230, %232 : vector<10x32xf32>
    %234 = vector.extract_strided_slice %212 {offsets = [1, 0], sizes = [1, 32], strides = [1, 1]} : vector<2x32xf32> to vector<1x32xf32>
    %235 = vector.broadcast %234 : vector<1x32xf32> to vector<10x32xf32>
    %236 = arith.addf %233, %235 : vector<10x32xf32>
    %c1_91 = arith.constant 1 : index
    %c0_92 = arith.constant 0 : index
    %c0_93 = arith.constant 0 : index
    %237 = vector.load %arg7[%c1_91, %c0_92, %c0_93] : memref<3x32x96xbf16, #tpu.memory_space<vmem>>, vector<1x32x96xbf16>
    %238 = vector.shape_cast %237 : vector<1x32x96xbf16> to vector<32x96xbf16>
    %239 = arith.truncf %236 : vector<10x32xf32> to vector<10x32xbf16>
    %cst_94 = arith.constant dense<0.000000e+00> : vector<10x96xf32>
    %240 = tpu.matmul %239, %238, %cst_94 {dimension_numbers = #tpu.dot_dimension_numbers<[1], [0], [0], [1], [0, 0, 1, 1], [], []>} : vector<10x32xbf16>, vector<32x96xbf16>, vector<10x96xf32> -> vector<10x96xf32>
    %c1_95 = arith.constant 1 : index
    %c0_96 = arith.constant 0 : index
    %c0_97 = arith.constant 0 : index
    %241 = vector.load %arg8[%c1_95, %c0_96, %c0_97] : memref<3x1x96xf32, #tpu.memory_space<vmem>>, vector<1x1x96xf32>
    %242 = vector.shape_cast %241 : vector<1x1x96xf32> to vector<1x96xf32>
    %243 = vector.broadcast %242 : vector<1x96xf32> to vector<10x96xf32>
    %244 = arith.addf %240, %243 : vector<10x96xf32>
    %245 = vector.extract_strided_slice %244 {offsets = [0, 0], sizes = [10, 8], strides = [1, 1]} : vector<10x96xf32> to vector<10x8xf32>
    %246 = vector.extract_strided_slice %244 {offsets = [0, 32], sizes = [10, 8], strides = [1, 1]} : vector<10x96xf32> to vector<10x8xf32>
    %247 = vector.extract_strided_slice %244 {offsets = [0, 64], sizes = [10, 8], strides = [1, 1]} : vector<10x96xf32> to vector<10x8xf32>
    %248 = arith.truncf %245 : vector<10x8xf32> to vector<10x8xbf16>
    %249 = arith.truncf %246 : vector<10x8xf32> to vector<10x8xbf16>
    %cst_98 = arith.constant dense<0.000000e+00> : vector<10x10xf32>
    %250 = tpu.matmul %248, %249, %cst_98 {dimension_numbers = #tpu.dot_dimension_numbers<[1], [1], [0], [0], [0, 0, 1, 0], [], []>} : vector<10x8xbf16>, vector<10x8xbf16>, vector<10x10xf32> -> vector<10x10xf32>
    %251 = arith.addf %250, %0 : vector<10x10xf32>
    %cst_99 = arith.constant dense<0xFF800000> : vector<10xf32>
    %252 = vector.multi_reduction <maximumf>, %251, %cst_99 [1] : vector<10x10xf32> to vector<10xf32>
    %253 = vector.shape_cast %252 : vector<10xf32> to vector<10x1xf32>
    %254 = vector.broadcast %253 : vector<10x1xf32> to vector<10x10xf32>
    %255 = arith.subf %251, %254 : vector<10x10xf32>
    %256 = math.exp %255 : vector<10x10xf32>
    %cst_100 = arith.constant dense<0.000000e+00> : vector<10xf32>
    %257 = vector.multi_reduction <add>, %256, %cst_100 [1] : vector<10x10xf32> to vector<10xf32>
    %258 = vector.shape_cast %257 : vector<10xf32> to vector<10x1xf32>
    %259 = tpu.reciprocal %258 {approx = true} : vector<10x1xf32> -> vector<10x1xf32>
    %260 = vector.broadcast %259 : vector<10x1xf32> to vector<10x10xf32>
    %261 = arith.mulf %256, %260 : vector<10x10xf32>
    %262 = arith.truncf %261 : vector<10x10xf32> to vector<10x10xbf16>
    %263 = arith.truncf %247 : vector<10x8xf32> to vector<10x8xbf16>
    %cst_101 = arith.constant dense<0.000000e+00> : vector<10x8xf32>
    %264 = tpu.matmul %262, %263, %cst_101 {dimension_numbers = #tpu.dot_dimension_numbers<[1], [0], [0], [1], [0, 0, 1, 1], [], []>} : vector<10x10xbf16>, vector<10x8xbf16>, vector<10x8xf32> -> vector<10x8xf32>
    %c0_102 = arith.constant 0 : index
    %c0_103 = arith.constant 0 : index
    %265 = vector.load %arg17[%c0_102, %c0_103] : memref<10x32xf32, #tpu.memory_space<vmem>>, vector<10x8xf32>
    tpu.vector_store %arg17[%c0_102, %c0_103], %264 {strides = array<i32>} : memref<10x32xf32, #tpu.memory_space<vmem>>, vector<10x8xf32>,
    %266 = vector.extract_strided_slice %244 {offsets = [0, 8], sizes = [10, 8], strides = [1, 1]} : vector<10x96xf32> to vector<10x8xf32>
    %267 = vector.extract_strided_slice %244 {offsets = [0, 40], sizes = [10, 8], strides = [1, 1]} : vector<10x96xf32> to vector<10x8xf32>
    %268 = vector.extract_strided_slice %244 {offsets = [0, 72], sizes = [10, 8], strides = [1, 1]} : vector<10x96xf32> to vector<10x8xf32>
    %269 = arith.truncf %266 : vector<10x8xf32> to vector<10x8xbf16>
    %270 = arith.truncf %267 : vector<10x8xf32> to vector<10x8xbf16>
    %cst_104 = arith.constant dense<0.000000e+00> : vector<10x10xf32>
    %271 = tpu.matmul %269, %270, %cst_104 {dimension_numbers = #tpu.dot_dimension_numbers<[1], [1], [0], [0], [0, 0, 1, 0], [], []>} : vector<10x8xbf16>, vector<10x8xbf16>, vector<10x10xf32> -> vector<10x10xf32>
    %272 = arith.addf %271, %0 : vector<10x10xf32>
    %cst_105 = arith.constant dense<0xFF800000> : vector<10xf32>
    %273 = vector.multi_reduction <maximumf>, %272, %cst_105 [1] : vector<10x10xf32> to vector<10xf32>
    %274 = vector.shape_cast %273 : vector<10xf32> to vector<10x1xf32>
    %275 = vector.broadcast %274 : vector<10x1xf32> to vector<10x10xf32>
    %276 = arith.subf %272, %275 : vector<10x10xf32>
    %277 = math.exp %276 : vector<10x10xf32>
    %cst_106 = arith.constant dense<0.000000e+00> : vector<10xf32>
    %278 = vector.multi_reduction <add>, %277, %cst_106 [1] : vector<10x10xf32> to vector<10xf32>
    %279 = vector.shape_cast %278 : vector<10xf32> to vector<10x1xf32>
    %280 = tpu.reciprocal %279 {approx = true} : vector<10x1xf32> -> vector<10x1xf32>
    %281 = vector.broadcast %280 : vector<10x1xf32> to vector<10x10xf32>
    %282 = arith.mulf %277, %281 : vector<10x10xf32>
    %283 = arith.truncf %282 : vector<10x10xf32> to vector<10x10xbf16>
    %284 = arith.truncf %268 : vector<10x8xf32> to vector<10x8xbf16>
    %cst_107 = arith.constant dense<0.000000e+00> : vector<10x8xf32>
    %285 = tpu.matmul %283, %284, %cst_107 {dimension_numbers = #tpu.dot_dimension_numbers<[1], [0], [0], [1], [0, 0, 1, 1], [], []>} : vector<10x10xbf16>, vector<10x8xbf16>, vector<10x8xf32> -> vector<10x8xf32>
    %c0_108 = arith.constant 0 : index
    %c8_109 = arith.constant 8 : index
    %286 = vector.load %arg17[%c0_108, %c8_109] : memref<10x32xf32, #tpu.memory_space<vmem>>, vector<10x8xf32>
    tpu.vector_store %arg17[%c0_108, %c8_109], %285 {strides = array<i32>} : memref<10x32xf32, #tpu.memory_space<vmem>>, vector<10x8xf32>,
    %287 = vector.extract_strided_slice %244 {offsets = [0, 16], sizes = [10, 8], strides = [1, 1]} : vector<10x96xf32> to vector<10x8xf32>
    %288 = vector.extract_strided_slice %244 {offsets = [0, 48], sizes = [10, 8], strides = [1, 1]} : vector<10x96xf32> to vector<10x8xf32>
    %289 = vector.extract_strided_slice %244 {offsets = [0, 80], sizes = [10, 8], strides = [1, 1]} : vector<10x96xf32> to vector<10x8xf32>
    %290 = arith.truncf %287 : vector<10x8xf32> to vector<10x8xbf16>
    %291 = arith.truncf %288 : vector<10x8xf32> to vector<10x8xbf16>
    %cst_110 = arith.constant dense<0.000000e+00> : vector<10x10xf32>
    %292 = tpu.matmul %290, %291, %cst_110 {dimension_numbers = #tpu.dot_dimension_numbers<[1], [1], [0], [0], [0, 0, 1, 0], [], []>} : vector<10x8xbf16>, vector<10x8xbf16>, vector<10x10xf32> -> vector<10x10xf32>
    %293 = arith.addf %292, %0 : vector<10x10xf32>
    %cst_111 = arith.constant dense<0xFF800000> : vector<10xf32>
    %294 = vector.multi_reduction <maximumf>, %293, %cst_111 [1] : vector<10x10xf32> to vector<10xf32>
    %295 = vector.shape_cast %294 : vector<10xf32> to vector<10x1xf32>
    %296 = vector.broadcast %295 : vector<10x1xf32> to vector<10x10xf32>
    %297 = arith.subf %293, %296 : vector<10x10xf32>
    %298 = math.exp %297 : vector<10x10xf32>
    %cst_112 = arith.constant dense<0.000000e+00> : vector<10xf32>
    %299 = vector.multi_reduction <add>, %298, %cst_112 [1] : vector<10x10xf32> to vector<10xf32>
    %300 = vector.shape_cast %299 : vector<10xf32> to vector<10x1xf32>
    %301 = tpu.reciprocal %300 {approx = true} : vector<10x1xf32> -> vector<10x1xf32>
    %302 = vector.broadcast %301 : vector<10x1xf32> to vector<10x10xf32>
    %303 = arith.mulf %298, %302 : vector<10x10xf32>
    %304 = arith.truncf %303 : vector<10x10xf32> to vector<10x10xbf16>
    %305 = arith.truncf %289 : vector<10x8xf32> to vector<10x8xbf16>
    %cst_113 = arith.constant dense<0.000000e+00> : vector<10x8xf32>
    %306 = tpu.matmul %304, %305, %cst_113 {dimension_numbers = #tpu.dot_dimension_numbers<[1], [0], [0], [1], [0, 0, 1, 1], [], []>} : vector<10x10xbf16>, vector<10x8xbf16>, vector<10x8xf32> -> vector<10x8xf32>
    %c0_114 = arith.constant 0 : index
    %c16_115 = arith.constant 16 : index
    %307 = vector.load %arg17[%c0_114, %c16_115] : memref<10x32xf32, #tpu.memory_space<vmem>>, vector<10x8xf32>
    tpu.vector_store %arg17[%c0_114, %c16_115], %306 {strides = array<i32>} : memref<10x32xf32, #tpu.memory_space<vmem>>, vector<10x8xf32>,
    %308 = vector.extract_strided_slice %244 {offsets = [0, 24], sizes = [10, 8], strides = [1, 1]} : vector<10x96xf32> to vector<10x8xf32>
    %309 = vector.extract_strided_slice %244 {offsets = [0, 56], sizes = [10, 8], strides = [1, 1]} : vector<10x96xf32> to vector<10x8xf32>
    %310 = vector.extract_strided_slice %244 {offsets = [0, 88], sizes = [10, 8], strides = [1, 1]} : vector<10x96xf32> to vector<10x8xf32>
    %311 = arith.truncf %308 : vector<10x8xf32> to vector<10x8xbf16>
    %312 = arith.truncf %309 : vector<10x8xf32> to vector<10x8xbf16>
    %cst_116 = arith.constant dense<0.000000e+00> : vector<10x10xf32>
    %313 = tpu.matmul %311, %312, %cst_116 {dimension_numbers = #tpu.dot_dimension_numbers<[1], [1], [0], [0], [0, 0, 1, 0], [], []>} : vector<10x8xbf16>, vector<10x8xbf16>, vector<10x10xf32> -> vector<10x10xf32>
    %314 = arith.addf %313, %0 : vector<10x10xf32>
    %cst_117 = arith.constant dense<0xFF800000> : vector<10xf32>
    %315 = vector.multi_reduction <maximumf>, %314, %cst_117 [1] : vector<10x10xf32> to vector<10xf32>
    %316 = vector.shape_cast %315 : vector<10xf32> to vector<10x1xf32>
    %317 = vector.broadcast %316 : vector<10x1xf32> to vector<10x10xf32>
    %318 = arith.subf %314, %317 : vector<10x10xf32>
    %319 = math.exp %318 : vector<10x10xf32>
    %cst_118 = arith.constant dense<0.000000e+00> : vector<10xf32>
    %320 = vector.multi_reduction <add>, %319, %cst_118 [1] : vector<10x10xf32> to vector<10xf32>
    %321 = vector.shape_cast %320 : vector<10xf32> to vector<10x1xf32>
    %322 = tpu.reciprocal %321 {approx = true} : vector<10x1xf32> -> vector<10x1xf32>
    %323 = vector.broadcast %322 : vector<10x1xf32> to vector<10x10xf32>
    %324 = arith.mulf %319, %323 : vector<10x10xf32>
    %325 = arith.truncf %324 : vector<10x10xf32> to vector<10x10xbf16>
    %326 = arith.truncf %310 : vector<10x8xf32> to vector<10x8xbf16>
    %cst_119 = arith.constant dense<0.000000e+00> : vector<10x8xf32>
    %327 = tpu.matmul %325, %326, %cst_119 {dimension_numbers = #tpu.dot_dimension_numbers<[1], [0], [0], [1], [0, 0, 1, 1], [], []>} : vector<10x10xbf16>, vector<10x8xbf16>, vector<10x8xf32> -> vector<10x8xf32>
    %c0_120 = arith.constant 0 : index
    %c24_121 = arith.constant 24 : index
    %328 = vector.load %arg17[%c0_120, %c24_121] : memref<10x32xf32, #tpu.memory_space<vmem>>, vector<10x8xf32>
    tpu.vector_store %arg17[%c0_120, %c24_121], %327 {strides = array<i32>} : memref<10x32xf32, #tpu.memory_space<vmem>>, vector<10x8xf32>,
    %c0_122 = arith.constant 0 : index
    %c0_123 = arith.constant 0 : index
    %329 = vector.load %arg17[%c0_122, %c0_123] : memref<10x32xf32, #tpu.memory_space<vmem>>, vector<10x32xf32>
    %c1_124 = arith.constant 1 : index
    %c0_125 = arith.constant 0 : index
    %c0_126 = arith.constant 0 : index
    %330 = vector.load %arg9[%c1_124, %c0_125, %c0_126] : memref<3x32x32xbf16, #tpu.memory_space<vmem>>, vector<1x32x32xbf16>
    %331 = vector.shape_cast %330 : vector<1x32x32xbf16> to vector<32x32xbf16>
    %332 = arith.truncf %329 : vector<10x32xf32> to vector<10x32xbf16>
    %cst_127 = arith.constant dense<0.000000e+00> : vector<10x32xf32>
    %333 = tpu.matmul %332, %331, %cst_127 {dimension_numbers = #tpu.dot_dimension_numbers<[1], [0], [0], [1], [0, 0, 1, 1], [], []>} : vector<10x32xbf16>, vector<32x32xbf16>, vector<10x32xf32> -> vector<10x32xf32>
    %334 = arith.addf %210, %333 : vector<10x32xf32>
    %c1_128 = arith.constant 1 : index
    %c0_129 = arith.constant 0 : index
    %c0_130 = arith.constant 0 : index
    %335 = vector.load %arg10[%c1_128, %c0_129, %c0_130] : memref<3x1x32xf32, #tpu.memory_space<vmem>>, vector<1x1x32xf32>
    %336 = vector.shape_cast %335 : vector<1x1x32xf32> to vector<1x32xf32>
    %337 = vector.broadcast %336 : vector<1x32xf32> to vector<10x32xf32>
    %338 = arith.addf %334, %337 : vector<10x32xf32>
    %c1_131 = arith.constant 1 : index
    %c0_132 = arith.constant 0 : index
    %c0_133 = arith.constant 0 : index
    %339 = vector.load %arg11[%c1_131, %c0_132, %c0_133] : memref<3x2x32xf32, #tpu.memory_space<vmem>>, vector<1x2x32xf32>
    %340 = vector.shape_cast %339 : vector<1x2x32xf32> to vector<2x32xf32>
    %cst_134 = arith.constant dense<0.000000e+00> : vector<10xf32>
    %341 = vector.multi_reduction <add>, %338, %cst_134 [1] : vector<10x32xf32> to vector<10xf32>
    %342 = vector.shape_cast %341 : vector<10xf32> to vector<10x1xf32>
    %cst_135 = arith.constant 3.200000e+01 : f32
    %343 = vector.broadcast %cst_135 : f32 to vector<10x1xf32>
    %344 = arith.divf %342, %343 : vector<10x1xf32>
    %345 = vector.broadcast %344 : vector<10x1xf32> to vector<10x32xf32>
    %346 = arith.subf %338, %345 : vector<10x32xf32>
    %347 = arith.mulf %346, %346 : vector<10x32xf32>
    %cst_136 = arith.constant dense<0.000000e+00> : vector<10xf32>
    %348 = vector.multi_reduction <add>, %347, %cst_136 [1] : vector<10x32xf32> to vector<10xf32>
    %349 = vector.shape_cast %348 : vector<10xf32> to vector<10x1xf32>
    %cst_137 = arith.constant 3.200000e+01 : f32
    %350 = vector.broadcast %cst_137 : f32 to vector<10x1xf32>
    %351 = arith.divf %349, %350 : vector<10x1xf32>
    %352 = vector.broadcast %344 : vector<10x1xf32> to vector<10x32xf32>
    %353 = arith.subf %338, %352 : vector<10x32xf32>
    %cst_138 = arith.constant 9.99999974E-6 : f32
    %354 = vector.broadcast %cst_138 : f32 to vector<10x1xf32>
    %355 = arith.addf %351, %354 : vector<10x1xf32>
    %356 = math.rsqrt %355 : vector<10x1xf32>
    %357 = vector.broadcast %356 : vector<10x1xf32> to vector<10x32xf32>
    %358 = arith.mulf %353, %357 : vector<10x32xf32>
    %359 = vector.extract_strided_slice %340 {offsets = [0, 0], sizes = [1, 32], strides = [1, 1]} : vector<2x32xf32> to vector<1x32xf32>
    %360 = vector.broadcast %359 : vector<1x32xf32> to vector<10x32xf32>
    %361 = arith.mulf %358, %360 : vector<10x32xf32>
    %362 = vector.extract_strided_slice %340 {offsets = [1, 0], sizes = [1, 32], strides = [1, 1]} : vector<2x32xf32> to vector<1x32xf32>
    %363 = vector.broadcast %362 : vector<1x32xf32> to vector<10x32xf32>
    %364 = arith.addf %361, %363 : vector<10x32xf32>
    %c1_139 = arith.constant 1 : index
    %c0_140 = arith.constant 0 : index
    %c0_141 = arith.constant 0 : index
    %365 = vector.load %arg12[%c1_139, %c0_140, %c0_141] : memref<3x32x64xbf16, #tpu.memory_space<vmem>>, vector<1x32x64xbf16>
    %366 = vector.shape_cast %365 : vector<1x32x64xbf16> to vector<32x64xbf16>
    %367 = arith.truncf %364 : vector<10x32xf32> to vector<10x32xbf16>
    %cst_142 = arith.constant dense<0.000000e+00> : vector<10x64xf32>
    %368 = tpu.matmul %367, %366, %cst_142 {dimension_numbers = #tpu.dot_dimension_numbers<[1], [0], [0], [1], [0, 0, 1, 1], [], []>} : vector<10x32xbf16>, vector<32x64xbf16>, vector<10x64xf32> -> vector<10x64xf32>
    %c1_143 = arith.constant 1 : index
    %c0_144 = arith.constant 0 : index
    %c0_145 = arith.constant 0 : index
    %369 = vector.load %arg13[%c1_143, %c0_144, %c0_145] : memref<3x1x64xf32, #tpu.memory_space<vmem>>, vector<1x1x64xf32>
    %370 = vector.shape_cast %369 : vector<1x1x64xf32> to vector<1x64xf32>
    %371 = vector.broadcast %370 : vector<1x64xf32> to vector<10x64xf32>
    %372 = arith.addf %368, %371 : vector<10x64xf32>
    %cst_146 = arith.constant 1.702000e+00 : f32
    %373 = vector.broadcast %cst_146 : f32 to vector<10x64xf32>
    %374 = arith.mulf %373, %372 : vector<10x64xf32>
    %375 = arith.negf %374 : vector<10x64xf32>
    %376 = math.exp %375 : vector<10x64xf32>
    %cst_147 = arith.constant 1.000000e+00 : f32
    %377 = vector.broadcast %cst_147 : f32 to vector<10x64xf32>
    %378 = arith.addf %377, %376 : vector<10x64xf32>
    %379 = arith.divf %377, %378 : vector<10x64xf32>
    %380 = arith.mulf %372, %379 : vector<10x64xf32>
    %c1_148 = arith.constant 1 : index
    %c0_149 = arith.constant 0 : index
    %c0_150 = arith.constant 0 : index
    %381 = vector.load %arg14[%c1_148, %c0_149, %c0_150] : memref<3x64x32xbf16, #tpu.memory_space<vmem>>, vector<1x64x32xbf16>
    %382 = vector.shape_cast %381 : vector<1x64x32xbf16> to vector<64x32xbf16>
    %383 = arith.truncf %380 : vector<10x64xf32> to vector<10x64xbf16>
    %cst_151 = arith.constant dense<0.000000e+00> : vector<10x32xf32>
    %384 = tpu.matmul %383, %382, %cst_151 {dimension_numbers = #tpu.dot_dimension_numbers<[1], [0], [0], [1], [0, 0, 1, 1], [], []>} : vector<10x64xbf16>, vector<64x32xbf16>, vector<10x32xf32> -> vector<10x32xf32>
    %c1_152 = arith.constant 1 : index
    %c0_153 = arith.constant 0 : index
    %c0_154 = arith.constant 0 : index
    %385 = vector.load %arg15[%c1_152, %c0_153, %c0_154] : memref<3x1x32xf32, #tpu.memory_space<vmem>>, vector<1x1x32xf32>
    %386 = vector.shape_cast %385 : vector<1x1x32xf32> to vector<1x32xf32>
    %387 = vector.broadcast %386 : vector<1x32xf32> to vector<10x32xf32>
    %388 = arith.addf %384, %387 : vector<10x32xf32>
    %389 = arith.addf %338, %388 : vector<10x32xf32>
    %c2 = arith.constant 2 : index
    %c0_155 = arith.constant 0 : index
    %c0_156 = arith.constant 0 : index
    %390 = vector.load %arg6[%c2, %c0_155, %c0_156] : memref<3x2x32xf32, #tpu.memory_space<vmem>>, vector<1x2x32xf32>
    %391 = vector.shape_cast %390 : vector<1x2x32xf32> to vector<2x32xf32>
    %cst_157 = arith.constant dense<0.000000e+00> : vector<10xf32>
    %392 = vector.multi_reduction <add>, %389, %cst_157 [1] : vector<10x32xf32> to vector<10xf32>
    %393 = vector.shape_cast %392 : vector<10xf32> to vector<10x1xf32>
    %cst_158 = arith.constant 3.200000e+01 : f32
    %394 = vector.broadcast %cst_158 : f32 to vector<10x1xf32>
    %395 = arith.divf %393, %394 : vector<10x1xf32>
    %396 = vector.broadcast %395 : vector<10x1xf32> to vector<10x32xf32>
    %397 = arith.subf %389, %396 : vector<10x32xf32>
    %398 = arith.mulf %397, %397 : vector<10x32xf32>
    %cst_159 = arith.constant dense<0.000000e+00> : vector<10xf32>
    %399 = vector.multi_reduction <add>, %398, %cst_159 [1] : vector<10x32xf32> to vector<10xf32>
    %400 = vector.shape_cast %399 : vector<10xf32> to vector<10x1xf32>
    %cst_160 = arith.constant 3.200000e+01 : f32
    %401 = vector.broadcast %cst_160 : f32 to vector<10x1xf32>
    %402 = arith.divf %400, %401 : vector<10x1xf32>
    %403 = vector.broadcast %395 : vector<10x1xf32> to vector<10x32xf32>
    %404 = arith.subf %389, %403 : vector<10x32xf32>
    %cst_161 = arith.constant 9.99999974E-6 : f32
    %405 = vector.broadcast %cst_161 : f32 to vector<10x1xf32>
    %406 = arith.addf %402, %405 : vector<10x1xf32>
    %407 = math.rsqrt %406 : vector<10x1xf32>
    %408 = vector.broadcast %407 : vector<10x1xf32> to vector<10x32xf32>
    %409 = arith.mulf %404, %408 : vector<10x32xf32>
    %410 = vector.extract_strided_slice %391 {offsets = [0, 0], sizes = [1, 32], strides = [1, 1]} : vector<2x32xf32> to vector<1x32xf32>
    %411 = vector.broadcast %410 : vector<1x32xf32> to vector<10x32xf32>
    %412 = arith.mulf %409, %411 : vector<10x32xf32>
    %413 = vector.extract_strided_slice %391 {offsets = [1, 0], sizes = [1, 32], strides = [1, 1]} : vector<2x32xf32> to vector<1x32xf32>
    %414 = vector.broadcast %413 : vector<1x32xf32> to vector<10x32xf32>
    %415 = arith.addf %412, %414 : vector<10x32xf32>
    %c2_162 = arith.constant 2 : index
    %c0_163 = arith.constant 0 : index
    %c0_164 = arith.constant 0 : index
    %416 = vector.load %arg7[%c2_162, %c0_163, %c0_164] : memref<3x32x96xbf16, #tpu.memory_space<vmem>>, vector<1x32x96xbf16>
    %417 = vector.shape_cast %416 : vector<1x32x96xbf16> to vector<32x96xbf16>
    %418 = arith.truncf %415 : vector<10x32xf32> to vector<10x32xbf16>
    %cst_165 = arith.constant dense<0.000000e+00> : vector<10x96xf32>
    %419 = tpu.matmul %418, %417, %cst_165 {dimension_numbers = #tpu.dot_dimension_numbers<[1], [0], [0], [1], [0, 0, 1, 1], [], []>} : vector<10x32xbf16>, vector<32x96xbf16>, vector<10x96xf32> -> vector<10x96xf32>
    %c2_166 = arith.constant 2 : index
    %c0_167 = arith.constant 0 : index
    %c0_168 = arith.constant 0 : index
    %420 = vector.load %arg8[%c2_166, %c0_167, %c0_168] : memref<3x1x96xf32, #tpu.memory_space<vmem>>, vector<1x1x96xf32>
    %421 = vector.shape_cast %420 : vector<1x1x96xf32> to vector<1x96xf32>
    %422 = vector.broadcast %421 : vector<1x96xf32> to vector<10x96xf32>
    %423 = arith.addf %419, %422 : vector<10x96xf32>
    %424 = vector.extract_strided_slice %423 {offsets = [0, 0], sizes = [10, 8], strides = [1, 1]} : vector<10x96xf32> to vector<10x8xf32>
    %425 = vector.extract_strided_slice %423 {offsets = [0, 32], sizes = [10, 8], strides = [1, 1]} : vector<10x96xf32> to vector<10x8xf32>
    %426 = vector.extract_strided_slice %423 {offsets = [0, 64], sizes = [10, 8], strides = [1, 1]} : vector<10x96xf32> to vector<10x8xf32>
    %427 = arith.truncf %424 : vector<10x8xf32> to vector<10x8xbf16>
    %428 = arith.truncf %425 : vector<10x8xf32> to vector<10x8xbf16>
    %cst_169 = arith.constant dense<0.000000e+00> : vector<10x10xf32>
    %429 = tpu.matmul %427, %428, %cst_169 {dimension_numbers = #tpu.dot_dimension_numbers<[1], [1], [0], [0], [0, 0, 1, 0], [], []>} : vector<10x8xbf16>, vector<10x8xbf16>, vector<10x10xf32> -> vector<10x10xf32>
    %430 = arith.addf %429, %0 : vector<10x10xf32>
    %cst_170 = arith.constant dense<0xFF800000> : vector<10xf32>
    %431 = vector.multi_reduction <maximumf>, %430, %cst_170 [1] : vector<10x10xf32> to vector<10xf32>
    %432 = vector.shape_cast %431 : vector<10xf32> to vector<10x1xf32>
    %433 = vector.broadcast %432 : vector<10x1xf32> to vector<10x10xf32>
    %434 = arith.subf %430, %433 : vector<10x10xf32>
    %435 = math.exp %434 : vector<10x10xf32>
    %cst_171 = arith.constant dense<0.000000e+00> : vector<10xf32>
    %436 = vector.multi_reduction <add>, %435, %cst_171 [1] : vector<10x10xf32> to vector<10xf32>
    %437 = vector.shape_cast %436 : vector<10xf32> to vector<10x1xf32>
    %438 = tpu.reciprocal %437 {approx = true} : vector<10x1xf32> -> vector<10x1xf32>
    %439 = vector.broadcast %438 : vector<10x1xf32> to vector<10x10xf32>
    %440 = arith.mulf %435, %439 : vector<10x10xf32>
    %441 = arith.truncf %440 : vector<10x10xf32> to vector<10x10xbf16>
    %442 = arith.truncf %426 : vector<10x8xf32> to vector<10x8xbf16>
    %cst_172 = arith.constant dense<0.000000e+00> : vector<10x8xf32>
    %443 = tpu.matmul %441, %442, %cst_172 {dimension_numbers = #tpu.dot_dimension_numbers<[1], [0], [0], [1], [0, 0, 1, 1], [], []>} : vector<10x10xbf16>, vector<10x8xbf16>, vector<10x8xf32> -> vector<10x8xf32>
    %c0_173 = arith.constant 0 : index
    %c0_174 = arith.constant 0 : index
    %444 = vector.load %arg17[%c0_173, %c0_174] : memref<10x32xf32, #tpu.memory_space<vmem>>, vector<10x8xf32>
    tpu.vector_store %arg17[%c0_173, %c0_174], %443 {strides = array<i32>} : memref<10x32xf32, #tpu.memory_space<vmem>>, vector<10x8xf32>,
    %445 = vector.extract_strided_slice %423 {offsets = [0, 8], sizes = [10, 8], strides = [1, 1]} : vector<10x96xf32> to vector<10x8xf32>
    %446 = vector.extract_strided_slice %423 {offsets = [0, 40], sizes = [10, 8], strides = [1, 1]} : vector<10x96xf32> to vector<10x8xf32>
    %447 = vector.extract_strided_slice %423 {offsets = [0, 72], sizes = [10, 8], strides = [1, 1]} : vector<10x96xf32> to vector<10x8xf32>
    %448 = arith.truncf %445 : vector<10x8xf32> to vector<10x8xbf16>
    %449 = arith.truncf %446 : vector<10x8xf32> to vector<10x8xbf16>
    %cst_175 = arith.constant dense<0.000000e+00> : vector<10x10xf32>
    %450 = tpu.matmul %448, %449, %cst_175 {dimension_numbers = #tpu.dot_dimension_numbers<[1], [1], [0], [0], [0, 0, 1, 0], [], []>} : vector<10x8xbf16>, vector<10x8xbf16>, vector<10x10xf32> -> vector<10x10xf32>
    %451 = arith.addf %450, %0 : vector<10x10xf32>
    %cst_176 = arith.constant dense<0xFF800000> : vector<10xf32>
    %452 = vector.multi_reduction <maximumf>, %451, %cst_176 [1] : vector<10x10xf32> to vector<10xf32>
    %453 = vector.shape_cast %452 : vector<10xf32> to vector<10x1xf32>
    %454 = vector.broadcast %453 : vector<10x1xf32> to vector<10x10xf32>
    %455 = arith.subf %451, %454 : vector<10x10xf32>
    %456 = math.exp %455 : vector<10x10xf32>
    %cst_177 = arith.constant dense<0.000000e+00> : vector<10xf32>
    %457 = vector.multi_reduction <add>, %456, %cst_177 [1] : vector<10x10xf32> to vector<10xf32>
    %458 = vector.shape_cast %457 : vector<10xf32> to vector<10x1xf32>
    %459 = tpu.reciprocal %458 {approx = true} : vector<10x1xf32> -> vector<10x1xf32>
    %460 = vector.broadcast %459 : vector<10x1xf32> to vector<10x10xf32>
    %461 = arith.mulf %456, %460 : vector<10x10xf32>
    %462 = arith.truncf %461 : vector<10x10xf32> to vector<10x10xbf16>
    %463 = arith.truncf %447 : vector<10x8xf32> to vector<10x8xbf16>
    %cst_178 = arith.constant dense<0.000000e+00> : vector<10x8xf32>
    %464 = tpu.matmul %462, %463, %cst_178 {dimension_numbers = #tpu.dot_dimension_numbers<[1], [0], [0], [1], [0, 0, 1, 1], [], []>} : vector<10x10xbf16>, vector<10x8xbf16>, vector<10x8xf32> -> vector<10x8xf32>
    %c0_179 = arith.constant 0 : index
    %c8_180 = arith.constant 8 : index
    %465 = vector.load %arg17[%c0_179, %c8_180] : memref<10x32xf32, #tpu.memory_space<vmem>>, vector<10x8xf32>
    tpu.vector_store %arg17[%c0_179, %c8_180], %464 {strides = array<i32>} : memref<10x32xf32, #tpu.memory_space<vmem>>, vector<10x8xf32>,
    %466 = vector.extract_strided_slice %423 {offsets = [0, 16], sizes = [10, 8], strides = [1, 1]} : vector<10x96xf32> to vector<10x8xf32>
    %467 = vector.extract_strided_slice %423 {offsets = [0, 48], sizes = [10, 8], strides = [1, 1]} : vector<10x96xf32> to vector<10x8xf32>
    %468 = vector.extract_strided_slice %423 {offsets = [0, 80], sizes = [10, 8], strides = [1, 1]} : vector<10x96xf32> to vector<10x8xf32>
    %469 = arith.truncf %466 : vector<10x8xf32> to vector<10x8xbf16>
    %470 = arith.truncf %467 : vector<10x8xf32> to vector<10x8xbf16>
    %cst_181 = arith.constant dense<0.000000e+00> : vector<10x10xf32>
    %471 = tpu.matmul %469, %470, %cst_181 {dimension_numbers = #tpu.dot_dimension_numbers<[1], [1], [0], [0], [0, 0, 1, 0], [], []>} : vector<10x8xbf16>, vector<10x8xbf16>, vector<10x10xf32> -> vector<10x10xf32>
    %472 = arith.addf %471, %0 : vector<10x10xf32>
    %cst_182 = arith.constant dense<0xFF800000> : vector<10xf32>
    %473 = vector.multi_reduction <maximumf>, %472, %cst_182 [1] : vector<10x10xf32> to vector<10xf32>
    %474 = vector.shape_cast %473 : vector<10xf32> to vector<10x1xf32>
    %475 = vector.broadcast %474 : vector<10x1xf32> to vector<10x10xf32>
    %476 = arith.subf %472, %475 : vector<10x10xf32>
    %477 = math.exp %476 : vector<10x10xf32>
    %cst_183 = arith.constant dense<0.000000e+00> : vector<10xf32>
    %478 = vector.multi_reduction <add>, %477, %cst_183 [1] : vector<10x10xf32> to vector<10xf32>
    %479 = vector.shape_cast %478 : vector<10xf32> to vector<10x1xf32>
    %480 = tpu.reciprocal %479 {approx = true} : vector<10x1xf32> -> vector<10x1xf32>
    %481 = vector.broadcast %480 : vector<10x1xf32> to vector<10x10xf32>
    %482 = arith.mulf %477, %481 : vector<10x10xf32>
    %483 = arith.truncf %482 : vector<10x10xf32> to vector<10x10xbf16>
    %484 = arith.truncf %468 : vector<10x8xf32> to vector<10x8xbf16>
    %cst_184 = arith.constant dense<0.000000e+00> : vector<10x8xf32>
    %485 = tpu.matmul %483, %484, %cst_184 {dimension_numbers = #tpu.dot_dimension_numbers<[1], [0], [0], [1], [0, 0, 1, 1], [], []>} : vector<10x10xbf16>, vector<10x8xbf16>, vector<10x8xf32> -> vector<10x8xf32>
    %c0_185 = arith.constant 0 : index
    %c16_186 = arith.constant 16 : index
    %486 = vector.load %arg17[%c0_185, %c16_186] : memref<10x32xf32, #tpu.memory_space<vmem>>, vector<10x8xf32>
    tpu.vector_store %arg17[%c0_185, %c16_186], %485 {strides = array<i32>} : memref<10x32xf32, #tpu.memory_space<vmem>>, vector<10x8xf32>,
    %487 = vector.extract_strided_slice %423 {offsets = [0, 24], sizes = [10, 8], strides = [1, 1]} : vector<10x96xf32> to vector<10x8xf32>
    %488 = vector.extract_strided_slice %423 {offsets = [0, 56], sizes = [10, 8], strides = [1, 1]} : vector<10x96xf32> to vector<10x8xf32>
    %489 = vector.extract_strided_slice %423 {offsets = [0, 88], sizes = [10, 8], strides = [1, 1]} : vector<10x96xf32> to vector<10x8xf32>
    %490 = arith.truncf %487 : vector<10x8xf32> to vector<10x8xbf16>
    %491 = arith.truncf %488 : vector<10x8xf32> to vector<10x8xbf16>
    %cst_187 = arith.constant dense<0.000000e+00> : vector<10x10xf32>
    %492 = tpu.matmul %490, %491, %cst_187 {dimension_numbers = #tpu.dot_dimension_numbers<[1], [1], [0], [0], [0, 0, 1, 0], [], []>} : vector<10x8xbf16>, vector<10x8xbf16>, vector<10x10xf32> -> vector<10x10xf32>
    %493 = arith.addf %492, %0 : vector<10x10xf32>
    %cst_188 = arith.constant dense<0xFF800000> : vector<10xf32>
    %494 = vector.multi_reduction <maximumf>, %493, %cst_188 [1] : vector<10x10xf32> to vector<10xf32>
    %495 = vector.shape_cast %494 : vector<10xf32> to vector<10x1xf32>
    %496 = vector.broadcast %495 : vector<10x1xf32> to vector<10x10xf32>
    %497 = arith.subf %493, %496 : vector<10x10xf32>
    %498 = math.exp %497 : vector<10x10xf32>
    %cst_189 = arith.constant dense<0.000000e+00> : vector<10xf32>
    %499 = vector.multi_reduction <add>, %498, %cst_189 [1] : vector<10x10xf32> to vector<10xf32>
    %500 = vector.shape_cast %499 : vector<10xf32> to vector<10x1xf32>
    %501 = tpu.reciprocal %500 {approx = true} : vector<10x1xf32> -> vector<10x1xf32>
    %502 = vector.broadcast %501 : vector<10x1xf32> to vector<10x10xf32>
    %503 = arith.mulf %498, %502 : vector<10x10xf32>
    %504 = arith.truncf %503 : vector<10x10xf32> to vector<10x10xbf16>
    %505 = arith.truncf %489 : vector<10x8xf32> to vector<10x8xbf16>
    %cst_190 = arith.constant dense<0.000000e+00> : vector<10x8xf32>
    %506 = tpu.matmul %504, %505, %cst_190 {dimension_numbers = #tpu.dot_dimension_numbers<[1], [0], [0], [1], [0, 0, 1, 1], [], []>} : vector<10x10xbf16>, vector<10x8xbf16>, vector<10x8xf32> -> vector<10x8xf32>
    %c0_191 = arith.constant 0 : index
    %c24_192 = arith.constant 24 : index
    %507 = vector.load %arg17[%c0_191, %c24_192] : memref<10x32xf32, #tpu.memory_space<vmem>>, vector<10x8xf32>
    tpu.vector_store %arg17[%c0_191, %c24_192], %506 {strides = array<i32>} : memref<10x32xf32, #tpu.memory_space<vmem>>, vector<10x8xf32>,
    %c0_193 = arith.constant 0 : index
    %c0_194 = arith.constant 0 : index
    %c0_195 = arith.constant 0 : index
    %508 = vector.load %arg16[%c0_193, %c0_194, %c0_195] : memref<1x10x32xf32, #tpu.memory_space<vmem>>, vector<1x10x32xf32>
    %509 = vector.shape_cast %508 : vector<1x10x32xf32> to vector<10x32xf32>
    %510 = vector.shape_cast %389 : vector<10x32xf32> to vector<1x10x32xf32>
    tpu.vector_store %arg16[%c0_193, %c0_194, %c0_195], %510 {strides = array<i32>} : memref<1x10x32xf32, #tpu.memory_space<vmem>>, vector<1x10x32xf32>,
    return
  }
  func.func @transform_0(%arg0: i32) -> (i32, i32, i32) {
    %c0_i32 = arith.constant 0 : i32
    %c0_i32_0 = arith.constant 0 : i32
    %c0_i32_1 = arith.constant 0 : i32
    return %arg0, %c0_i32, %c0_i32_0 : i32, i32, i32
  }
  func.func @transform_1(%arg0: i32) -> (i32, i32) {
    %c0_i32 = arith.constant 0 : i32
    %c0_i32_0 = arith.constant 0 : i32
    %c0_i32_1 = arith.constant 0 : i32
    return %c0_i32, %c0_i32_0 : i32, i32
  }
  func.func @transform_2(%arg0: i32) -> (i32, i32) {
    %c0_i32 = arith.constant 0 : i32
    %c0_i32_0 = arith.constant 0 : i32
    %c0_i32_1 = arith.constant 0 : i32
    return %c0_i32, %c0_i32_0 : i32, i32
  }
  func.func @transform_3(%arg0: i32) -> (i32, i32) {
    %c0_i32 = arith.constant 0 : i32
    %c0_i32_0 = arith.constant 0 : i32
    %c0_i32_1 = arith.constant 0 : i32
    return %c0_i32, %c0_i32_0 : i32, i32
  }
  func.func @transform_4(%arg0: i32) -> (i32, i32) {
    %c0_i32 = arith.constant 0 : i32
    %c0_i32_0 = arith.constant 0 : i32
    %c0_i32_1 = arith.constant 0 : i32
    return %c0_i32, %c0_i32_0 : i32, i32
  }
  func.func @transform_5(%arg0: i32) -> (i32, i32, i32) {
    %c0_i32 = arith.constant 0 : i32
    %c0_i32_0 = arith.constant 0 : i32
    %c0_i32_1 = arith.constant 0 : i32
    %c0_i32_2 = arith.constant 0 : i32
    return %c0_i32, %c0_i32_0, %c0_i32_1 : i32, i32, i32
  }
  func.func @transform_6(%arg0: i32) -> (i32, i32, i32) {
    %c0_i32 = arith.constant 0 : i32
    %c0_i32_0 = arith.constant 0 : i32
    %c0_i32_1 = arith.constant 0 : i32
    %c0_i32_2 = arith.constant 0 : i32
    return %c0_i32, %c0_i32_0, %c0_i32_1 : i32, i32, i32
  }
  func.func @transform_7(%arg0: i32) -> (i32, i32, i32) {
    %c0_i32 = arith.constant 0 : i32
    %c0_i32_0 = arith.constant 0 : i32
    %c0_i32_1 = arith.constant 0 : i32
    %c0_i32_2 = arith.constant 0 : i32
    return %c0_i32, %c0_i32_0, %c0_i32_1 : i32, i32, i32
  }
  func.func @transform_8(%arg0: i32) -> (i32, i32, i32) {
    %c0_i32 = arith.constant 0 : i32
    %c0_i32_0 = arith.constant 0 : i32
    %c0_i32_1 = arith.constant 0 : i32
    %c0_i32_2 = arith.constant 0 : i32
    return %c0_i32, %c0_i32_0, %c0_i32_1 : i32, i32, i32
  }
  func.func @transform_9(%arg0: i32) -> (i32, i32, i32) {
    %c0_i32 = arith.constant 0 : i32
    %c0_i32_0 = arith.constant 0 : i32
    %c0_i32_1 = arith.constant 0 : i32
    %c0_i32_2 = arith.constant 0 : i32
    return %c0_i32, %c0_i32_0, %c0_i32_1 : i32, i32, i32
  }
  func.func @transform_10(%arg0: i32) -> (i32, i32, i32) {
    %c0_i32 = arith.constant 0 : i32
    %c0_i32_0 = arith.constant 0 : i32
    %c0_i32_1 = arith.constant 0 : i32
    %c0_i32_2 = arith.constant 0 : i32
    return %c0_i32, %c0_i32_0, %c0_i32_1 : i32, i32, i32
  }
  func.func @transform_11(%arg0: i32) -> (i32, i32, i32) {
    %c0_i32 = arith.constant 0 : i32
    %c0_i32_0 = arith.constant 0 : i32
    %c0_i32_1 = arith.constant 0 : i32
    %c0_i32_2 = arith.constant 0 : i32
    return %c0_i32, %c0_i32_0, %c0_i32_1 : i32, i32, i32
  }
  func.func @transform_12(%arg0: i32) -> (i32, i32, i32) {
    %c0_i32 = arith.constant 0 : i32
    %c0_i32_0 = arith.constant 0 : i32
    %c0_i32_1 = arith.constant 0 : i32
    %c0_i32_2 = arith.constant 0 : i32
    return %c0_i32, %c0_i32_0, %c0_i32_1 : i32, i32, i32
  }
  func.func @transform_13(%arg0: i32) -> (i32, i32, i32) {
    %c0_i32 = arith.constant 0 : i32
    %c0_i32_0 = arith.constant 0 : i32
    %c0_i32_1 = arith.constant 0 : i32
    %c0_i32_2 = arith.constant 0 : i32
    return %c0_i32, %c0_i32_0, %c0_i32_1 : i32, i32, i32
  }
  func.func @transform_14(%arg0: i32) -> (i32, i32, i32) {
    %c0_i32 = arith.constant 0 : i32
    %c0_i32_0 = arith.constant 0 : i32
    %c0_i32_1 = arith.constant 0 : i32
    %c0_i32_2 = arith.constant 0 : i32
    return %c0_i32, %c0_i32_0, %c0_i32_1 : i32, i32, i32
  }
  func.func @transform_15(%arg0: i32) -> (i32, i32, i32) {
    %c0_i32 = arith.constant 0 : i32
    %c0_i32_0 = arith.constant 0 : i32
    %c0_i32_1 = arith.constant 0 : i32
    return %arg0, %c0_i32, %c0_i32_0 : i32, i32, i32
  }
}

</mosaic_0001>

<llo_original>
// kernel: tile.9
$region0: #{tile.9}
  %s0 = inlined_call_operand.vmem [shape: f32[2,5,32], index: 0, kind: input, shape index: {}]
  %s1 = inlined_call_operand.vmem [shape: f32[10,32], index: 1, kind: output, shape index: {}]
  %v2 = vld [vmem:[%s0] sm:$0x1f]
  %vm3 = vcmask 261120
  %4 = vst.msk [vmem:[%s1] sm:$0x1f] %vm3, %v2
  %s5 = scalar_lea.vmem %s0, 8
  %v6 = vld [vmem:[%s5] sm:$0x1f]
  %vm7 = vcmask 261120
  %s8 = scalar_lea.vmem %s1, 5
  %9 = vst.msk [vmem:[%s8] sm:$0x1f] %vm7, %v6

// kernel: eq.8
$region0: #{eq.8}
  %s0 = inlined_call_operand.vmem [shape: s32[2,5], index: 0, kind: input, shape index: {}]
  %s1 = inlined_call_operand.vmem [shape: s32[10], index: 1, kind: output, shape index: {}]
  $region1: #{eq.8} parent=0
    #allocation0 [shape = 'u8[4096]{0}', space=vmem, size = 0x1000, scoped, tag = 'scoped mem for output reshape']
    #allocation1 [shape = 'u8[4096]{0}', space=vmem, size = 0x1000, scoped, tag = 'scoped mem for input reshape']
    %s3 = sshllo.u32 0, 2
    %v4 = vld [vmem:[%s0] sm:%s3]
    %5 = vst [vmem:[#allocation1] sm:%s3] %v4
    %v6 = vld [vmem:[#allocation1] sm:$0x1]
    %vm7 = vcmask 39936
    %8 = vst.msk [vmem:[#allocation0] sm:$0x1] %vm7, %v6
    %s9 = scalar_lea.vmem [#allocation1], 1
    %v10 = vld [vmem:[%s9] sm:$0x1]
    %11 = vrot.lane.b32.xlu0 %v10, 5
    %v12 = vpop.permute.xlu0 %11
    %vm13 = vcmask 80936
    %14 = vst.msk [vmem:[#allocation0] sm:$0x1] %vm13, %v12
    %s16 = sshllo.u32 0, 1
    %v18 = vld [vmem:[#allocation0] sm:%s16]
    %s19 = sshllo.u32 0, 1
    %20 = vst [vmem:[%s1] sm:%s19] %v18

// kernel: clip_vision_tower_forward.1
$region0: #{clip_vision_tower_forward.1}
  #allocation0 [shape = 'u32[]', space=smem, size = 0x4, offset = 0x4, fixed_abs, tag = 'smem constant byte address 0x4 - core index']
  #allocation1 [shape = 'u32[144,128]{1,0:T(1,128)}', space=vmem, size = 0x12000, scoped, tag = 'internal scratch']
  #allocation2 [shape = 'f32[10,32]{1,0:T(8,128)}', space=vmem, size = 0x2000, scoped, tag = 'scratch operand']
  %s0 = inlined_call_operand.vmem [shape: bf16[2,10,192], index: 0, kind: input, shape index: {}]
  %s1 = inlined_call_operand.vmem [shape: f32[10,10], index: 1, kind: input, shape index: {}]
  %s2 = inlined_call_operand.vmem [shape: bf16[192,32], index: 2, kind: input, shape index: {}]
  %s3 = inlined_call_operand.vmem [shape: f32[10,32], index: 3, kind: input, shape index: {}]
  %s4 = inlined_call_operand.vmem [shape: f32[2,32], index: 4, kind: input, shape index: {}]
  %s5 = inlined_call_operand.vmem [shape: f32[3,2,32], index: 5, kind: input, shape index: {}]
  %s6 = inlined_call_operand.vmem [shape: bf16[3,32,96], index: 6, kind: input, shape index: {}]
  %s7 = inlined_call_operand.vmem [shape: f32[3,1,96], index: 7, kind: input, shape index: {}]
  %s8 = inlined_call_operand.vmem [shape: bf16[3,32,32], index: 8, kind: input, shape index: {}]
  %s9 = inlined_call_operand.vmem [shape: f32[3,1,32], index: 9, kind: input, shape index: {}]
  %s10 = inlined_call_operand.vmem [shape: f32[3,2,32], index: 10, kind: input, shape index: {}]
  %s11 = inlined_call_operand.vmem [shape: bf16[3,32,64], index: 11, kind: input, shape index: {}]
  %s12 = inlined_call_operand.vmem [shape: f32[3,1,64], index: 12, kind: input, shape index: {}]
  %s13 = inlined_call_operand.vmem [shape: bf16[3,64,32], index: 13, kind: input, shape index: {}]
  %s14 = inlined_call_operand.vmem [shape: f32[3,1,32], index: 14, kind: input, shape index: {}]
  %s15 = inlined_call_operand.vmem [shape: f32[2,10,32], index: 15, kind: output, shape index: {}]
  %s16 = sld [smem:[#allocation0]]
  $region93: #{clip_vision_tower_forward.1} parent=0
    _
  %s18 = ssub.s32 1, %s16
  %s19 = scalar_select 0, %s18, %s16
  loop: start=0, step=1, limit=4
  $region2: #{clip_vision_tower_forward.1} parent=0 // loop_pre_header
    _
  $region3: #{clip_vision_tower_forward.1} parent=0 // loop_header
    %s21 = sphi 0, %s25
    %p22 = scmp.ge.s32.totalorder %s21, 4
    %s31 = sphi 0, %s33
    %s34 = sphi 0, %s31
    %s35 = sphi 0, %s34
    %s51 = sphi 0, %s35
    %s55 = sphi 0, %s55
    %s57 = sphi 0, %s55
    %s58 = sphi 0, %s57
    %s72 = sphi 0, %s58
    %s76 = sphi 0, %s76
    %s78 = sphi 0, %s76
    %s79 = sphi 0, %s78
    %s93 = sphi 0, %s79
    %s97 = sphi 0, %s97
    %s99 = sphi 0, %s97
    %s100 = sphi 0, %s99
    %s114 = sphi 0, %s100
    %s118 = sphi 0, %s118
    %s120 = sphi 0, %s118
    %s121 = sphi 0, %s120
    %s135 = sphi 0, %s121
    %s139 = sphi 0, %s139
    %s141 = sphi 0, %s139
    %s142 = sphi 0, %s141
    %s156 = sphi 0, %s142
    %s160 = sphi 0, %s160
    %s162 = sphi 0, %s160
    %s163 = sphi 0, %s162
    %s177 = sphi 0, %s163
    %s181 = sphi 0, %s181
    %s183 = sphi 0, %s181
    %s184 = sphi 0, %s183
    %s198 = sphi 0, %s184
    %s202 = sphi 0, %s202
    %s204 = sphi 0, %s202
    %s205 = sphi 0, %s204
    %s219 = sphi 0, %s205
    %s223 = sphi 0, %s223
    %s225 = sphi 0, %s223
    %s226 = sphi 0, %s225
    %s240 = sphi 0, %s226
    %s244 = sphi 0, %s244
    %s246 = sphi 0, %s244
    %s247 = sphi 0, %s246
    %s261 = sphi 0, %s247
    %s265 = sphi 0, %s265
    %s267 = sphi 0, %s265
    %s268 = sphi 0, %s267
    %s282 = sphi 0, %s268
    %s286 = sphi 0, %s286
    %s288 = sphi 0, %s286
    %s289 = sphi 0, %s288
    %s303 = sphi 0, %s289
    %s307 = sphi 0, %s307
    %s309 = sphi 0, %s307
    %s310 = sphi 0, %s309
    %s324 = sphi 0, %s310
    %s328 = sphi 0, %s328
    %s330 = sphi 0, %s328
    %s331 = sphi 0, %s330
    %s345 = sphi 0, %s331
    %s351 = sphi 0, %s353
    %s354 = sphi 0, %s351
    %s355 = sphi 0, %s354
    %s371 = sphi 0, %s355
  $region4: #{clip_vision_tower_forward.1} parent=0 // loop_header_branch
    %24 = sbr.rel (%p22) target = $region8
  $region5: #{clip_vision_tower_forward.1} parent=0 // loop_body
    %s26 = ssub.s32 %s21, 1
    %s27 = ssub.s32 %s21, 2
    %s28 = sadd.s32 %s21, 1
    %s29 = ssub.s32 %s21, %s28
    %p30 = scmp.eq.s32.totalorder %s29, 0
    %s32 = sadd.s32 %s31, 1
    %s33 = scalar_select %p30, %s31, %s32
    %p36 = pneg %p30
    %p37 = scmp.eq.s32.totalorder %s21, 1
    %p38 = por %p36, %p37
    %p39 = scmp.ne.s32.totalorder %s31, %s34
    %p40 = scmp.eq.s32.totalorder %s21, 0
    %p41 = por %p39, %p40
    %p42 = scmp.ne.s32.totalorder %s31, %s34
    %p43 = scmp.eq.s32.totalorder %s26, 1
    %p44 = por %p42, %p43
    %p45 = scmp.ne.s32.totalorder %s34, %s35
    %p46 = scmp.eq.s32.totalorder %s26, 0
    %p47 = por %p45, %p46
    %p48 = scmp.ne.s32.totalorder %s34, %s35
    %p49 = scmp.eq.s32.totalorder %s27, 1
    %p50 = por %p48, %p49
    %p52 = scmp.ne.s32.totalorder %s35, %s51
    %p53 = scmp.eq.s32.totalorder %s27, 0
    %p54 = por %p52, %p53
    %s56 = sadd.s32 %s55, 1
    %p59 = scmp.eq.s32.totalorder %s21, 1
    %p60 = scmp.ne.s32.totalorder %s55, %s57
    %p61 = scmp.eq.s32.totalorder %s21, 0
    %p62 = por %p60, %p61
    %p63 = scmp.ne.s32.totalorder %s55, %s57
    %p64 = scmp.eq.s32.totalorder %s26, 1
    %p65 = por %p63, %p64
    %p66 = scmp.ne.s32.totalorder %s57, %s58
    %p67 = scmp.eq.s32.totalorder %s26, 0
    %p68 = por %p66, %p67
    %p69 = scmp.ne.s32.totalorder %s57, %s58
    %p70 = scmp.eq.s32.totalorder %s27, 1
    %p71 = por %p69, %p70
    %p73 = scmp.ne.s32.totalorder %s58, %s72
    %p74 = scmp.eq.s32.totalorder %s27, 0
    %p75 = por %p73, %p74
    %s77 = sadd.s32 %s76, 1
    %p80 = scmp.eq.s32.totalorder %s21, 1
    %p81 = scmp.ne.s32.totalorder %s76, %s78
    %p82 = scmp.eq.s32.totalorder %s21, 0
    %p83 = por %p81, %p82
    %p84 = scmp.ne.s32.totalorder %s76, %s78
    %p85 = scmp.eq.s32.totalorder %s26, 1
    %p86 = por %p84, %p85
    %p87 = scmp.ne.s32.totalorder %s78, %s79
    %p88 = scmp.eq.s32.totalorder %s26, 0
    %p89 = por %p87, %p88
    %p90 = scmp.ne.s32.totalorder %s78, %s79
    %p91 = scmp.eq.s32.totalorder %s27, 1
    %p92 = por %p90, %p91
    %p94 = scmp.ne.s32.totalorder %s79, %s93
    %p95 = scmp.eq.s32.totalorder %s27, 0
    %p96 = por %p94, %p95
    %s98 = sadd.s32 %s97, 1
    %p101 = scmp.eq.s32.totalorder %s21, 1
    %p102 = scmp.ne.s32.totalorder %s97, %s99
    %p103 = scmp.eq.s32.totalorder %s21, 0
    %p104 = por %p102, %p103
    %p105 = scmp.ne.s32.totalorder %s97, %s99
    %p106 = scmp.eq.s32.totalorder %s26, 1
    %p107 = por %p105, %p106
    %p108 = scmp.ne.s32.totalorder %s99, %s100
    %p109 = scmp.eq.s32.totalorder %s26, 0
    %p110 = por %p108, %p109
    %p111 = scmp.ne.s32.totalorder %s99, %s100
    %p112 = scmp.eq.s32.totalorder %s27, 1
    %p113 = por %p111, %p112
    %p115 = scmp.ne.s32.totalorder %s100, %s114
    %p116 = scmp.eq.s32.totalorder %s27, 0
    %p117 = por %p115, %p116
    %s119 = sadd.s32 %s118, 1
    %p122 = scmp.eq.s32.totalorder %s21, 1
    %p123 = scmp.ne.s32.totalorder %s118, %s120
    %p124 = scmp.eq.s32.totalorder %s21, 0
    %p125 = por %p123, %p124
    %p126 = scmp.ne.s32.totalorder %s118, %s120
    %p127 = scmp.eq.s32.totalorder %s26, 1
    %p128 = por %p126, %p127
    %p129 = scmp.ne.s32.totalorder %s120, %s121
    %p130 = scmp.eq.s32.totalorder %s26, 0
    %p131 = por %p129, %p130
    %p132 = scmp.ne.s32.totalorder %s120, %s121
    %p133 = scmp.eq.s32.totalorder %s27, 1
    %p134 = por %p132, %p133
    %p136 = scmp.ne.s32.totalorder %s121, %s135
    %p137 = scmp.eq.s32.totalorder %s27, 0
    %p138 = por %p136, %p137
    %s140 = sadd.s32 %s139, 1
    %p143 = scmp.eq.s32.totalorder %s21, 1
    %p144 = scmp.ne.s32.totalorder %s139, %s141
    %p145 = scmp.eq.s32.totalorder %s21, 0
    %p146 = por %p144, %p145
    %p147 = scmp.ne.s32.totalorder %s139, %s141
    %p148 = scmp.eq.s32.totalorder %s26, 1
    %p149 = por %p147, %p148
    %p150 = scmp.ne.s32.totalorder %s141, %s142
    %p151 = scmp.eq.s32.totalorder %s26, 0
    %p152 = por %p150, %p151
    %p153 = scmp.ne.s32.totalorder %s141, %s142
    %p154 = scmp.eq.s32.totalorder %s27, 1
    %p155 = por %p153, %p154
    %p157 = scmp.ne.s32.totalorder %s142, %s156
    %p158 = scmp.eq.s32.totalorder %s27, 0
    %p159 = por %p157, %p158
    %s161 = sadd.s32 %s160, 1
    %p164 = scmp.eq.s32.totalorder %s21, 1
    %p165 = scmp.ne.s32.totalorder %s160, %s162
    %p166 = scmp.eq.s32.totalorder %s21, 0
    %p167 = por %p165, %p166
    %p168 = scmp.ne.s32.totalorder %s160, %s162
    %p169 = scmp.eq.s32.totalorder %s26, 1
    %p170 = por %p168, %p169
    %p171 = scmp.ne.s32.totalorder %s162, %s163
    %p172 = scmp.eq.s32.totalorder %s26, 0
    %p173 = por %p171, %p172
    %p174 = scmp.ne.s32.totalorder %s162, %s163
    %p175 = scmp.eq.s32.totalorder %s27, 1
    %p176 = por %p174, %p175
    %p178 = scmp.ne.s32.totalorder %s163, %s177
    %p179 = scmp.eq.s32.totalorder %s27, 0
    %p180 = por %p178, %p179
    %s182 = sadd.s32 %s181, 1
    %p185 = scmp.eq.s32.totalorder %s21, 1
    %p186 = scmp.ne.s32.totalorder %s181, %s183
    %p187 = scmp.eq.s32.totalorder %s21, 0
    %p188 = por %p186, %p187
    %p189 = scmp.ne.s32.totalorder %s181, %s183
    %p190 = scmp.eq.s32.totalorder %s26, 1
    %p191 = por %p189, %p190
    %p192 = scmp.ne.s32.totalorder %s183, %s184
    %p193 = scmp.eq.s32.totalorder %s26, 0
    %p194 = por %p192, %p193
    %p195 = scmp.ne.s32.totalorder %s183, %s184
    %p196 = scmp.eq.s32.totalorder %s27, 1
    %p197 = por %p195, %p196
    %p199 = scmp.ne.s32.totalorder %s184, %s198
    %p200 = scmp.eq.s32.totalorder %s27, 0
    %p201 = por %p199, %p200
    %s203 = sadd.s32 %s202, 1
    %p206 = scmp.eq.s32.totalorder %s21, 1
    %p207 = scmp.ne.s32.totalorder %s202, %s204
    %p208 = scmp.eq.s32.totalorder %s21, 0
    %p209 = por %p207, %p208
    %p210 = scmp.ne.s32.totalorder %s202, %s204
    %p211 = scmp.eq.s32.totalorder %s26, 1
    %p212 = por %p210, %p211
    %p213 = scmp.ne.s32.totalorder %s204, %s205
    %p214 = scmp.eq.s32.totalorder %s26, 0
    %p215 = por %p213, %p214
    %p216 = scmp.ne.s32.totalorder %s204, %s205
    %p217 = scmp.eq.s32.totalorder %s27, 1
    %p218 = por %p216, %p217
    %p220 = scmp.ne.s32.totalorder %s205, %s219
    %p221 = scmp.eq.s32.totalorder %s27, 0
    %p222 = por %p220, %p221
    %s224 = sadd.s32 %s223, 1
    %p227 = scmp.eq.s32.totalorder %s21, 1
    %p228 = scmp.ne.s32.totalorder %s223, %s225
    %p229 = scmp.eq.s32.totalorder %s21, 0
    %p230 = por %p228, %p229
    %p231 = scmp.ne.s32.totalorder %s223, %s225
    %p232 = scmp.eq.s32.totalorder %s26, 1
    %p233 = por %p231, %p232
    %p234 = scmp.ne.s32.totalorder %s225, %s226
    %p235 = scmp.eq.s32.totalorder %s26, 0
    %p236 = por %p234, %p235
    %p237 = scmp.ne.s32.totalorder %s225, %s226
    %p238 = scmp.eq.s32.totalorder %s27, 1
    %p239 = por %p237, %p238
    %p241 = scmp.ne.s32.totalorder %s226, %s240
    %p242 = scmp.eq.s32.totalorder %s27, 0
    %p243 = por %p241, %p242
    %s245 = sadd.s32 %s244, 1
    %p248 = scmp.eq.s32.totalorder %s21, 1
    %p249 = scmp.ne.s32.totalorder %s244, %s246
    %p250 = scmp.eq.s32.totalorder %s21, 0
    %p251 = por %p249, %p250
    %p252 = scmp.ne.s32.totalorder %s244, %s246
    %p253 = scmp.eq.s32.totalorder %s26, 1
    %p254 = por %p252, %p253
    %p255 = scmp.ne.s32.totalorder %s246, %s247
    %p256 = scmp.eq.s32.totalorder %s26, 0
    %p257 = por %p255, %p256
    %p258 = scmp.ne.s32.totalorder %s246, %s247
    %p259 = scmp.eq.s32.totalorder %s27, 1
    %p260 = por %p258, %p259
    %p262 = scmp.ne.s32.totalorder %s247, %s261
    %p263 = scmp.eq.s32.totalorder %s27, 0
    %p264 = por %p262, %p263
    %s266 = sadd.s32 %s265, 1
    %p269 = scmp.eq.s32.totalorder %s21, 1
    %p270 = scmp.ne.s32.totalorder %s265, %s267
    %p271 = scmp.eq.s32.totalorder %s21, 0
    %p272 = por %p270, %p271
    %p273 = scmp.ne.s32.totalorder %s265, %s267
    %p274 = scmp.eq.s32.totalorder %s26, 1
    %p275 = por %p273, %p274
    %p276 = scmp.ne.s32.totalorder %s267, %s268
    %p277 = scmp.eq.s32.totalorder %s26, 0
    %p278 = por %p276, %p277
    %p279 = scmp.ne.s32.totalorder %s267, %s268
    %p280 = scmp.eq.s32.totalorder %s27, 1
    %p281 = por %p279, %p280
    %p283 = scmp.ne.s32.totalorder %s268, %s282
    %p284 = scmp.eq.s32.totalorder %s27, 0
    %p285 = por %p283, %p284
    %s287 = sadd.s32 %s286, 1
    %p290 = scmp.eq.s32.totalorder %s21, 1
    %p291 = scmp.ne.s32.totalorder %s286, %s288
    %p292 = scmp.eq.s32.totalorder %s21, 0
    %p293 = por %p291, %p292
    %p294 = scmp.ne.s32.totalorder %s286, %s288
    %p295 = scmp.eq.s32.totalorder %s26, 1
    %p296 = por %p294, %p295
    %p297 = scmp.ne.s32.totalorder %s288, %s289
    %p298 = scmp.eq.s32.totalorder %s26, 0
    %p299 = por %p297, %p298
    %p300 = scmp.ne.s32.totalorder %s288, %s289
    %p301 = scmp.eq.s32.totalorder %s27, 1
    %p302 = por %p300, %p301
    %p304 = scmp.ne.s32.totalorder %s289, %s303
    %p305 = scmp.eq.s32.totalorder %s27, 0
    %p306 = por %p304, %p305
    %s308 = sadd.s32 %s307, 1
    %p311 = scmp.eq.s32.totalorder %s21, 1
    %p312 = scmp.ne.s32.totalorder %s307, %s309
    %p313 = scmp.eq.s32.totalorder %s21, 0
    %p314 = por %p312, %p313
    %p315 = scmp.ne.s32.totalorder %s307, %s309
    %p316 = scmp.eq.s32.totalorder %s26, 1
    %p317 = por %p315, %p316
    %p318 = scmp.ne.s32.totalorder %s309, %s310
    %p319 = scmp.eq.s32.totalorder %s26, 0
    %p320 = por %p318, %p319
    %p321 = scmp.ne.s32.totalorder %s309, %s310
    %p322 = scmp.eq.s32.totalorder %s27, 1
    %p323 = por %p321, %p322
    %p325 = scmp.ne.s32.totalorder %s310, %s324
    %p326 = scmp.eq.s32.totalorder %s27, 0
    %p327 = por %p325, %p326
    %s329 = sadd.s32 %s328, 1
    %p332 = scmp.eq.s32.totalorder %s21, 1
    %p333 = scmp.ne.s32.totalorder %s328, %s330
    %p334 = scmp.eq.s32.totalorder %s21, 0
    %p335 = por %p333, %p334
    %p336 = scmp.ne.s32.totalorder %s328, %s330
    %p337 = scmp.eq.s32.totalorder %s26, 1
    %p338 = por %p336, %p337
    %p339 = scmp.ne.s32.totalorder %s330, %s331
    %p340 = scmp.eq.s32.totalorder %s26, 0
    %p341 = por %p339, %p340
    %p342 = scmp.ne.s32.totalorder %s330, %s331
    %p343 = scmp.eq.s32.totalorder %s27, 1
    %p344 = por %p342, %p343
    %p346 = scmp.ne.s32.totalorder %s331, %s345
    %p347 = scmp.eq.s32.totalorder %s27, 0
    %p348 = por %p346, %p347
    %s349 = ssub.s32 %s21, %s28
    %p350 = scmp.eq.s32.totalorder %s349, 0
    %s352 = sadd.s32 %s351, 1
    %s353 = scalar_select %p350, %s351, %s352
    %p356 = pneg %p350
    %p357 = scmp.eq.s32.totalorder %s21, 1
    %p358 = por %p356, %p357
    %p359 = scmp.ne.s32.totalorder %s351, %s354
    %p360 = scmp.eq.s32.totalorder %s21, 0
    %p361 = por %p359, %p360
    %p362 = scmp.ne.s32.totalorder %s351, %s354
    %p363 = scmp.eq.s32.totalorder %s26, 1
    %p364 = por %p362, %p363
    %p365 = scmp.ne.s32.totalorder %s354, %s355
    %p366 = scmp.eq.s32.totalorder %s26, 0
    %p367 = por %p365, %p366
    %p368 = scmp.ne.s32.totalorder %s354, %s355
    %p369 = scmp.eq.s32.totalorder %s27, 1
    %p370 = por %p368, %p369
    %p372 = scmp.ne.s32.totalorder %s355, %s371
    %p373 = scmp.eq.s32.totalorder %s27, 0
    %p374 = por %p372, %p373
    %p375 = scmp.le.s32.totalorder 1, %s21
    %p376 = scmp.lt.s32.totalorder %s21, 3
    %p377 = pnand %p375, %p376
    %p378 = pneg %p377
    // Predicated region
    $region9: #{clip_vision_tower_forward.1} parent=5 // pred_check
      _
    $region10: #{clip_vision_tower_forward.1} parent=5 // pred_check_branch
      %380 = sbr.rel (%p377) target = $region12
    $region11: #{clip_vision_tower_forward.1} parent=5 // pred_region
      %s381 = ssub.s32 %s21, 1
      // Predicated region
      $region13: #{clip_vision_tower_forward.1} parent=11 // pred_check
        %p382 = pneg %p68
      $region14: #{clip_vision_tower_forward.1} parent=11 // pred_check_branch
        %384 = sbr.rel (%p382) target = $region16
      $region15: #{clip_vision_tower_forward.1} parent=11 // pred_region
        _
      $region16: #{clip_vision_tower_forward.1} parent=11 // pred_fallthru
        _
      // Predicated region
      $region17: #{clip_vision_tower_forward.1} parent=11 // pred_check
        %p385 = pneg %p89
      $region18: #{clip_vision_tower_forward.1} parent=11 // pred_check_branch
        %387 = sbr.rel (%p385) target = $region20
      $region19: #{clip_vision_tower_forward.1} parent=11 // pred_region
        _
      $region20: #{clip_vision_tower_forward.1} parent=11 // pred_fallthru
        _
      // Predicated region
      $region21: #{clip_vision_tower_forward.1} parent=11 // pred_check
        %p388 = pneg %p110
      $region22: #{clip_vision_tower_forward.1} parent=11 // pred_check_branch
        %390 = sbr.rel (%p388) target = $region24
      $region23: #{clip_vision_tower_forward.1} parent=11 // pred_region
        _
      $region24: #{clip_vision_tower_forward.1} parent=11 // pred_fallthru
        _
      // Predicated region
      $region25: #{clip_vision_tower_forward.1} parent=11 // pred_check
        %p391 = pneg %p131
      $region26: #{clip_vision_tower_forward.1} parent=11 // pred_check_branch
        %393 = sbr.rel (%p391) target = $region28
      $region27: #{clip_vision_tower_forward.1} parent=11 // pred_region
        _
      $region28: #{clip_vision_tower_forward.1} parent=11 // pred_fallthru
        _
      // Predicated region
      $region29: #{clip_vision_tower_forward.1} parent=11 // pred_check
        %p394 = pneg %p152
      $region30: #{clip_vision_tower_forward.1} parent=11 // pred_check_branch
        %396 = sbr.rel (%p394) target = $region32
      $region31: #{clip_vision_tower_forward.1} parent=11 // pred_region
        _
      $region32: #{clip_vision_tower_forward.1} parent=11 // pred_fallthru
        _
      // Predicated region
      $region33: #{clip_vision_tower_forward.1} parent=11 // pred_check
        %p397 = pneg %p173
      $region34: #{clip_vision_tower_forward.1} parent=11 // pred_check_branch
        %399 = sbr.rel (%p397) target = $region36
      $region35: #{clip_vision_tower_forward.1} parent=11 // pred_region
        _
      $region36: #{clip_vision_tower_forward.1} parent=11 // pred_fallthru
        _
      // Predicated region
      $region37: #{clip_vision_tower_forward.1} parent=11 // pred_check
        %p400 = pneg %p194
      $region38: #{clip_vision_tower_forward.1} parent=11 // pred_check_branch
        %402 = sbr.rel (%p400) target = $region40
      $region39: #{clip_vision_tower_forward.1} parent=11 // pred_region
        _
      $region40: #{clip_vision_tower_forward.1} parent=11 // pred_fallthru
        _
      // Predicated region
      $region41: #{clip_vision_tower_forward.1} parent=11 // pred_check
        %p403 = pneg %p215
      $region42: #{clip_vision_tower_forward.1} parent=11 // pred_check_branch
        %405 = sbr.rel (%p403) target = $region44
      $region43: #{clip_vision_tower_forward.1} parent=11 // pred_region
        _
      $region44: #{clip_vision_tower_forward.1} parent=11 // pred_fallthru
        _
      // Predicated region
      $region45: #{clip_vision_tower_forward.1} parent=11 // pred_check
        %p406 = pneg %p236
      $region46: #{clip_vision_tower_forward.1} parent=11 // pred_check_branch
        %408 = sbr.rel (%p406) target = $region48
      $region47: #{clip_vision_tower_forward.1} parent=11 // pred_region
        _
      $region48: #{clip_vision_tower_forward.1} parent=11 // pred_fallthru
        _
      // Predicated region
      $region49: #{clip_vision_tower_forward.1} parent=11 // pred_check
        %p409 = pneg %p257
      $region50: #{clip_vision_tower_forward.1} parent=11 // pred_check_branch
        %411 = sbr.rel (%p409) target = $region52
      $region51: #{clip_vision_tower_forward.1} parent=11 // pred_region
        _
      $region52: #{clip_vision_tower_forward.1} parent=11 // pred_fallthru
        _
      // Predicated region
      $region53: #{clip_vision_tower_forward.1} parent=11 // pred_check
        %p412 = pneg %p278
      $region54: #{clip_vision_tower_forward.1} parent=11 // pred_check_branch
        %414 = sbr.rel (%p412) target = $region56
      $region55: #{clip_vision_tower_forward.1} parent=11 // pred_region
        _
      $region56: #{clip_vision_tower_forward.1} parent=11 // pred_fallthru
        _
      // Predicated region
      $region57: #{clip_vision_tower_forward.1} parent=11 // pred_check
        %p415 = pneg %p299
      $region58: #{clip_vision_tower_forward.1} parent=11 // pred_check_branch
        %417 = sbr.rel (%p415) target = $region60
      $region59: #{clip_vision_tower_forward.1} parent=11 // pred_region
        _
      $region60: #{clip_vision_tower_forward.1} parent=11 // pred_fallthru
        _
      // Predicated region
      $region61: #{clip_vision_tower_forward.1} parent=11 // pred_check
        %p418 = pneg %p320
      $region62: #{clip_vision_tower_forward.1} parent=11 // pred_check_branch
        %420 = sbr.rel (%p418) target = $region64
      $region63: #{clip_vision_tower_forward.1} parent=11 // pred_region
        _
      $region64: #{clip_vision_tower_forward.1} parent=11 // pred_fallthru
        _
      // Predicated region
      $region65: #{clip_vision_tower_forward.1} parent=11 // pred_check
        %p421 = pneg %p341
      $region66: #{clip_vision_tower_forward.1} parent=11 // pred_check_branch
        %423 = sbr.rel (%p421) target = $region68
      $region67: #{clip_vision_tower_forward.1} parent=11 // pred_region
        _
      $region68: #{clip_vision_tower_forward.1} parent=11 // pred_fallthru
        _
    $region12: #{clip_vision_tower_forward.1} parent=5 // pred_fallthru
      _
    %p424 = scmp.lt.s32.totalorder %s21, 2
    // Predicated region
    $region69: #{clip_vision_tower_forward.1} parent=5 // pred_check
      %p425 = pneg %p424
    $region70: #{clip_vision_tower_forward.1} parent=5 // pred_check_branch
      %427 = sbr.rel (%p425) target = $region72
    $region71: #{clip_vision_tower_forward.1} parent=5 // pred_region
      // Predicated region
      $region73: #{clip_vision_tower_forward.1} parent=71 // pred_check
        %p428 = pneg %p41
      $region74: #{clip_vision_tower_forward.1} parent=71 // pred_check_branch
        %430 = sbr.rel (%p428) target = $region76
      $region75: #{clip_vision_tower_forward.1} parent=71 // pred_region
        %p431 = scmp.lt.s32.totalorder %s21, 1
        %s432 = scalar_select %p431, %s21, 1
        %s433 = smul.addr %s432, 4
        %s434 = smul.addr %s433, 4
        %s435 = scalar_lea.vmem %s0, %s434
      $region76: #{clip_vision_tower_forward.1} parent=71 // pred_fallthru
        _
    $region72: #{clip_vision_tower_forward.1} parent=5 // pred_fallthru
      _
    %p436 = scmp.le.s32.totalorder 1, %s21
    %p437 = scmp.lt.s32.totalorder %s21, 3
    %p438 = pnand %p436, %p437
    %p439 = pneg %p438
    // Predicated region
    $region77: #{clip_vision_tower_forward.1} parent=5 // pred_check
      _
    $region78: #{clip_vision_tower_forward.1} parent=5 // pred_check_branch
      %441 = sbr.rel (%p438) target = $region80
    $region79: #{clip_vision_tower_forward.1} parent=5 // pred_region
      %s442 = ssub.s32 %s21, 1
      %p443 = scmp.lt.s32.totalorder %s26, 1
      %s444 = scalar_select %p443, %s26, 1
      %s445 = smul.addr %s444, 4
      %s446 = smul.addr %s445, 4
      %s447 = scalar_lea.vmem %s0, %s446
      %p448 = pneg %p47
      %p449 = pneg %p44
      %p450 = pneg %p68
      %p451 = pneg %p65
      %p452 = pneg %p89
      %p453 = pneg %p86
      %p454 = pneg %p110
      %p455 = pneg %p107
      %p456 = pneg %p131
      %p457 = pneg %p128
      %p458 = pneg %p152
      %p459 = pneg %p149
      %p460 = pneg %p173
      %p461 = pneg %p170
      %p462 = pneg %p194
      %p463 = pneg %p191
      %p464 = pneg %p215
      %p465 = pneg %p212
      %p466 = pneg %p236
      %p467 = pneg %p233
      %p468 = pneg %p257
      %p469 = pneg %p254
      %p470 = pneg %p278
      %p471 = pneg %p275
      %p472 = pneg %p299
      %p473 = pneg %p296
      %p474 = pneg %p320
      %p475 = pneg %p317
      %p476 = pneg %p341
      %p477 = pneg %p338
      %p478 = pneg %p367
      %p479 = pneg %p364
      %p480 = scmp.lt.s32.totalorder %s26, 1
      %s481 = scalar_select %p480, %s26, 1
      %s482 = smul.addr %s481, 2
      %s483 = smul.addr %s482, 8
      %s484 = scalar_lea.vmem %s15, %s483
      %p485 = scmp.lt.s32.totalorder %s26, 1
      %s486 = scalar_select %p485, %s26, 1
      %s487 = smul.addr %s486, 4
      %s488 = smul.addr %s487, 4
      %s489 = scalar_lea.vmem %s0, %s488
      %p490 = scmp.lt.s32.totalorder %s26, 1
      %s491 = scalar_select %p490, %s26, 1
      %s492 = smul.addr %s491, 2
      %s493 = smul.addr %s492, 8
      %s494 = scalar_lea.vmem %s15, %s493
      %v496 = vld [vmem:[%s1] sm:$0xff]
      %v497 = vld [vmem:[%s1 + $0x8] sm:$0x3]
      %v498 = vld [vmem:[%s489] sm:$0xff]
      %v499 = vld [vmem:[%s489 + $0x8] sm:$0x11]
      %v500 = vld [vmem:[%s2] sm:$0xf]
      %v501 = vld [vmem:[%s2 + $0x4] sm:$0xf]
      %v502 = vld [vmem:[%s2 + $0x8] sm:$0xf]
      %v503 = vld [vmem:[%s2 + $0xc] sm:$0xf]
      %v504 = vld [vmem:[%s2 + $0x10] sm:$0xf]
      %v505 = vld [vmem:[%s2 + $0x14] sm:$0xf]
      %v506 = vld [vmem:[%s2 + $0x18] sm:$0xf]
      %v507 = vld [vmem:[%s2 + $0x1c] sm:$0xf]
      %v508 = vld [vmem:[%s2 + $0x20] sm:$0xf]
      %v509 = vld [vmem:[%s2 + $0x24] sm:$0xf]
      %v510 = vld [vmem:[%s2 + $0x28] sm:$0xf]
      %v511 = vld [vmem:[%s2 + $0x2c] sm:$0xf]
      %v512 = vld [vmem:[%s2 + $0x30] sm:$0xf]
      %v513 = vld [vmem:[%s2 + $0x34] sm:$0xf]
      %v514 = vld [vmem:[%s2 + $0x38] sm:$0xf]
      %v515 = vld [vmem:[%s2 + $0x3c] sm:$0xf]
      %v516 = vld [vmem:[%s2 + $0x40] sm:$0xf]
      %v517 = vld [vmem:[%s2 + $0x44] sm:$0xf]
      %v518 = vld [vmem:[%s2 + $0x48] sm:$0xf]
      %v519 = vld [vmem:[%s2 + $0x4c] sm:$0xf]
      %v520 = vld [vmem:[%s2 + $0x50] sm:$0xf]
      %v521 = vld [vmem:[%s2 + $0x54] sm:$0xf]
      %v522 = vld [vmem:[%s2 + $0x58] sm:$0xf]
      %v523 = vld [vmem:[%s2 + $0x5c] sm:$0xf]
      %v524 = vld [vmem:[%s3] sm:$0xff]
      %v525 = vld [vmem:[%s3 + $0x8] sm:$0x3]
      %v528 = vunpack.c.l.b16 %v498
      %v529 = vunpack.c.h.b16 %v498
      %v530 = vunpack.c.l.b16 %v499
      %v531 = vunpack.c.h.b16 %v499
      %v532 = vpack.c.b16 %v530, %v528
      %v533 = vpack.c.b16 %v531, %v529
      %v559 = vunpack.c.l.b16 %v500
      %v560 = vunpack.c.l.b16 %v501
      %v561 = vunpack.c.l.b16 %v502
      %v562 = vunpack.c.l.b16 %v503
      %v563 = vunpack.c.l.b16 %v504
      %v564 = vunpack.c.l.b16 %v505
      %v565 = vunpack.c.l.b16 %v506
      %v566 = vunpack.c.l.b16 %v507
      %v567 = vunpack.c.l.b16 %v508
      %v568 = vunpack.c.l.b16 %v509
      %v569 = vunpack.c.l.b16 %v510
      %v570 = vunpack.c.l.b16 %v511
      %v571 = vunpack.c.l.b16 %v512
      %v572 = vunpack.c.l.b16 %v513
      %v573 = vunpack.c.l.b16 %v514
      %v574 = vunpack.c.l.b16 %v515
      %v575 = vunpack.c.l.b16 %v516
      %v576 = vunpack.c.l.b16 %v517
      %v577 = vunpack.c.l.b16 %v518
      %v578 = vunpack.c.l.b16 %v519
      %v579 = vunpack.c.l.b16 %v520
      %v580 = vunpack.c.l.b16 %v521
      %v581 = vunpack.c.l.b16 %v522
      %v582 = vunpack.c.l.b16 %v523
      %v583 = vpack.c.b16 %v560, %v559
      %v584 = vpack.c.b16 %v562, %v561
      %v585 = vpack.c.b16 %v564, %v563
      %v586 = vpack.c.b16 %v566, %v565
      %v587 = vpack.c.b16 %v568, %v567
      %v588 = vpack.c.b16 %v570, %v569
      %v589 = vpack.c.b16 %v572, %v571
      %v590 = vpack.c.b16 %v574, %v573
      %v591 = vpack.c.b16 %v576, %v575
      %v592 = vpack.c.b16 %v578, %v577
      %v593 = vpack.c.b16 %v580, %v579
      %v594 = vpack.c.b16 %v582, %v581
      %vm607 = vcmask 523264
      %v609 = vsel %vm607, %v533, 0
      %611 = vmatprep.subr.bf16.mxu0 0
      %612 = vmatpush1.bf16.msra.mxu0 %v583
      %613 = vmatprep.subr.bf16.mxu0 0
      %614 = vmatpush1.bf16.msra.mxu0 %v584
      %615 = vmatprep.subr.bf16.mxu0 0
      %616 = vmatpush1.bf16.msra.mxu0 %v585
      %617 = vmatprep.subr.bf16.mxu0 0
      %618 = vmatpush1.bf16.msra.mxu0 %v586
      %619 = vmatprep.subr.bf16.mxu0 0
      %620 = vmatpush1.bf16.msra.mxu0 %v587
      %621 = vmatprep.subr.bf16.mxu0 0
      %622 = vmatpush1.bf16.msra.mxu0 %v588
      %623 = vmatprep.subr.bf16.mxu0 0
      %624 = vmatpush1.bf16.msra.mxu0 %v589
      %625 = vmatprep.subr.bf16.mxu0 0
      %626 = vmatpush1.bf16.msra.mxu0 %v590
      %627 = vmatprep.subr.bf16.mxu0 0
      %628 = vmatpush1.bf16.msra.mxu0 %v591
      %629 = vmatprep.subr.bf16.mxu0 0
      %630 = vmatpush1.bf16.msra.mxu0 %v592
      %631 = vmatprep.subr.bf16.mxu0 0
      %632 = vmatpush1.bf16.msra.mxu0 %v593
      %633 = vmatprep.subr.bf16.mxu0 0
      %634 = vmatpush1.bf16.msra.mxu0 %v594
      %635 = vmatprep.subr.bf16.mxu0 0
      %636 = vmatpush1.bf16.msra.mxu0 0
      %637 = vmatprep.subr.bf16.mxu0 0
      %638 = vmatpush1.bf16.msra.mxu0 0
      %639 = vmatprep.subr.bf16.mxu0 0
      %640 = vmatpush1.bf16.msra.mxu0 0
      %641 = vmatprep.subr.bf16.mxu0 0
      %642 = vmatpush1.bf16.msra.mxu0 0
      %643 = vmatprep.mubr.bf16.mxu0 %v609
      %644 = vmatmul.mubr.bf16.gmra.mrb[0].mxu0 %v532
      %v645 = vpop.f32.mrb[0].mxu0
      %v646 = vadd.f32 %v524, %v645
      %v647 = vpop.f32.mrb[0].mxu0
      %v648 = vpop.f32.mrb[0].mxu0
      %v649 = vadd.f32 %v525, %v648
      %v650 = vpop.f32.mrb[0].mxu0
      %651 = vdwg.mxu0
      %v652 = vld [vmem:[%s4] sm:$0x3]
      %vm653 = vcmask 261120
      %v654 = vsel %vm653, %v646, 0.0
      %655 = vadd.xlane.f32.xlu0 %v654
      %v656 = vpop.xlane.xlu0 %655
      %vm657 = vcmask 254976
      %v658 = vsel %vm657, %v649, 0.0
      %659 = vadd.xlane.f32.xlu0 %v658
      %v660 = vpop.xlane.xlu0 %659
      %v661 = vrcp.pop 32.0
      %v662 = vmul.f32 %v656, %v661
      %v663 = vmul.f32 %v660, %v661
      %v664 = vsub.f32 %v646, %v662
      %v665 = vsub.f32 %v649, %v663
      %v666 = vmul.f32 %v664, %v664
      %v667 = vmul.f32 %v665, %v665
      %v668 = vsel %vm653, %v666, 0.0
      %669 = vadd.xlane.f32.xlu0 %v668
      %v670 = vpop.xlane.xlu0 %669
      %v671 = vsel %vm657, %v667, 0.0
      %672 = vadd.xlane.f32.xlu0 %v671
      %v673 = vpop.xlane.xlu0 %672
      %v674 = vmul.f32 %v670, %v661
      %v675 = vmul.f32 %v673, %v661
      %v676 = vadd.f32 %v674, 1e-05
      %v677 = vadd.f32 %v675, 1e-05
      %v678 = vrsqrt.pop %v676
      %v679 = vrsqrt.pop %v677
      %v680 = vmul.f32 %v664, %v678
      %v681 = vmul.f32 %v665, %v679
      %v682 = vlaneseq
      %v683 = vshrl.u32 %v682, 7
      %v684 = vsub.s32 0, %v683
      %v685 = vrot.slane %v652, %v684
      %v686 = vmul.f32 %v680, %v685
      %v687 = vmul.f32 %v681, %v685
      %v688 = vlaneseq
      %v689 = vshrl.u32 %v688, 7
      %v690 = vsub.s32 1, %v689
      %v691 = vrot.slane %v652, %v690
      %v692 = vadd.f32 %v686, %v691
      %v693 = vadd.f32 %v687, %v691
      %v694 = vld [vmem:[%s5] sm:$0x3]
      %v695 = vsel %vm653, %v692, 0.0
      %696 = vadd.xlane.f32.xlu0 %v695
      %v697 = vpop.xlane.xlu0 %696
      %v698 = vsel %vm657, %v693, 0.0
      %699 = vadd.xlane.f32.xlu0 %v698
      %v700 = vpop.xlane.xlu0 %699
      %v701 = vmul.f32 %v697, %v661
      %v702 = vmul.f32 %v700, %v661
      %v703 = vsub.f32 %v692, %v701
      %v704 = vsub.f32 %v693, %v702
      %v705 = vmul.f32 %v703, %v703
      %v706 = vmul.f32 %v704, %v704
      %v707 = vsel %vm653, %v705, 0.0
      %708 = vadd.xlane.f32.xlu0 %v707
      %v709 = vpop.xlane.xlu0 %708
      %v710 = vsel %vm657, %v706, 0.0
      %711 = vadd.xlane.f32.xlu0 %v710
      %v712 = vpop.xlane.xlu0 %711
      %v713 = vmul.f32 %v709, %v661
      %v714 = vmul.f32 %v712, %v661
      %v715 = vadd.f32 %v713, 1e-05
      %v716 = vadd.f32 %v714, 1e-05
      %v717 = vrsqrt.pop %v715
      %v718 = vrsqrt.pop %v716
      %v719 = vmul.f32 %v703, %v717
      %v720 = vmul.f32 %v704, %v718
      %v721 = vlaneseq
      %v722 = vshrl.u32 %v721, 7
      %v723 = vsub.s32 0, %v722
      %v724 = vrot.slane %v694, %v723
      %v725 = vmul.f32 %v719, %v724
      %v726 = vmul.f32 %v720, %v724
      %v727 = vlaneseq
      %v728 = vshrl.u32 %v727, 7
      %v729 = vsub.s32 1, %v728
      %v730 = vrot.slane %v694, %v729
      %v731 = vadd.f32 %v725, %v730
      %v732 = vadd.f32 %v726, %v730
      %v733 = vld [vmem:[%s6] sm:$0xf]
      %v734 = vld [vmem:[%s6 + $0x4] sm:$0xf]
      %v735 = vld [vmem:[%s6 + $0x8] sm:$0xf]
      %v736 = vld [vmem:[%s6 + $0xc] sm:$0xf]
      %v737 = vpack.c.bf16 %v732, %v731
      %v738 = vld [vmem:[%s7] sm:$0x1]
      %v740 = vlaneseq
      %v741 = vshrl.u32 %v740, 7
      %v742 = vsub.s32 0, %v741
      %v743 = vrot.slane %v738, %v742
      %v749 = vunpack.c.l.b16 %v733
      %v750 = vunpack.c.l.b16 %v734
      %v751 = vunpack.c.l.b16 %v735
      %v752 = vunpack.c.l.b16 %v736
      %v753 = vpack.c.b16 %v750, %v749
      %v754 = vpack.c.b16 %v752, %v751
      %v758 = vsel %vm653, %v737, 0
      %760 = vmatprep.subr.bf16.mxu0 0
      %761 = vmatpush1.bf16.msra.mxu0 %v753
      %762 = vmatprep.subr.bf16.mxu0 0
      %763 = vmatpush1.bf16.msra.mxu0 %v754
      %764 = vmatprep.subr.bf16.mxu0 0
      %765 = vmatpush1.bf16.msra.mxu0 0
      %766 = vmatprep.subr.bf16.mxu0 0
      %767 = vmatpush1.bf16.msra.mxu0 0
      %768 = vmatprep.subr.bf16.mxu0 0
      %769 = vmatpush1.bf16.msra.mxu0 0
      %770 = vmatprep.subr.bf16.mxu0 0
      %771 = vmatpush1.bf16.msra.mxu0 0
      %772 = vmatprep.subr.bf16.mxu0 0
      %773 = vmatpush1.bf16.msra.mxu0 0
      %774 = vmatprep.subr.bf16.mxu0 0
      %775 = vmatpush1.bf16.msra.mxu0 0
      %776 = vmatprep.subr.bf16.mxu0 0
      %777 = vmatpush1.bf16.msra.mxu0 0
      %778 = vmatprep.subr.bf16.mxu0 0
      %779 = vmatpush1.bf16.msra.mxu0 0
      %780 = vmatprep.subr.bf16.mxu0 0
      %781 = vmatpush1.bf16.msra.mxu0 0
      %782 = vmatprep.subr.bf16.mxu0 0
      %783 = vmatpush1.bf16.msra.mxu0 0
      %784 = vmatprep.subr.bf16.mxu0 0
      %785 = vmatpush1.bf16.msra.mxu0 0
      %786 = vmatprep.subr.bf16.mxu0 0
      %787 = vmatpush1.bf16.msra.mxu0 0
      %788 = vmatprep.subr.bf16.mxu0 0
      %789 = vmatpush1.bf16.msra.mxu0 0
      %790 = vmatprep.subr.bf16.mxu0 0
      %791 = vmatpush1.bf16.msra.mxu0 0
      %792 = vmatprep.mubr.bf16.mxu0 0
      %793 = vmatmul.mubr.bf16.gmra.mrb[0].mxu0 %v758
      %v794 = vpop.f32.mrb[0].mxu0
      %v795 = vadd.f32 %v743, %v794
      %v796 = vpop.f32.mrb[0].mxu0
      %v797 = vpop.f32.mrb[0].mxu0
      %v798 = vadd.f32 %v743, %v797
      %v799 = vpop.f32.mrb[0].mxu0
      %800 = vdwg.mxu0
      %v801 = vpack.c.bf16 %v798, %v795
      %803 = vrot.lane.b32.xlu0 %v801, 96
      %v804 = vpop.permute.xlu0 %803
      %vm805 = vcmask 64512
      %v807 = vsel %vm805, %v801, 0
      %v810 = vsel %vm805, %v804, 0
      %812 = vmatprep.subr.bf16.mxu0 0
      %813 = vmatpush1.bf16.xpose.msra.mxu0 %v810
      %814 = vmatprep.subr.bf16.mxu0 0
      %815 = vmatpush1.bf16.xpose.msra.mxu0 0
      %816 = vmatprep.subr.bf16.mxu0 0
      %817 = vmatpush1.bf16.xpose.msra.mxu0 0
      %818 = vmatprep.subr.bf16.mxu0 0
      %819 = vmatpush1.bf16.xpose.msra.mxu0 0
      %820 = vmatprep.subr.bf16.mxu0 0
      %821 = vmatpush1.bf16.xpose.msra.mxu0 0
      %822 = vmatprep.subr.bf16.mxu0 0
      %823 = vmatpush1.bf16.xpose.msra.mxu0 0
      %824 = vmatprep.subr.bf16.mxu0 0
      %825 = vmatpush1.bf16.xpose.msra.mxu0 0
      %826 = vmatprep.subr.bf16.mxu0 0
      %827 = vmatpush1.bf16.xpose.msra.mxu0 0
      %828 = vmatprep.subr.bf16.mxu0 0
      %829 = vmatpush1.bf16.xpose.msra.mxu0 0
      %830 = vmatprep.subr.bf16.mxu0 0
      %831 = vmatpush1.bf16.xpose.msra.mxu0 0
      %832 = vmatprep.subr.bf16.mxu0 0
      %833 = vmatpush1.bf16.xpose.msra.mxu0 0
      %834 = vmatprep.subr.bf16.mxu0 0
      %835 = vmatpush1.bf16.xpose.msra.mxu0 0
      %836 = vmatprep.subr.bf16.mxu0 0
      %837 = vmatpush1.bf16.xpose.msra.mxu0 0
      %838 = vmatprep.subr.bf16.mxu0 0
      %839 = vmatpush1.bf16.xpose.msra.mxu0 0
      %840 = vmatprep.subr.bf16.mxu0 0
      %841 = vmatpush1.bf16.xpose.msra.mxu0 0
      %842 = vmatprep.subr.bf16.mxu0 0
      %843 = vmatpush1.bf16.xpose.msra.mxu0 0
      %844 = vmatprep.mubr.bf16.mxu0 0
      %845 = vmatmul.mubr.bf16.gmra.mrb[0].mxu0 %v807
      %v846 = vpop.f32.mrb[0].mxu0
      %v847 = vadd.f32 %v496, %v846
      %v848 = vpop.f32.mrb[0].mxu0
      %v849 = vpop.f32.mrb[0].mxu0
      %v850 = vadd.f32 %v497, %v849
      %v851 = vpop.f32.mrb[0].mxu0
      %852 = vdwg.mxu0
      %vm853 = vcmask 80896
      %v854 = vsel %vm853, %v847, -inf
      %855 = vmax.xlane.f32.xlu0 %v854
      %v856 = vpop.xlane.xlu0 %855
      %vm857 = vcmask 74752
      %v858 = vsel %vm857, %v850, -inf
      %859 = vmax.xlane.f32.xlu0 %v858
      %v860 = vpop.xlane.xlu0 %859
      %v861 = vsub.f32 %v847, %v856
      %v862 = vsub.f32 %v850, %v860
      %v863 = vmul.f32 %v861, 1.442695
      %v864 = vpow.pop %v863
      %v865 = vmul.f32 %v862, 1.442695
      %v866 = vpow.pop %v865
      %v867 = vsel %vm853, %v864, 0.0
      %868 = vadd.xlane.f32.xlu0 %v867
      %v869 = vpop.xlane.xlu0 %868
      %v870 = vsel %vm857, %v866, 0.0
      %871 = vadd.xlane.f32.xlu0 %v870
      %v872 = vpop.xlane.xlu0 %871
      %v873 = vrcp.pop %v869
      %v874 = vrcp.pop %v872
      %v875 = vmul.f32 %v864, %v873
      %v876 = vmul.f32 %v866, %v874
      %v877 = vpack.c.bf16 %v876, %v875
      %878 = vrot.lane.b32.xlu0 %v801, 64
      %v879 = vpop.permute.xlu0 %878
      %v881 = vsel %vm853, %v877, 0
      %vm883 = vcmask 1044480
      %v885 = vsel %vm883, %v879, 0
      %887 = vmatprep.subr.bf16.mxu0 0
      %888 = vmatpush1.bf16.msra.mxu0 %v885
      %889 = vmatprep.subr.bf16.mxu0 0
      %890 = vmatpush1.bf16.msra.mxu0 0
      %891 = vmatprep.subr.bf16.mxu0 0
      %892 = vmatpush1.bf16.msra.mxu0 0
      %893 = vmatprep.subr.bf16.mxu0 0
      %894 = vmatpush1.bf16.msra.mxu0 0
      %895 = vmatprep.subr.bf16.mxu0 0
      %896 = vmatpush1.bf16.msra.mxu0 0
      %897 = vmatprep.subr.bf16.mxu0 0
      %898 = vmatpush1.bf16.msra.mxu0 0
      %899 = vmatprep.subr.bf16.mxu0 0
      %900 = vmatpush1.bf16.msra.mxu0 0
      %901 = vmatprep.subr.bf16.mxu0 0
      %902 = vmatpush1.bf16.msra.mxu0 0
      %903 = vmatprep.subr.bf16.mxu0 0
      %904 = vmatpush1.bf16.msra.mxu0 0
      %905 = vmatprep.subr.bf16.mxu0 0
      %906 = vmatpush1.bf16.msra.mxu0 0
      %907 = vmatprep.subr.bf16.mxu0 0
      %908 = vmatpush1.bf16.msra.mxu0 0
      %909 = vmatprep.subr.bf16.mxu0 0
      %910 = vmatpush1.bf16.msra.mxu0 0
      %911 = vmatprep.subr.bf16.mxu0 0
      %912 = vmatpush1.bf16.msra.mxu0 0
      %913 = vmatprep.subr.bf16.mxu0 0
      %914 = vmatpush1.bf16.msra.mxu0 0
      %915 = vmatprep.subr.bf16.mxu0 0
      %916 = vmatpush1.bf16.msra.mxu0 0
      %917 = vmatprep.subr.bf16.mxu0 0
      %918 = vmatpush1.bf16.msra.mxu0 0
      %919 = vmatprep.mubr.bf16.mxu0 0
      %920 = vmatmul.mubr.bf16.gmra.mrb[0].mxu0 %v881
      %v921 = vpop.f32.mrb[0].mxu0
      %v922 = vadd.f32 0.0, %v921
      %v923 = vpop.f32.mrb[0].mxu0
      %v924 = vpop.f32.mrb[0].mxu0
      %v925 = vadd.f32 0.0, %v924
      %v926 = vpop.f32.mrb[0].mxu0
      %927 = vdwg.mxu0
      %928 = vst.msk [vmem:[#allocation2] sm:$0xff] %vm805, %v922
      %vm929 = vcmask 58368
      %930 = vst.msk [vmem:[#allocation2 + $0x8] sm:$0x3] %vm929, %v925
      %931 = vrot.lane.b32.xlu0 %v801, 120
      %v932 = vpop.permute.xlu0 %931
      %933 = vrot.lane.b32.xlu0 %v801, 88
      %v934 = vpop.permute.xlu0 %933
      %v936 = vsel %vm805, %v932, 0
      %v939 = vsel %vm805, %v934, 0
      %941 = vmatprep.subr.bf16.mxu0 0
      %942 = vmatpush1.bf16.xpose.msra.mxu0 %v939
      %943 = vmatprep.subr.bf16.mxu0 0
      %944 = vmatpush1.bf16.xpose.msra.mxu0 0
      %945 = vmatprep.subr.bf16.mxu0 0
      %946 = vmatpush1.bf16.xpose.msra.mxu0 0
      %947 = vmatprep.subr.bf16.mxu0 0
      %948 = vmatpush1.bf16.xpose.msra.mxu0 0
      %949 = vmatprep.subr.bf16.mxu0 0
      %950 = vmatpush1.bf16.xpose.msra.mxu0 0
      %951 = vmatprep.subr.bf16.mxu0 0
      %952 = vmatpush1.bf16.xpose.msra.mxu0 0
      %953 = vmatprep.subr.bf16.mxu0 0
      %954 = vmatpush1.bf16.xpose.msra.mxu0 0
      %955 = vmatprep.subr.bf16.mxu0 0
      %956 = vmatpush1.bf16.xpose.msra.mxu0 0
      %957 = vmatprep.subr.bf16.mxu0 0
      %958 = vmatpush1.bf16.xpose.msra.mxu0 0
      %959 = vmatprep.subr.bf16.mxu0 0
      %960 = vmatpush1.bf16.xpose.msra.mxu0 0
      %961 = vmatprep.subr.bf16.mxu0 0
      %962 = vmatpush1.bf16.xpose.msra.mxu0 0
      %963 = vmatprep.subr.bf16.mxu0 0
      %964 = vmatpush1.bf16.xpose.msra.mxu0 0
      %965 = vmatprep.subr.bf16.mxu0 0
      %966 = vmatpush1.bf16.xpose.msra.mxu0 0
      %967 = vmatprep.subr.bf16.mxu0 0
      %968 = vmatpush1.bf16.xpose.msra.mxu0 0
      %969 = vmatprep.subr.bf16.mxu0 0
      %970 = vmatpush1.bf16.xpose.msra.mxu0 0
      %971 = vmatprep.subr.bf16.mxu0 0
      %972 = vmatpush1.bf16.xpose.msra.mxu0 0
      %973 = vmatprep.mubr.bf16.mxu0 0
      %974 = vmatmul.mubr.bf16.gmra.mrb[0].mxu0 %v936
      %v975 = vpop.f32.mrb[0].mxu0
      %v976 = vadd.f32 %v496, %v975
      %v977 = vpop.f32.mrb[0].mxu0
      %v978 = vpop.f32.mrb[0].mxu0
      %v979 = vadd.f32 %v497, %v978
      %v980 = vpop.f32.mrb[0].mxu0
      %981 = vdwg.mxu0
      %v982 = vsel %vm853, %v976, -inf
      %983 = vmax.xlane.f32.xlu0 %v982
      %v984 = vpop.xlane.xlu0 %983
      %v985 = vsel %vm857, %v979, -inf
      %986 = vmax.xlane.f32.xlu0 %v985
      %v987 = vpop.xlane.xlu0 %986
      %v988 = vsub.f32 %v976, %v984
      %v989 = vsub.f32 %v979, %v987
      %v990 = vmul.f32 %v988, 1.442695
      %v991 = vpow.pop %v990
      %v992 = vmul.f32 %v989, 1.442695
      %v993 = vpow.pop %v992
      %v994 = vsel %vm853, %v991, 0.0
      %995 = vadd.xlane.f32.xlu0 %v994
      %v996 = vpop.xlane.xlu0 %995
      %v997 = vsel %vm857, %v993, 0.0
      %998 = vadd.xlane.f32.xlu0 %v997
      %v999 = vpop.xlane.xlu0 %998
      %v1000 = vrcp.pop %v996
      %v1001 = vrcp.pop %v999
      %v1002 = vmul.f32 %v991, %v1000
      %v1003 = vmul.f32 %v993, %v1001
      %v1004 = vpack.c.bf16 %v1003, %v1002
      %1005 = vrot.lane.b32.xlu0 %v801, 56
      %v1006 = vpop.permute.xlu0 %1005
      %v1008 = vsel %vm853, %v1004, 0
      %v1011 = vsel %vm883, %v1006, 0
      %1013 = vmatprep.subr.bf16.mxu0 0
      %1014 = vmatpush1.bf16.msra.mxu0 %v1011
      %1015 = vmatprep.subr.bf16.mxu0 0
      %1016 = vmatpush1.bf16.msra.mxu0 0
      %1017 = vmatprep.subr.bf16.mxu0 0
      %1018 = vmatpush1.bf16.msra.mxu0 0
      %1019 = vmatprep.subr.bf16.mxu0 0
      %1020 = vmatpush1.bf16.msra.mxu0 0
      %1021 = vmatprep.subr.bf16.mxu0 0
      %1022 = vmatpush1.bf16.msra.mxu0 0
      %1023 = vmatprep.subr.bf16.mxu0 0
      %1024 = vmatpush1.bf16.msra.mxu0 0
      %1025 = vmatprep.subr.bf16.mxu0 0
      %1026 = vmatpush1.bf16.msra.mxu0 0
      %1027 = vmatprep.subr.bf16.mxu0 0
      %1028 = vmatpush1.bf16.msra.mxu0 0
      %1029 = vmatprep.subr.bf16.mxu0 0
      %1030 = vmatpush1.bf16.msra.mxu0 0
      %1031 = vmatprep.subr.bf16.mxu0 0
      %1032 = vmatpush1.bf16.msra.mxu0 0
      %1033 = vmatprep.subr.bf16.mxu0 0
      %1034 = vmatpush1.bf16.msra.mxu0 0
      %1035 = vmatprep.subr.bf16.mxu0 0
      %1036 = vmatpush1.bf16.msra.mxu0 0
      %1037 = vmatprep.subr.bf16.mxu0 0
      %1038 = vmatpush1.bf16.msra.mxu0 0
      %1039 = vmatprep.subr.bf16.mxu0 0
      %1040 = vmatpush1.bf16.msra.mxu0 0
      %1041 = vmatprep.subr.bf16.mxu0 0
      %1042 = vmatpush1.bf16.msra.mxu0 0
      %1043 = vmatprep.subr.bf16.mxu0 0
      %1044 = vmatpush1.bf16.msra.mxu0 0
      %1045 = vmatprep.mubr.bf16.mxu0 0
      %1046 = vmatmul.mubr.bf16.gmra.mrb[0].mxu0 %v1008
      %v1047 = vpop.f32.mrb[0].mxu0
      %v1048 = vadd.f32 0.0, %v1047
      %v1049 = vpop.f32.mrb[0].mxu0
      %v1050 = vpop.f32.mrb[0].mxu0
      %v1051 = vadd.f32 0.0, %v1050
      %v1052 = vpop.f32.mrb[0].mxu0
      %1053 = vdwg.mxu0
      %1056 = vrot.lane.b32.xlu0 %v1048, 8
      %v1057 = vpop.permute.xlu0 %1056
      %1058 = vrot.lane.b32.xlu0 %v1051, 8
      %v1059 = vpop.permute.xlu0 %1058
      %vm1062 = vcmask 130112
      %1063 = vst.msk [vmem:[#allocation2] sm:$0xff] %vm1062, %v1057
      %vm1064 = vcmask 123968
      %1065 = vst.msk [vmem:[#allocation2 + $0x8] sm:$0x3] %vm1064, %v1059
      %1066 = vrot.lane.b32.xlu0 %v801, 112
      %v1067 = vpop.permute.xlu0 %1066
      %1068 = vrot.lane.b32.xlu0 %v801, 80
      %v1069 = vpop.permute.xlu0 %1068
      %v1071 = vsel %vm805, %v1067, 0
      %v1074 = vsel %vm805, %v1069, 0
      %1076 = vmatprep.subr.bf16.mxu0 0
      %1077 = vmatpush1.bf16.xpose.msra.mxu0 %v1074
      %1078 = vmatprep.subr.bf16.mxu0 0
      %1079 = vmatpush1.bf16.xpose.msra.mxu0 0
      %1080 = vmatprep.subr.bf16.mxu0 0
      %1081 = vmatpush1.bf16.xpose.msra.mxu0 0
      %1082 = vmatprep.subr.bf16.mxu0 0
      %1083 = vmatpush1.bf16.xpose.msra.mxu0 0
      %1084 = vmatprep.subr.bf16.mxu0 0
      %1085 = vmatpush1.bf16.xpose.msra.mxu0 0
      %1086 = vmatprep.subr.bf16.mxu0 0
      %1087 = vmatpush1.bf16.xpose.msra.mxu0 0
      %1088 = vmatprep.subr.bf16.mxu0 0
      %1089 = vmatpush1.bf16.xpose.msra.mxu0 0
      %1090 = vmatprep.subr.bf16.mxu0 0
      %1091 = vmatpush1.bf16.xpose.msra.mxu0 0
      %1092 = vmatprep.subr.bf16.mxu0 0
      %1093 = vmatpush1.bf16.xpose.msra.mxu0 0
      %1094 = vmatprep.subr.bf16.mxu0 0
      %1095 = vmatpush1.bf16.xpose.msra.mxu0 0
      %1096 = vmatprep.subr.bf16.mxu0 0
      %1097 = vmatpush1.bf16.xpose.msra.mxu0 0
      %1098 = vmatprep.subr.bf16.mxu0 0
      %1099 = vmatpush1.bf16.xpose.msra.mxu0 0
      %1100 = vmatprep.subr.bf16.mxu0 0
      %1101 = vmatpush1.bf16.xpose.msra.mxu0 0
      %1102 = vmatprep.subr.bf16.mxu0 0
      %1103 = vmatpush1.bf16.xpose.msra.mxu0 0
      %1104 = vmatprep.subr.bf16.mxu0 0
      %1105 = vmatpush1.bf16.xpose.msra.mxu0 0
      %1106 = vmatprep.subr.bf16.mxu0 0
      %1107 = vmatpush1.bf16.xpose.msra.mxu0 0
      %1108 = vmatprep.mubr.bf16.mxu0 0
      %1109 = vmatmul.mubr.bf16.gmra.mrb[0].mxu0 %v1071
      %v1110 = vpop.f32.mrb[0].mxu0
      %v1111 = vadd.f32 %v496, %v1110
      %v1112 = vpop.f32.mrb[0].mxu0
      %v1113 = vpop.f32.mrb[0].mxu0
      %v1114 = vadd.f32 %v497, %v1113
      %v1115 = vpop.f32.mrb[0].mxu0
      %1116 = vdwg.mxu0
      %v1117 = vsel %vm853, %v1111, -inf
      %1118 = vmax.xlane.f32.xlu0 %v1117
      %v1119 = vpop.xlane.xlu0 %1118
      %v1120 = vsel %vm857, %v1114, -inf
      %1121 = vmax.xlane.f32.xlu0 %v1120
      %v1122 = vpop.xlane.xlu0 %1121
      %v1123 = vsub.f32 %v1111, %v1119
      %v1124 = vsub.f32 %v1114, %v1122
      %v1125 = vmul.f32 %v1123, 1.442695
      %v1126 = vpow.pop %v1125
      %v1127 = vmul.f32 %v1124, 1.442695
      %v1128 = vpow.pop %v1127
      %v1129 = vsel %vm853, %v1126, 0.0
      %1130 = vadd.xlane.f32.xlu0 %v1129
      %v1131 = vpop.xlane.xlu0 %1130
      %v1132 = vsel %vm857, %v1128, 0.0
      %1133 = vadd.xlane.f32.xlu0 %v1132
      %v1134 = vpop.xlane.xlu0 %1133
      %v1135 = vrcp.pop %v1131
      %v1136 = vrcp.pop %v1134
      %v1137 = vmul.f32 %v1126, %v1135
      %v1138 = vmul.f32 %v1128, %v1136
      %v1139 = vpack.c.bf16 %v1138, %v1137
      %1140 = vrot.lane.b32.xlu0 %v801, 48
      %v1141 = vpop.permute.xlu0 %1140
      %v1143 = vsel %vm853, %v1139, 0
      %v1146 = vsel %vm883, %v1141, 0
      %1148 = vmatprep.subr.bf16.mxu0 0
      %1149 = vmatpush1.bf16.msra.mxu0 %v1146
      %1150 = vmatprep.subr.bf16.mxu0 0
      %1151 = vmatpush1.bf16.msra.mxu0 0
      %1152 = vmatprep.subr.bf16.mxu0 0
      %1153 = vmatpush1.bf16.msra.mxu0 0
      %1154 = vmatprep.subr.bf16.mxu0 0
      %1155 = vmatpush1.bf16.msra.mxu0 0
      %1156 = vmatprep.subr.bf16.mxu0 0
      %1157 = vmatpush1.bf16.msra.mxu0 0
      %1158 = vmatprep.subr.bf16.mxu0 0
      %1159 = vmatpush1.bf16.msra.mxu0 0
      %1160 = vmatprep.subr.bf16.mxu0 0
      %1161 = vmatpush1.bf16.msra.mxu0 0
      %1162 = vmatprep.subr.bf16.mxu0 0
      %1163 = vmatpush1.bf16.msra.mxu0 0
      %1164 = vmatprep.subr.bf16.mxu0 0
      %1165 = vmatpush1.bf16.msra.mxu0 0
      %1166 = vmatprep.subr.bf16.mxu0 0
      %1167 = vmatpush1.bf16.msra.mxu0 0
      %1168 = vmatprep.subr.bf16.mxu0 0
      %1169 = vmatpush1.bf16.msra.mxu0 0
      %1170 = vmatprep.subr.bf16.mxu0 0
      %1171 = vmatpush1.bf16.msra.mxu0 0
      %1172 = vmatprep.subr.bf16.mxu0 0
      %1173 = vmatpush1.bf16.msra.mxu0 0
      %1174 = vmatprep.subr.bf16.mxu0 0
      %1175 = vmatpush1.bf16.msra.mxu0 0
      %1176 = vmatprep.subr.bf16.mxu0 0
      %1177 = vmatpush1.bf16.msra.mxu0 0
      %1178 = vmatprep.subr.bf16.mxu0 0
      %1179 = vmatpush1.bf16.msra.mxu0 0
      %1180 = vmatprep.mubr.bf16.mxu0 0
      %1181 = vmatmul.mubr.bf16.gmra.mrb[0].mxu0 %v1143
      %v1182 = vpop.f32.mrb[0].mxu0
      %v1183 = vadd.f32 0.0, %v1182
      %v1184 = vpop.f32.mrb[0].mxu0
      %v1185 = vpop.f32.mrb[0].mxu0
      %v1186 = vadd.f32 0.0, %v1185
      %v1187 = vpop.f32.mrb[0].mxu0
      %1188 = vdwg.mxu0
      %1191 = vrot.lane.b32.xlu0 %v1183, 16
      %v1192 = vpop.permute.xlu0 %1191
      %1193 = vrot.lane.b32.xlu0 %v1186, 16
      %v1194 = vpop.permute.xlu0 %1193
      %vm1197 = vcmask 195712
      %1198 = vst.msk [vmem:[#allocation2] sm:$0xff] %vm1197, %v1192
      %vm1199 = vcmask 189568
      %1200 = vst.msk [vmem:[#allocation2 + $0x8] sm:$0x3] %vm1199, %v1194
      %1201 = vrot.lane.b32.xlu0 %v801, 104
      %v1202 = vpop.permute.xlu0 %1201
      %1203 = vrot.lane.b32.xlu0 %v801, 72
      %v1204 = vpop.permute.xlu0 %1203
      %v1206 = vsel %vm805, %v1202, 0
      %v1209 = vsel %vm805, %v1204, 0
      %1211 = vmatprep.subr.bf16.mxu0 0
      %1212 = vmatpush1.bf16.xpose.msra.mxu0 %v1209
      %1213 = vmatprep.subr.bf16.mxu0 0
      %1214 = vmatpush1.bf16.xpose.msra.mxu0 0
      %1215 = vmatprep.subr.bf16.mxu0 0
      %1216 = vmatpush1.bf16.xpose.msra.mxu0 0
      %1217 = vmatprep.subr.bf16.mxu0 0
      %1218 = vmatpush1.bf16.xpose.msra.mxu0 0
      %1219 = vmatprep.subr.bf16.mxu0 0
      %1220 = vmatpush1.bf16.xpose.msra.mxu0 0
      %1221 = vmatprep.subr.bf16.mxu0 0
      %1222 = vmatpush1.bf16.xpose.msra.mxu0 0
      %1223 = vmatprep.subr.bf16.mxu0 0
      %1224 = vmatpush1.bf16.xpose.msra.mxu0 0
      %1225 = vmatprep.subr.bf16.mxu0 0
      %1226 = vmatpush1.bf16.xpose.msra.mxu0 0
      %1227 = vmatprep.subr.bf16.mxu0 0
      %1228 = vmatpush1.bf16.xpose.msra.mxu0 0
      %1229 = vmatprep.subr.bf16.mxu0 0
      %1230 = vmatpush1.bf16.xpose.msra.mxu0 0
      %1231 = vmatprep.subr.bf16.mxu0 0
      %1232 = vmatpush1.bf16.xpose.msra.mxu0 0
      %1233 = vmatprep.subr.bf16.mxu0 0
      %1234 = vmatpush1.bf16.xpose.msra.mxu0 0
      %1235 = vmatprep.subr.bf16.mxu0 0
      %1236 = vmatpush1.bf16.xpose.msra.mxu0 0
      %1237 = vmatprep.subr.bf16.mxu0 0
      %1238 = vmatpush1.bf16.xpose.msra.mxu0 0
      %1239 = vmatprep.subr.bf16.mxu0 0
      %1240 = vmatpush1.bf16.xpose.msra.mxu0 0
      %1241 = vmatprep.subr.bf16.mxu0 0
      %1242 = vmatpush1.bf16.xpose.msra.mxu0 0
      %1243 = vmatprep.mubr.bf16.mxu0 0
      %1244 = vmatmul.mubr.bf16.gmra.mrb[0].mxu0 %v1206
      %v1245 = vpop.f32.mrb[0].mxu0
      %v1246 = vadd.f32 %v496, %v1245
      %v1247 = vpop.f32.mrb[0].mxu0
      %v1248 = vpop.f32.mrb[0].mxu0
      %v1249 = vadd.f32 %v497, %v1248
      %v1250 = vpop.f32.mrb[0].mxu0
      %1251 = vdwg.mxu0
      %v1252 = vsel %vm853, %v1246, -inf
      %1253 = vmax.xlane.f32.xlu0 %v1252
      %v1254 = vpop.xlane.xlu0 %1253
      %v1255 = vsel %vm857, %v1249, -inf
      %1256 = vmax.xlane.f32.xlu0 %v1255
      %v1257 = vpop.xlane.xlu0 %1256
      %v1258 = vsub.f32 %v1246, %v1254
      %v1259 = vsub.f32 %v1249, %v1257
      %v1260 = vmul.f32 %v1258, 1.442695
      %v1261 = vpow.pop %v1260
      %v1262 = vmul.f32 %v1259, 1.442695
      %v1263 = vpow.pop %v1262
      %v1264 = vsel %vm853, %v1261, 0.0
      %1265 = vadd.xlane.f32.xlu0 %v1264
      %v1266 = vpop.xlane.xlu0 %1265
      %v1267 = vsel %vm857, %v1263, 0.0
      %1268 = vadd.xlane.f32.xlu0 %v1267
      %v1269 = vpop.xlane.xlu0 %1268
      %v1270 = vrcp.pop %v1266
      %v1271 = vrcp.pop %v1269
      %v1272 = vmul.f32 %v1261, %v1270
      %v1273 = vmul.f32 %v1263, %v1271
      %v1274 = vpack.c.bf16 %v1273, %v1272
      %1275 = vrot.lane.b32.xlu0 %v801, 40
      %v1276 = vpop.permute.xlu0 %1275
      %v1278 = vsel %vm853, %v1274, 0
      %v1281 = vsel %vm883, %v1276, 0
      %1283 = vmatprep.subr.bf16.mxu0 0
      %1284 = vmatpush1.bf16.msra.mxu0 %v1281
      %1285 = vmatprep.subr.bf16.mxu0 0
      %1286 = vmatpush1.bf16.msra.mxu0 0
      %1287 = vmatprep.subr.bf16.mxu0 0
      %1288 = vmatpush1.bf16.msra.mxu0 0
      %1289 = vmatprep.subr.bf16.mxu0 0
      %1290 = vmatpush1.bf16.msra.mxu0 0
      %1291 = vmatprep.subr.bf16.mxu0 0
      %1292 = vmatpush1.bf16.msra.mxu0 0
      %1293 = vmatprep.subr.bf16.mxu0 0
      %1294 = vmatpush1.bf16.msra.mxu0 0
      %1295 = vmatprep.subr.bf16.mxu0 0
      %1296 = vmatpush1.bf16.msra.mxu0 0
      %1297 = vmatprep.subr.bf16.mxu0 0
      %1298 = vmatpush1.bf16.msra.mxu0 0
      %1299 = vmatprep.subr.bf16.mxu0 0
      %1300 = vmatpush1.bf16.msra.mxu0 0
      %1301 = vmatprep.subr.bf16.mxu0 0
      %1302 = vmatpush1.bf16.msra.mxu0 0
      %1303 = vmatprep.subr.bf16.mxu0 0
      %1304 = vmatpush1.bf16.msra.mxu0 0
      %1305 = vmatprep.subr.bf16.mxu0 0
      %1306 = vmatpush1.bf16.msra.mxu0 0
      %1307 = vmatprep.subr.bf16.mxu0 0
      %1308 = vmatpush1.bf16.msra.mxu0 0
      %1309 = vmatprep.subr.bf16.mxu0 0
      %1310 = vmatpush1.bf16.msra.mxu0 0
      %1311 = vmatprep.subr.bf16.mxu0 0
      %1312 = vmatpush1.bf16.msra.mxu0 0
      %1313 = vmatprep.subr.bf16.mxu0 0
      %1314 = vmatpush1.bf16.msra.mxu0 0
      %1315 = vmatprep.mubr.bf16.mxu0 0
      %1316 = vmatmul.mubr.bf16.gmra.mrb[0].mxu0 %v1278
      %v1317 = vpop.f32.mrb[0].mxu0
      %v1318 = vadd.f32 0.0, %v1317
      %v1319 = vpop.f32.mrb[0].mxu0
      %v1320 = vpop.f32.mrb[0].mxu0
      %v1321 = vadd.f32 0.0, %v1320
      %v1322 = vpop.f32.mrb[0].mxu0
      %1323 = vdwg.mxu0
      %1326 = vrot.lane.b32.xlu0 %v1318, 24
      %v1327 = vpop.permute.xlu0 %1326
      %1328 = vrot.lane.b32.xlu0 %v1321, 24
      %v1329 = vpop.permute.xlu0 %1328
      %vm1332 = vcmask 261312
      %1333 = vst.msk [vmem:[#allocation2] sm:$0xff] %vm1332, %v1327
      %vm1334 = vcmask 255168
      %1335 = vst.msk [vmem:[#allocation2 + $0x8] sm:$0x3] %vm1334, %v1329
      %v1336 = vld [vmem:[#allocation2] sm:$0xff]
      %v1337 = vld [vmem:[#allocation2 + $0x8] sm:$0x3]
      %v1338 = vld [vmem:[%s8] sm:$0xf]
      %v1339 = vld [vmem:[%s8 + $0x4] sm:$0xf]
      %v1340 = vld [vmem:[%s8 + $0x8] sm:$0xf]
      %v1341 = vld [vmem:[%s8 + $0xc] sm:$0xf]
      %v1342 = vpack.c.bf16 %v1337, %v1336
      %v1347 = vunpack.c.l.b16 %v1338
      %v1348 = vunpack.c.l.b16 %v1339
      %v1349 = vunpack.c.l.b16 %v1340
      %v1350 = vunpack.c.l.b16 %v1341
      %v1351 = vpack.c.b16 %v1348, %v1347
      %v1352 = vpack.c.b16 %v1350, %v1349
      %v1356 = vsel %vm653, %v1342, 0
      %1358 = vmatprep.subr.bf16.mxu0 0
      %1359 = vmatpush1.bf16.msra.mxu0 %v1351
      %1360 = vmatprep.subr.bf16.mxu0 0
      %1361 = vmatpush1.bf16.msra.mxu0 %v1352
      %1362 = vmatprep.subr.bf16.mxu0 0
      %1363 = vmatpush1.bf16.msra.mxu0 0
      %1364 = vmatprep.subr.bf16.mxu0 0
      %1365 = vmatpush1.bf16.msra.mxu0 0
      %1366 = vmatprep.subr.bf16.mxu0 0
      %1367 = vmatpush1.bf16.msra.mxu0 0
      %1368 = vmatprep.subr.bf16.mxu0 0
      %1369 = vmatpush1.bf16.msra.mxu0 0
      %1370 = vmatprep.subr.bf16.mxu0 0
      %1371 = vmatpush1.bf16.msra.mxu0 0
      %1372 = vmatprep.subr.bf16.mxu0 0
      %1373 = vmatpush1.bf16.msra.mxu0 0
      %1374 = vmatprep.subr.bf16.mxu0 0
      %1375 = vmatpush1.bf16.msra.mxu0 0
      %1376 = vmatprep.subr.bf16.mxu0 0
      %1377 = vmatpush1.bf16.msra.mxu0 0
      %1378 = vmatprep.subr.bf16.mxu0 0
      %1379 = vmatpush1.bf16.msra.mxu0 0
      %1380 = vmatprep.subr.bf16.mxu0 0
      %1381 = vmatpush1.bf16.msra.mxu0 0
      %1382 = vmatprep.subr.bf16.mxu0 0
      %1383 = vmatpush1.bf16.msra.mxu0 0
      %1384 = vmatprep.subr.bf16.mxu0 0
      %1385 = vmatpush1.bf16.msra.mxu0 0
      %1386 = vmatprep.subr.bf16.mxu0 0
      %1387 = vmatpush1.bf16.msra.mxu0 0
      %1388 = vmatprep.subr.bf16.mxu0 0
      %1389 = vmatpush1.bf16.msra.mxu0 0
      %1390 = vmatprep.mubr.bf16.mxu0 0
      %1391 = vmatmul.mubr.bf16.gmra.mrb[0].mxu0 %v1356
      %v1392 = vpop.f32.mrb[0].mxu0
      %v1393 = vadd.f32 0.0, %v1392
      %v1394 = vpop.f32.mrb[0].mxu0
      %v1395 = vpop.f32.mrb[0].mxu0
      %v1396 = vadd.f32 0.0, %v1395
      %v1397 = vpop.f32.mrb[0].mxu0
      %1398 = vdwg.mxu0
      %v1399 = vadd.f32 %v692, %v1393
      %v1400 = vadd.f32 %v693, %v1396
      %v1401 = vld [vmem:[%s9] sm:$0x1]
      %v1403 = vlaneseq
      %v1404 = vshrl.u32 %v1403, 7
      %v1405 = vsub.s32 0, %v1404
      %v1406 = vrot.slane %v1401, %v1405
      %v1408 = vadd.f32 %v1399, %v1406
      %v1409 = vadd.f32 %v1400, %v1406
      %v1410 = vld [vmem:[%s10] sm:$0x3]
      %v1411 = vsel %vm653, %v1408, 0.0
      %1412 = vadd.xlane.f32.xlu0 %v1411
      %v1413 = vpop.xlane.xlu0 %1412
      %v1414 = vsel %vm657, %v1409, 0.0
      %1415 = vadd.xlane.f32.xlu0 %v1414
      %v1416 = vpop.xlane.xlu0 %1415
      %v1417 = vmul.f32 %v1413, %v661
      %v1418 = vmul.f32 %v1416, %v661
      %v1419 = vsub.f32 %v1408, %v1417
      %v1420 = vsub.f32 %v1409, %v1418
      %v1421 = vmul.f32 %v1419, %v1419
      %v1422 = vmul.f32 %v1420, %v1420
      %v1423 = vsel %vm653, %v1421, 0.0
      %1424 = vadd.xlane.f32.xlu0 %v1423
      %v1425 = vpop.xlane.xlu0 %1424
      %v1426 = vsel %vm657, %v1422, 0.0
      %1427 = vadd.xlane.f32.xlu0 %v1426
      %v1428 = vpop.xlane.xlu0 %1427
      %v1429 = vmul.f32 %v1425, %v661
      %v1430 = vmul.f32 %v1428, %v661
      %v1431 = vadd.f32 %v1429, 1e-05
      %v1432 = vadd.f32 %v1430, 1e-05
      %v1433 = vrsqrt.pop %v1431
      %v1434 = vrsqrt.pop %v1432
      %v1435 = vmul.f32 %v1419, %v1433
      %v1436 = vmul.f32 %v1420, %v1434
      %v1437 = vlaneseq
      %v1438 = vshrl.u32 %v1437, 7
      %v1439 = vsub.s32 0, %v1438
      %v1440 = vrot.slane %v1410, %v1439
      %v1441 = vmul.f32 %v1435, %v1440
      %v1442 = vmul.f32 %v1436, %v1440
      %v1443 = vlaneseq
      %v1444 = vshrl.u32 %v1443, 7
      %v1445 = vsub.s32 1, %v1444
      %v1446 = vrot.slane %v1410, %v1445
      %v1447 = vadd.f32 %v1441, %v1446
      %v1448 = vadd.f32 %v1442, %v1446
      %v1449 = vld [vmem:[%s11] sm:$0xf]
      %v1450 = vld [vmem:[%s11 + $0x4] sm:$0xf]
      %v1451 = vld [vmem:[%s11 + $0x8] sm:$0xf]
      %v1452 = vld [vmem:[%s11 + $0xc] sm:$0xf]
      %v1453 = vpack.c.bf16 %v1448, %v1447
      %v1454 = vld [vmem:[%s12] sm:$0x1]
      %v1456 = vlaneseq
      %v1457 = vshrl.u32 %v1456, 7
      %v1458 = vsub.s32 0, %v1457
      %v1459 = vrot.slane %v1454, %v1458
      %v1465 = vunpack.c.l.b16 %v1449
      %v1466 = vunpack.c.l.b16 %v1450
      %v1467 = vunpack.c.l.b16 %v1451
      %v1468 = vunpack.c.l.b16 %v1452
      %v1469 = vpack.c.b16 %v1466, %v1465
      %v1470 = vpack.c.b16 %v1468, %v1467
      %v1474 = vsel %vm653, %v1453, 0
      %1476 = vmatprep.subr.bf16.mxu0 0
      %1477 = vmatpush1.bf16.msra.mxu0 %v1469
      %1478 = vmatprep.subr.bf16.mxu0 0
      %1479 = vmatpush1.bf16.msra.mxu0 %v1470
      %1480 = vmatprep.subr.bf16.mxu0 0
      %1481 = vmatpush1.bf16.msra.mxu0 0
      %1482 = vmatprep.subr.bf16.mxu0 0
      %1483 = vmatpush1.bf16.msra.mxu0 0
      %1484 = vmatprep.subr.bf16.mxu0 0
      %1485 = vmatpush1.bf16.msra.mxu0 0
      %1486 = vmatprep.subr.bf16.mxu0 0
      %1487 = vmatpush1.bf16.msra.mxu0 0
      %1488 = vmatprep.subr.bf16.mxu0 0
      %1489 = vmatpush1.bf16.msra.mxu0 0
      %1490 = vmatprep.subr.bf16.mxu0 0
      %1491 = vmatpush1.bf16.msra.mxu0 0
      %1492 = vmatprep.subr.bf16.mxu0 0
      %1493 = vmatpush1.bf16.msra.mxu0 0
      %1494 = vmatprep.subr.bf16.mxu0 0
      %1495 = vmatpush1.bf16.msra.mxu0 0
      %1496 = vmatprep.subr.bf16.mxu0 0
      %1497 = vmatpush1.bf16.msra.mxu0 0
      %1498 = vmatprep.subr.bf16.mxu0 0
      %1499 = vmatpush1.bf16.msra.mxu0 0
      %1500 = vmatprep.subr.bf16.mxu0 0
      %1501 = vmatpush1.bf16.msra.mxu0 0
      %1502 = vmatprep.subr.bf16.mxu0 0
      %1503 = vmatpush1.bf16.msra.mxu0 0
      %1504 = vmatprep.subr.bf16.mxu0 0
      %1505 = vmatpush1.bf16.msra.mxu0 0
      %1506 = vmatprep.subr.bf16.mxu0 0
      %1507 = vmatpush1.bf16.msra.mxu0 0
      %1508 = vmatprep.mubr.bf16.mxu0 0
      %1509 = vmatmul.mubr.bf16.gmra.mrb[0].mxu0 %v1474
      %v1510 = vpop.f32.mrb[0].mxu0
      %v1511 = vadd.f32 %v1459, %v1510
      %v1512 = vpop.f32.mrb[0].mxu0
      %v1513 = vpop.f32.mrb[0].mxu0
      %v1514 = vadd.f32 %v1459, %v1513
      %v1515 = vpop.f32.mrb[0].mxu0
      %1516 = vdwg.mxu0
      %v1517 = vmul.f32 %v1511, 1.702
      %v1518 = vmul.f32 %v1514, 1.702
      %v1519 = vxor.u32 %v1517, 2147483648
      %v1520 = vxor.u32 %v1518, 2147483648
      %v1521 = vmul.f32 %v1519, 1.442695
      %v1522 = vpow.pop %v1521
      %v1523 = vmul.f32 %v1520, 1.442695
      %v1524 = vpow.pop %v1523
      %v1525 = vadd.f32 %v1522, 1.0
      %v1526 = vadd.f32 %v1524, 1.0
      %v1527 = vrcp.pop %v1525
      %v1528 = vmul.f32 1.0, %v1527
      %v1529 = vrcp.pop %v1526
      %v1530 = vmul.f32 1.0, %v1529
      %v1531 = vmul.f32 %v1511, %v1528
      %v1532 = vmul.f32 %v1514, %v1530
      %v1533 = vld [vmem:[%s13] sm:$0xf]
      %v1534 = vld [vmem:[%s13 + $0x4] sm:$0xf]
      %v1535 = vld [vmem:[%s13 + $0x8] sm:$0xf]
      %v1536 = vld [vmem:[%s13 + $0xc] sm:$0xf]
      %v1537 = vld [vmem:[%s13 + $0x10] sm:$0xf]
      %v1538 = vld [vmem:[%s13 + $0x14] sm:$0xf]
      %v1539 = vld [vmem:[%s13 + $0x18] sm:$0xf]
      %v1540 = vld [vmem:[%s13 + $0x1c] sm:$0xf]
      %v1541 = vpack.c.bf16 %v1532, %v1531
      %v1542 = vld [vmem:[%s14] sm:$0x1]
      %v1544 = vlaneseq
      %v1545 = vshrl.u32 %v1544, 7
      %v1546 = vsub.s32 0, %v1545
      %v1547 = vrot.slane %v1542, %v1546
      %v1557 = vunpack.c.l.b16 %v1533
      %v1558 = vunpack.c.l.b16 %v1534
      %v1559 = vunpack.c.l.b16 %v1535
      %v1560 = vunpack.c.l.b16 %v1536
      %v1561 = vunpack.c.l.b16 %v1537
      %v1562 = vunpack.c.l.b16 %v1538
      %v1563 = vunpack.c.l.b16 %v1539
      %v1564 = vunpack.c.l.b16 %v1540
      %v1565 = vpack.c.b16 %v1558, %v1557
      %v1566 = vpack.c.b16 %v1560, %v1559
      %v1567 = vpack.c.b16 %v1562, %v1561
      %v1568 = vpack.c.b16 %v1564, %v1563
      %v1574 = vsel %vm607, %v1541, 0
      %1576 = vmatprep.subr.bf16.mxu0 0
      %1577 = vmatpush1.bf16.msra.mxu0 %v1565
      %1578 = vmatprep.subr.bf16.mxu0 0
      %1579 = vmatpush1.bf16.msra.mxu0 %v1566
      %1580 = vmatprep.subr.bf16.mxu0 0
      %1581 = vmatpush1.bf16.msra.mxu0 %v1567
      %1582 = vmatprep.subr.bf16.mxu0 0
      %1583 = vmatpush1.bf16.msra.mxu0 %v1568
      %1584 = vmatprep.subr.bf16.mxu0 0
      %1585 = vmatpush1.bf16.msra.mxu0 0
      %1586 = vmatprep.subr.bf16.mxu0 0
      %1587 = vmatpush1.bf16.msra.mxu0 0
      %1588 = vmatprep.subr.bf16.mxu0 0
      %1589 = vmatpush1.bf16.msra.mxu0 0
      %1590 = vmatprep.subr.bf16.mxu0 0
      %1591 = vmatpush1.bf16.msra.mxu0 0
      %1592 = vmatprep.subr.bf16.mxu0 0
      %1593 = vmatpush1.bf16.msra.mxu0 0
      %1594 = vmatprep.subr.bf16.mxu0 0
      %1595 = vmatpush1.bf16.msra.mxu0 0
      %1596 = vmatprep.subr.bf16.mxu0 0
      %1597 = vmatpush1.bf16.msra.mxu0 0
      %1598 = vmatprep.subr.bf16.mxu0 0
      %1599 = vmatpush1.bf16.msra.mxu0 0
      %1600 = vmatprep.subr.bf16.mxu0 0
      %1601 = vmatpush1.bf16.msra.mxu0 0
      %1602 = vmatprep.subr.bf16.mxu0 0
      %1603 = vmatpush1.bf16.msra.mxu0 0
      %1604 = vmatprep.subr.bf16.mxu0 0
      %1605 = vmatpush1.bf16.msra.mxu0 0
      %1606 = vmatprep.subr.bf16.mxu0 0
      %1607 = vmatpush1.bf16.msra.mxu0 0
      %1608 = vmatprep.mubr.bf16.mxu0 0
      %1609 = vmatmul.mubr.bf16.gmra.mrb[0].mxu0 %v1574
      %v1610 = vpop.f32.mrb[0].mxu0
      %v1611 = vadd.f32 %v1547, %v1610
      %v1612 = vpop.f32.mrb[0].mxu0
      %v1613 = vpop.f32.mrb[0].mxu0
      %v1614 = vadd.f32 %v1547, %v1613
      %v1615 = vpop.f32.mrb[0].mxu0
      %1616 = vdwg.mxu0
      %v1617 = vadd.f32 %v1408, %v1611
      %v1618 = vadd.f32 %v1409, %v1614
      %s1619 = scalar_lea.vmem %s5, 2
      %v1620 = vld [vmem:[%s1619] sm:$0x3]
      %v1621 = vsel %vm653, %v1617, 0.0
      %1622 = vadd.xlane.f32.xlu0 %v1621
      %v1623 = vpop.xlane.xlu0 %1622
      %v1624 = vsel %vm657, %v1618, 0.0
      %1625 = vadd.xlane.f32.xlu0 %v1624
      %v1626 = vpop.xlane.xlu0 %1625
      %v1627 = vmul.f32 %v1623, %v661
      %v1628 = vmul.f32 %v1626, %v661
      %v1629 = vsub.f32 %v1617, %v1627
      %v1630 = vsub.f32 %v1618, %v1628
      %v1631 = vmul.f32 %v1629, %v1629
      %v1632 = vmul.f32 %v1630, %v1630
      %v1633 = vsel %vm653, %v1631, 0.0
      %1634 = vadd.xlane.f32.xlu0 %v1633
      %v1635 = vpop.xlane.xlu0 %1634
      %v1636 = vsel %vm657, %v1632, 0.0
      %1637 = vadd.xlane.f32.xlu0 %v1636
      %v1638 = vpop.xlane.xlu0 %1637
      %v1639 = vmul.f32 %v1635, %v661
      %v1640 = vmul.f32 %v1638, %v661
      %v1641 = vadd.f32 %v1639, 1e-05
      %v1642 = vadd.f32 %v1640, 1e-05
      %v1643 = vrsqrt.pop %v1641
      %v1644 = vrsqrt.pop %v1642
      %v1645 = vmul.f32 %v1629, %v1643
      %v1646 = vmul.f32 %v1630, %v1644
      %v1647 = vlaneseq
      %v1648 = vshrl.u32 %v1647, 7
      %v1649 = vsub.s32 0, %v1648
      %v1650 = vrot.slane %v1620, %v1649
      %v1651 = vmul.f32 %v1645, %v1650
      %v1652 = vmul.f32 %v1646, %v1650
      %v1653 = vlaneseq
      %v1654 = vshrl.u32 %v1653, 7
      %v1655 = vsub.s32 1, %v1654
      %v1656 = vrot.slane %v1620, %v1655
      %v1657 = vadd.f32 %v1651, %v1656
      %v1658 = vadd.f32 %v1652, %v1656
      %s1659 = scalar_lea.vmem %s6, 16
      %v1660 = vld [vmem:[%s1659] sm:$0xf]
      %v1661 = vld [vmem:[%s1659 + $0x4] sm:$0xf]
      %v1662 = vld [vmem:[%s1659 + $0x8] sm:$0xf]
      %v1663 = vld [vmem:[%s1659 + $0xc] sm:$0xf]
      %v1664 = vpack.c.bf16 %v1658, %v1657
      %s1665 = scalar_lea.vmem %s7, 1
      %v1666 = vld [vmem:[%s1665] sm:$0x1]
      %v1668 = vlaneseq
      %v1669 = vshrl.u32 %v1668, 7
      %v1670 = vsub.s32 0, %v1669
      %v1671 = vrot.slane %v1666, %v1670
      %v1677 = vunpack.c.l.b16 %v1660
      %v1678 = vunpack.c.l.b16 %v1661
      %v1679 = vunpack.c.l.b16 %v1662
      %v1680 = vunpack.c.l.b16 %v1663
      %v1681 = vpack.c.b16 %v1678, %v1677
      %v1682 = vpack.c.b16 %v1680, %v1679
      %v1686 = vsel %vm653, %v1664, 0
      %1688 = vmatprep.subr.bf16.mxu0 0
      %1689 = vmatpush1.bf16.msra.mxu0 %v1681
      %1690 = vmatprep.subr.bf16.mxu0 0
      %1691 = vmatpush1.bf16.msra.mxu0 %v1682
      %1692 = vmatprep.subr.bf16.mxu0 0
      %1693 = vmatpush1.bf16.msra.mxu0 0
      %1694 = vmatprep.subr.bf16.mxu0 0
      %1695 = vmatpush1.bf16.msra.mxu0 0
      %1696 = vmatprep.subr.bf16.mxu0 0
      %1697 = vmatpush1.bf16.msra.mxu0 0
      %1698 = vmatprep.subr.bf16.mxu0 0
      %1699 = vmatpush1.bf16.msra.mxu0 0
      %1700 = vmatprep.subr.bf16.mxu0 0
      %1701 = vmatpush1.bf16.msra.mxu0 0
      %1702 = vmatprep.subr.bf16.mxu0 0
      %1703 = vmatpush1.bf16.msra.mxu0 0
      %1704 = vmatprep.subr.bf16.mxu0 0
      %1705 = vmatpush1.bf16.msra.mxu0 0
      %1706 = vmatprep.subr.bf16.mxu0 0
      %1707 = vmatpush1.bf16.msra.mxu0 0
      %1708 = vmatprep.subr.bf16.mxu0 0
      %1709 = vmatpush1.bf16.msra.mxu0 0
      %1710 = vmatprep.subr.bf16.mxu0 0
      %1711 = vmatpush1.bf16.msra.mxu0 0
      %1712 = vmatprep.subr.bf16.mxu0 0
      %1713 = vmatpush1.bf16.msra.mxu0 0
      %1714 = vmatprep.subr.bf16.mxu0 0
      %1715 = vmatpush1.bf16.msra.mxu0 0
      %1716 = vmatprep.subr.bf16.mxu0 0
      %1717 = vmatpush1.bf16.msra.mxu0 0
      %1718 = vmatprep.subr.bf16.mxu0 0
      %1719 = vmatpush1.bf16.msra.mxu0 0
      %1720 = vmatprep.mubr.bf16.mxu0 0
      %1721 = vmatmul.mubr.bf16.gmra.mrb[0].mxu0 %v1686
      %v1722 = vpop.f32.mrb[0].mxu0
      %v1723 = vadd.f32 %v1671, %v1722
      %v1724 = vpop.f32.mrb[0].mxu0
      %v1725 = vpop.f32.mrb[0].mxu0
      %v1726 = vadd.f32 %v1671, %v1725
      %v1727 = vpop.f32.mrb[0].mxu0
      %1728 = vdwg.mxu0
      %v1729 = vpack.c.bf16 %v1726, %v1723
      %1731 = vrot.lane.b32.xlu0 %v1729, 96
      %v1732 = vpop.permute.xlu0 %1731
      %v1734 = vsel %vm805, %v1729, 0
      %v1737 = vsel %vm805, %v1732, 0
      %1739 = vmatprep.subr.bf16.mxu0 0
      %1740 = vmatpush1.bf16.xpose.msra.mxu0 %v1737
      %1741 = vmatprep.subr.bf16.mxu0 0
      %1742 = vmatpush1.bf16.xpose.msra.mxu0 0
      %1743 = vmatprep.subr.bf16.mxu0 0
      %1744 = vmatpush1.bf16.xpose.msra.mxu0 0
      %1745 = vmatprep.subr.bf16.mxu0 0
      %1746 = vmatpush1.bf16.xpose.msra.mxu0 0
      %1747 = vmatprep.subr.bf16.mxu0 0
      %1748 = vmatpush1.bf16.xpose.msra.mxu0 0
      %1749 = vmatprep.subr.bf16.mxu0 0
      %1750 = vmatpush1.bf16.xpose.msra.mxu0 0
      %1751 = vmatprep.subr.bf16.mxu0 0
      %1752 = vmatpush1.bf16.xpose.msra.mxu0 0
      %1753 = vmatprep.subr.bf16.mxu0 0
      %1754 = vmatpush1.bf16.xpose.msra.mxu0 0
      %1755 = vmatprep.subr.bf16.mxu0 0
      %1756 = vmatpush1.bf16.xpose.msra.mxu0 0
      %1757 = vmatprep.subr.bf16.mxu0 0
      %1758 = vmatpush1.bf16.xpose.msra.mxu0 0
      %1759 = vmatprep.subr.bf16.mxu0 0
      %1760 = vmatpush1.bf16.xpose.msra.mxu0 0
      %1761 = vmatprep.subr.bf16.mxu0 0
      %1762 = vmatpush1.bf16.xpose.msra.mxu0 0
      %1763 = vmatprep.subr.bf16.mxu0 0
      %1764 = vmatpush1.bf16.xpose.msra.mxu0 0
      %1765 = vmatprep.subr.bf16.mxu0 0
      %1766 = vmatpush1.bf16.xpose.msra.mxu0 0
      %1767 = vmatprep.subr.bf16.mxu0 0
      %1768 = vmatpush1.bf16.xpose.msra.mxu0 0
      %1769 = vmatprep.subr.bf16.mxu0 0
      %1770 = vmatpush1.bf16.xpose.msra.mxu0 0
      %1771 = vmatprep.mubr.bf16.mxu0 0
      %1772 = vmatmul.mubr.bf16.gmra.mrb[0].mxu0 %v1734
      %v1773 = vpop.f32.mrb[0].mxu0
      %v1774 = vadd.f32 %v496, %v1773
      %v1775 = vpop.f32.mrb[0].mxu0
      %v1776 = vpop.f32.mrb[0].mxu0
      %v1777 = vadd.f32 %v497, %v1776
      %v1778 = vpop.f32.mrb[0].mxu0
      %1779 = vdwg.mxu0
      %v1780 = vsel %vm853, %v1774, -inf
      %1781 = vmax.xlane.f32.xlu0 %v1780
      %v1782 = vpop.xlane.xlu0 %1781
      %v1783 = vsel %vm857, %v1777, -inf
      %1784 = vmax.xlane.f32.xlu0 %v1783
      %v1785 = vpop.xlane.xlu0 %1784
      %v1786 = vsub.f32 %v1774, %v1782
      %v1787 = vsub.f32 %v1777, %v1785
      %v1788 = vmul.f32 %v1786, 1.442695
      %v1789 = vpow.pop %v1788
      %v1790 = vmul.f32 %v1787, 1.442695
      %v1791 = vpow.pop %v1790
      %v1792 = vsel %vm853, %v1789, 0.0
      %1793 = vadd.xlane.f32.xlu0 %v1792
      %v1794 = vpop.xlane.xlu0 %1793
      %v1795 = vsel %vm857, %v1791, 0.0
      %1796 = vadd.xlane.f32.xlu0 %v1795
      %v1797 = vpop.xlane.xlu0 %1796
      %v1798 = vrcp.pop %v1794
      %v1799 = vrcp.pop %v1797
      %v1800 = vmul.f32 %v1789, %v1798
      %v1801 = vmul.f32 %v1791, %v1799
      %v1802 = vpack.c.bf16 %v1801, %v1800
      %1803 = vrot.lane.b32.xlu0 %v1729, 64
      %v1804 = vpop.permute.xlu0 %1803
      %v1806 = vsel %vm853, %v1802, 0
      %v1809 = vsel %vm883, %v1804, 0
      %1811 = vmatprep.subr.bf16.mxu0 0
      %1812 = vmatpush1.bf16.msra.mxu0 %v1809
      %1813 = vmatprep.subr.bf16.mxu0 0
      %1814 = vmatpush1.bf16.msra.mxu0 0
      %1815 = vmatprep.subr.bf16.mxu0 0
      %1816 = vmatpush1.bf16.msra.mxu0 0
      %1817 = vmatprep.subr.bf16.mxu0 0
      %1818 = vmatpush1.bf16.msra.mxu0 0
      %1819 = vmatprep.subr.bf16.mxu0 0
      %1820 = vmatpush1.bf16.msra.mxu0 0
      %1821 = vmatprep.subr.bf16.mxu0 0
      %1822 = vmatpush1.bf16.msra.mxu0 0
      %1823 = vmatprep.subr.bf16.mxu0 0
      %1824 = vmatpush1.bf16.msra.mxu0 0
      %1825 = vmatprep.subr.bf16.mxu0 0
      %1826 = vmatpush1.bf16.msra.mxu0 0
      %1827 = vmatprep.subr.bf16.mxu0 0
      %1828 = vmatpush1.bf16.msra.mxu0 0
      %1829 = vmatprep.subr.bf16.mxu0 0
      %1830 = vmatpush1.bf16.msra.mxu0 0
      %1831 = vmatprep.subr.bf16.mxu0 0
      %1832 = vmatpush1.bf16.msra.mxu0 0
      %1833 = vmatprep.subr.bf16.mxu0 0
      %1834 = vmatpush1.bf16.msra.mxu0 0
      %1835 = vmatprep.subr.bf16.mxu0 0
      %1836 = vmatpush1.bf16.msra.mxu0 0
      %1837 = vmatprep.subr.bf16.mxu0 0
      %1838 = vmatpush1.bf16.msra.mxu0 0
      %1839 = vmatprep.subr.bf16.mxu0 0
      %1840 = vmatpush1.bf16.msra.mxu0 0
      %1841 = vmatprep.subr.bf16.mxu0 0
      %1842 = vmatpush1.bf16.msra.mxu0 0
      %1843 = vmatprep.mubr.bf16.mxu0 0
      %1844 = vmatmul.mubr.bf16.gmra.mrb[0].mxu0 %v1806
      %v1845 = vpop.f32.mrb[0].mxu0
      %v1846 = vadd.f32 0.0, %v1845
      %v1847 = vpop.f32.mrb[0].mxu0
      %v1848 = vpop.f32.mrb[0].mxu0
      %v1849 = vadd.f32 0.0, %v1848
      %v1850 = vpop.f32.mrb[0].mxu0
      %1851 = vdwg.mxu0
      %1852 = vst.msk [vmem:[#allocation2] sm:$0xff] %vm805, %v1846
      %1853 = vst.msk [vmem:[#allocation2 + $0x8] sm:$0x3] %vm929, %v1849
      %1854 = vrot.lane.b32.xlu0 %v1729, 120
      %v1855 = vpop.permute.xlu0 %1854
      %1856 = vrot.lane.b32.xlu0 %v1729, 88
      %v1857 = vpop.permute.xlu0 %1856
      %v1859 = vsel %vm805, %v1855, 0
      %v1862 = vsel %vm805, %v1857, 0
      %1864 = vmatprep.subr.bf16.mxu0 0
      %1865 = vmatpush1.bf16.xpose.msra.mxu0 %v1862
      %1866 = vmatprep.subr.bf16.mxu0 0
      %1867 = vmatpush1.bf16.xpose.msra.mxu0 0
      %1868 = vmatprep.subr.bf16.mxu0 0
      %1869 = vmatpush1.bf16.xpose.msra.mxu0 0
      %1870 = vmatprep.subr.bf16.mxu0 0
      %1871 = vmatpush1.bf16.xpose.msra.mxu0 0
      %1872 = vmatprep.subr.bf16.mxu0 0
      %1873 = vmatpush1.bf16.xpose.msra.mxu0 0
      %1874 = vmatprep.subr.bf16.mxu0 0
      %1875 = vmatpush1.bf16.xpose.msra.mxu0 0
      %1876 = vmatprep.subr.bf16.mxu0 0
      %1877 = vmatpush1.bf16.xpose.msra.mxu0 0
      %1878 = vmatprep.subr.bf16.mxu0 0
      %1879 = vmatpush1.bf16.xpose.msra.mxu0 0
      %1880 = vmatprep.subr.bf16.mxu0 0
      %1881 = vmatpush1.bf16.xpose.msra.mxu0 0
      %1882 = vmatprep.subr.bf16.mxu0 0
      %1883 = vmatpush1.bf16.xpose.msra.mxu0 0
      %1884 = vmatprep.subr.bf16.mxu0 0
      %1885 = vmatpush1.bf16.xpose.msra.mxu0 0
      %1886 = vmatprep.subr.bf16.mxu0 0
      %1887 = vmatpush1.bf16.xpose.msra.mxu0 0
      %1888 = vmatprep.subr.bf16.mxu0 0
      %1889 = vmatpush1.bf16.xpose.msra.mxu0 0
      %1890 = vmatprep.subr.bf16.mxu0 0
      %1891 = vmatpush1.bf16.xpose.msra.mxu0 0
      %1892 = vmatprep.subr.bf16.mxu0 0
      %1893 = vmatpush1.bf16.xpose.msra.mxu0 0
      %1894 = vmatprep.subr.bf16.mxu0 0
      %1895 = vmatpush1.bf16.xpose.msra.mxu0 0
      %1896 = vmatprep.mubr.bf16.mxu0 0
      %1897 = vmatmul.mubr.bf16.gmra.mrb[0].mxu0 %v1859
      %v1898 = vpop.f32.mrb[0].mxu0
      %v1899 = vadd.f32 %v496, %v1898
      %v1900 = vpop.f32.mrb[0].mxu0
      %v1901 = vpop.f32.mrb[0].mxu0
      %v1902 = vadd.f32 %v497, %v1901
      %v1903 = vpop.f32.mrb[0].mxu0
      %1904 = vdwg.mxu0
      %v1905 = vsel %vm853, %v1899, -inf
      %1906 = vmax.xlane.f32.xlu0 %v1905
      %v1907 = vpop.xlane.xlu0 %1906
      %v1908 = vsel %vm857, %v1902, -inf
      %1909 = vmax.xlane.f32.xlu0 %v1908
      %v1910 = vpop.xlane.xlu0 %1909
      %v1911 = vsub.f32 %v1899, %v1907
      %v1912 = vsub.f32 %v1902, %v1910
      %v1913 = vmul.f32 %v1911, 1.442695
      %v1914 = vpow.pop %v1913
      %v1915 = vmul.f32 %v1912, 1.442695
      %v1916 = vpow.pop %v1915
      %v1917 = vsel %vm853, %v1914, 0.0
      %1918 = vadd.xlane.f32.xlu0 %v1917
      %v1919 = vpop.xlane.xlu0 %1918
      %v1920 = vsel %vm857, %v1916, 0.0
      %1921 = vadd.xlane.f32.xlu0 %v1920
      %v1922 = vpop.xlane.xlu0 %1921
      %v1923 = vrcp.pop %v1919
      %v1924 = vrcp.pop %v1922
      %v1925 = vmul.f32 %v1914, %v1923
      %v1926 = vmul.f32 %v1916, %v1924
      %v1927 = vpack.c.bf16 %v1926, %v1925
      %1928 = vrot.lane.b32.xlu0 %v1729, 56
      %v1929 = vpop.permute.xlu0 %1928
      %v1931 = vsel %vm853, %v1927, 0
      %v1934 = vsel %vm883, %v1929, 0
      %1936 = vmatprep.subr.bf16.mxu0 0
      %1937 = vmatpush1.bf16.msra.mxu0 %v1934
      %1938 = vmatprep.subr.bf16.mxu0 0
      %1939 = vmatpush1.bf16.msra.mxu0 0
      %1940 = vmatprep.subr.bf16.mxu0 0
      %1941 = vmatpush1.bf16.msra.mxu0 0
      %1942 = vmatprep.subr.bf16.mxu0 0
      %1943 = vmatpush1.bf16.msra.mxu0 0
      %1944 = vmatprep.subr.bf16.mxu0 0
      %1945 = vmatpush1.bf16.msra.mxu0 0
      %1946 = vmatprep.subr.bf16.mxu0 0
      %1947 = vmatpush1.bf16.msra.mxu0 0
      %1948 = vmatprep.subr.bf16.mxu0 0
      %1949 = vmatpush1.bf16.msra.mxu0 0
      %1950 = vmatprep.subr.bf16.mxu0 0
      %1951 = vmatpush1.bf16.msra.mxu0 0
      %1952 = vmatprep.subr.bf16.mxu0 0
      %1953 = vmatpush1.bf16.msra.mxu0 0
      %1954 = vmatprep.subr.bf16.mxu0 0
      %1955 = vmatpush1.bf16.msra.mxu0 0
      %1956 = vmatprep.subr.bf16.mxu0 0
      %1957 = vmatpush1.bf16.msra.mxu0 0
      %1958 = vmatprep.subr.bf16.mxu0 0
      %1959 = vmatpush1.bf16.msra.mxu0 0
      %1960 = vmatprep.subr.bf16.mxu0 0
      %1961 = vmatpush1.bf16.msra.mxu0 0
      %1962 = vmatprep.subr.bf16.mxu0 0
      %1963 = vmatpush1.bf16.msra.mxu0 0
      %1964 = vmatprep.subr.bf16.mxu0 0
      %1965 = vmatpush1.bf16.msra.mxu0 0
      %1966 = vmatprep.subr.bf16.mxu0 0
      %1967 = vmatpush1.bf16.msra.mxu0 0
      %1968 = vmatprep.mubr.bf16.mxu0 0
      %1969 = vmatmul.mubr.bf16.gmra.mrb[0].mxu0 %v1931
      %v1970 = vpop.f32.mrb[0].mxu0
      %v1971 = vadd.f32 0.0, %v1970
      %v1972 = vpop.f32.mrb[0].mxu0
      %v1973 = vpop.f32.mrb[0].mxu0
      %v1974 = vadd.f32 0.0, %v1973
      %v1975 = vpop.f32.mrb[0].mxu0
      %1976 = vdwg.mxu0
      %1979 = vrot.lane.b32.xlu0 %v1971, 8
      %v1980 = vpop.permute.xlu0 %1979
      %1981 = vrot.lane.b32.xlu0 %v1974, 8
      %v1982 = vpop.permute.xlu0 %1981
      %1985 = vst.msk [vmem:[#allocation2] sm:$0xff] %vm1062, %v1980
      %1986 = vst.msk [vmem:[#allocation2 + $0x8] sm:$0x3] %vm1064, %v1982
      %1987 = vrot.lane.b32.xlu0 %v1729, 112
      %v1988 = vpop.permute.xlu0 %1987
      %1989 = vrot.lane.b32.xlu0 %v1729, 80
      %v1990 = vpop.permute.xlu0 %1989
      %v1992 = vsel %vm805, %v1988, 0
      %v1995 = vsel %vm805, %v1990, 0
      %1997 = vmatprep.subr.bf16.mxu0 0
      %1998 = vmatpush1.bf16.xpose.msra.mxu0 %v1995
      %1999 = vmatprep.subr.bf16.mxu0 0
      %2000 = vmatpush1.bf16.xpose.msra.mxu0 0
      %2001 = vmatprep.subr.bf16.mxu0 0
      %2002 = vmatpush1.bf16.xpose.msra.mxu0 0
      %2003 = vmatprep.subr.bf16.mxu0 0
      %2004 = vmatpush1.bf16.xpose.msra.mxu0 0
      %2005 = vmatprep.subr.bf16.mxu0 0
      %2006 = vmatpush1.bf16.xpose.msra.mxu0 0
      %2007 = vmatprep.subr.bf16.mxu0 0
      %2008 = vmatpush1.bf16.xpose.msra.mxu0 0
      %2009 = vmatprep.subr.bf16.mxu0 0
      %2010 = vmatpush1.bf16.xpose.msra.mxu0 0
      %2011 = vmatprep.subr.bf16.mxu0 0
      %2012 = vmatpush1.bf16.xpose.msra.mxu0 0
      %2013 = vmatprep.subr.bf16.mxu0 0
      %2014 = vmatpush1.bf16.xpose.msra.mxu0 0
      %2015 = vmatprep.subr.bf16.mxu0 0
      %2016 = vmatpush1.bf16.xpose.msra.mxu0 0
      %2017 = vmatprep.subr.bf16.mxu0 0
      %2018 = vmatpush1.bf16.xpose.msra.mxu0 0
      %2019 = vmatprep.subr.bf16.mxu0 0
      %2020 = vmatpush1.bf16.xpose.msra.mxu0 0
      %2021 = vmatprep.subr.bf16.mxu0 0
      %2022 = vmatpush1.bf16.xpose.msra.mxu0 0
      %2023 = vmatprep.subr.bf16.mxu0 0
      %2024 = vmatpush1.bf16.xpose.msra.mxu0 0
      %2025 = vmatprep.subr.bf16.mxu0 0
      %2026 = vmatpush1.bf16.xpose.msra.mxu0 0
      %2027 = vmatprep.subr.bf16.mxu0 0
      %2028 = vmatpush1.bf16.xpose.msra.mxu0 0
      %2029 = vmatprep.mubr.bf16.mxu0 0
      %2030 = vmatmul.mubr.bf16.gmra.mrb[0].mxu0 %v1992
      %v2031 = vpop.f32.mrb[0].mxu0
      %v2032 = vadd.f32 %v496, %v2031
      %v2033 = vpop.f32.mrb[0].mxu0
      %v2034 = vpop.f32.mrb[0].mxu0
      %v2035 = vadd.f32 %v497, %v2034
      %v2036 = vpop.f32.mrb[0].mxu0
      %2037 = vdwg.mxu0
      %v2038 = vsel %vm853, %v2032, -inf
      %2039 = vmax.xlane.f32.xlu0 %v2038
      %v2040 = vpop.xlane.xlu0 %2039
      %v2041 = vsel %vm857, %v2035, -inf
      %2042 = vmax.xlane.f32.xlu0 %v2041
      %v2043 = vpop.xlane.xlu0 %2042
      %v2044 = vsub.f32 %v2032, %v2040
      %v2045 = vsub.f32 %v2035, %v2043
      %v2046 = vmul.f32 %v2044, 1.442695
      %v2047 = vpow.pop %v2046
      %v2048 = vmul.f32 %v2045, 1.442695
      %v2049 = vpow.pop %v2048
      %v2050 = vsel %vm853, %v2047, 0.0
      %2051 = vadd.xlane.f32.xlu0 %v2050
      %v2052 = vpop.xlane.xlu0 %2051
      %v2053 = vsel %vm857, %v2049, 0.0
      %2054 = vadd.xlane.f32.xlu0 %v2053
      %v2055 = vpop.xlane.xlu0 %2054
      %v2056 = vrcp.pop %v2052
      %v2057 = vrcp.pop %v2055
      %v2058 = vmul.f32 %v2047, %v2056
      %v2059 = vmul.f32 %v2049, %v2057
      %v2060 = vpack.c.bf16 %v2059, %v2058
      %2061 = vrot.lane.b32.xlu0 %v1729, 48
      %v2062 = vpop.permute.xlu0 %2061
      %v2064 = vsel %vm853, %v2060, 0
      %v2067 = vsel %vm883, %v2062, 0
      %2069 = vmatprep.subr.bf16.mxu0 0
      %2070 = vmatpush1.bf16.msra.mxu0 %v2067
      %2071 = vmatprep.subr.bf16.mxu0 0
      %2072 = vmatpush1.bf16.msra.mxu0 0
      %2073 = vmatprep.subr.bf16.mxu0 0
      %2074 = vmatpush1.bf16.msra.mxu0 0
      %2075 = vmatprep.subr.bf16.mxu0 0
      %2076 = vmatpush1.bf16.msra.mxu0 0
      %2077 = vmatprep.subr.bf16.mxu0 0
      %2078 = vmatpush1.bf16.msra.mxu0 0
      %2079 = vmatprep.subr.bf16.mxu0 0
      %2080 = vmatpush1.bf16.msra.mxu0 0
      %2081 = vmatprep.subr.bf16.mxu0 0
      %2082 = vmatpush1.bf16.msra.mxu0 0
      %2083 = vmatprep.subr.bf16.mxu0 0
      %2084 = vmatpush1.bf16.msra.mxu0 0
      %2085 = vmatprep.subr.bf16.mxu0 0
      %2086 = vmatpush1.bf16.msra.mxu0 0
      %2087 = vmatprep.subr.bf16.mxu0 0
      %2088 = vmatpush1.bf16.msra.mxu0 0
      %2089 = vmatprep.subr.bf16.mxu0 0
      %2090 = vmatpush1.bf16.msra.mxu0 0
      %2091 = vmatprep.subr.bf16.mxu0 0
      %2092 = vmatpush1.bf16.msra.mxu0 0
      %2093 = vmatprep.subr.bf16.mxu0 0
      %2094 = vmatpush1.bf16.msra.mxu0 0
      %2095 = vmatprep.subr.bf16.mxu0 0
      %2096 = vmatpush1.bf16.msra.mxu0 0
      %2097 = vmatprep.subr.bf16.mxu0 0
      %2098 = vmatpush1.bf16.msra.mxu0 0
      %2099 = vmatprep.subr.bf16.mxu0 0
      %2100 = vmatpush1.bf16.msra.mxu0 0
      %2101 = vmatprep.mubr.bf16.mxu0 0
      %2102 = vmatmul.mubr.bf16.gmra.mrb[0].mxu0 %v2064
      %v2103 = vpop.f32.mrb[0].mxu0
      %v2104 = vadd.f32 0.0, %v2103
      %v2105 = vpop.f32.mrb[0].mxu0
      %v2106 = vpop.f32.mrb[0].mxu0
      %v2107 = vadd.f32 0.0, %v2106
      %v2108 = vpop.f32.mrb[0].mxu0
      %2109 = vdwg.mxu0
      %2112 = vrot.lane.b32.xlu0 %v2104, 16
      %v2113 = vpop.permute.xlu0 %2112
      %2114 = vrot.lane.b32.xlu0 %v2107, 16
      %v2115 = vpop.permute.xlu0 %2114
      %2118 = vst.msk [vmem:[#allocation2] sm:$0xff] %vm1197, %v2113
      %2119 = vst.msk [vmem:[#allocation2 + $0x8] sm:$0x3] %vm1199, %v2115
      %2120 = vrot.lane.b32.xlu0 %v1729, 104
      %v2121 = vpop.permute.xlu0 %2120
      %2122 = vrot.lane.b32.xlu0 %v1729, 72
      %v2123 = vpop.permute.xlu0 %2122
      %v2125 = vsel %vm805, %v2121, 0
      %v2128 = vsel %vm805, %v2123, 0
      %2130 = vmatprep.subr.bf16.mxu0 0
      %2131 = vmatpush1.bf16.xpose.msra.mxu0 %v2128
      %2132 = vmatprep.subr.bf16.mxu0 0
      %2133 = vmatpush1.bf16.xpose.msra.mxu0 0
      %2134 = vmatprep.subr.bf16.mxu0 0
      %2135 = vmatpush1.bf16.xpose.msra.mxu0 0
      %2136 = vmatprep.subr.bf16.mxu0 0
      %2137 = vmatpush1.bf16.xpose.msra.mxu0 0
      %2138 = vmatprep.subr.bf16.mxu0 0
      %2139 = vmatpush1.bf16.xpose.msra.mxu0 0
      %2140 = vmatprep.subr.bf16.mxu0 0
      %2141 = vmatpush1.bf16.xpose.msra.mxu0 0
      %2142 = vmatprep.subr.bf16.mxu0 0
      %2143 = vmatpush1.bf16.xpose.msra.mxu0 0
      %2144 = vmatprep.subr.bf16.mxu0 0
      %2145 = vmatpush1.bf16.xpose.msra.mxu0 0
      %2146 = vmatprep.subr.bf16.mxu0 0
      %2147 = vmatpush1.bf16.xpose.msra.mxu0 0
      %2148 = vmatprep.subr.bf16.mxu0 0
      %2149 = vmatpush1.bf16.xpose.msra.mxu0 0
      %2150 = vmatprep.subr.bf16.mxu0 0
      %2151 = vmatpush1.bf16.xpose.msra.mxu0 0
      %2152 = vmatprep.subr.bf16.mxu0 0
      %2153 = vmatpush1.bf16.xpose.msra.mxu0 0
      %2154 = vmatprep.subr.bf16.mxu0 0
      %2155 = vmatpush1.bf16.xpose.msra.mxu0 0
      %2156 = vmatprep.subr.bf16.mxu0 0
      %2157 = vmatpush1.bf16.xpose.msra.mxu0 0
      %2158 = vmatprep.subr.bf16.mxu0 0
      %2159 = vmatpush1.bf16.xpose.msra.mxu0 0
      %2160 = vmatprep.subr.bf16.mxu0 0
      %2161 = vmatpush1.bf16.xpose.msra.mxu0 0
      %2162 = vmatprep.mubr.bf16.mxu0 0
      %2163 = vmatmul.mubr.bf16.gmra.mrb[0].mxu0 %v2125
      %v2164 = vpop.f32.mrb[0].mxu0
      %v2165 = vadd.f32 %v496, %v2164
      %v2166 = vpop.f32.mrb[0].mxu0
      %v2167 = vpop.f32.mrb[0].mxu0
      %v2168 = vadd.f32 %v497, %v2167
      %v2169 = vpop.f32.mrb[0].mxu0
      %2170 = vdwg.mxu0
      %v2171 = vsel %vm853, %v2165, -inf
      %2172 = vmax.xlane.f32.xlu0 %v2171
      %v2173 = vpop.xlane.xlu0 %2172
      %v2174 = vsel %vm857, %v2168, -inf
      %2175 = vmax.xlane.f32.xlu0 %v2174
      %v2176 = vpop.xlane.xlu0 %2175
      %v2177 = vsub.f32 %v2165, %v2173
      %v2178 = vsub.f32 %v2168, %v2176
      %v2179 = vmul.f32 %v2177, 1.442695
      %v2180 = vpow.pop %v2179
      %v2181 = vmul.f32 %v2178, 1.442695
      %v2182 = vpow.pop %v2181
      %v2183 = vsel %vm853, %v2180, 0.0
      %2184 = vadd.xlane.f32.xlu0 %v2183
      %v2185 = vpop.xlane.xlu0 %2184
      %v2186 = vsel %vm857, %v2182, 0.0
      %2187 = vadd.xlane.f32.xlu0 %v2186
      %v2188 = vpop.xlane.xlu0 %2187
      %v2189 = vrcp.pop %v2185
      %v2190 = vrcp.pop %v2188
      %v2191 = vmul.f32 %v2180, %v2189
      %v2192 = vmul.f32 %v2182, %v2190
      %v2193 = vpack.c.bf16 %v2192, %v2191
      %2194 = vrot.lane.b32.xlu0 %v1729, 40
      %v2195 = vpop.permute.xlu0 %2194
      %v2197 = vsel %vm853, %v2193, 0
      %v2200 = vsel %vm883, %v2195, 0
      %2202 = vmatprep.subr.bf16.mxu0 0
      %2203 = vmatpush1.bf16.msra.mxu0 %v2200
      %2204 = vmatprep.subr.bf16.mxu0 0
      %2205 = vmatpush1.bf16.msra.mxu0 0
      %2206 = vmatprep.subr.bf16.mxu0 0
      %2207 = vmatpush1.bf16.msra.mxu0 0
      %2208 = vmatprep.subr.bf16.mxu0 0
      %2209 = vmatpush1.bf16.msra.mxu0 0
      %2210 = vmatprep.subr.bf16.mxu0 0
      %2211 = vmatpush1.bf16.msra.mxu0 0
      %2212 = vmatprep.subr.bf16.mxu0 0
      %2213 = vmatpush1.bf16.msra.mxu0 0
      %2214 = vmatprep.subr.bf16.mxu0 0
      %2215 = vmatpush1.bf16.msra.mxu0 0
      %2216 = vmatprep.subr.bf16.mxu0 0
      %2217 = vmatpush1.bf16.msra.mxu0 0
      %2218 = vmatprep.subr.bf16.mxu0 0
      %2219 = vmatpush1.bf16.msra.mxu0 0
      %2220 = vmatprep.subr.bf16.mxu0 0
      %2221 = vmatpush1.bf16.msra.mxu0 0
      %2222 = vmatprep.subr.bf16.mxu0 0
      %2223 = vmatpush1.bf16.msra.mxu0 0
      %2224 = vmatprep.subr.bf16.mxu0 0
      %2225 = vmatpush1.bf16.msra.mxu0 0
      %2226 = vmatprep.subr.bf16.mxu0 0
      %2227 = vmatpush1.bf16.msra.mxu0 0
      %2228 = vmatprep.subr.bf16.mxu0 0
      %2229 = vmatpush1.bf16.msra.mxu0 0
      %2230 = vmatprep.subr.bf16.mxu0 0
      %2231 = vmatpush1.bf16.msra.mxu0 0
      %2232 = vmatprep.subr.bf16.mxu0 0
      %2233 = vmatpush1.bf16.msra.mxu0 0
      %2234 = vmatprep.mubr.bf16.mxu0 0
      %2235 = vmatmul.mubr.bf16.gmra.mrb[0].mxu0 %v2197
      %v2236 = vpop.f32.mrb[0].mxu0
      %v2237 = vadd.f32 0.0, %v2236
      %v2238 = vpop.f32.mrb[0].mxu0
      %v2239 = vpop.f32.mrb[0].mxu0
      %v2240 = vadd.f32 0.0, %v2239
      %v2241 = vpop.f32.mrb[0].mxu0
      %2242 = vdwg.mxu0
      %2245 = vrot.lane.b32.xlu0 %v2237, 24
      %v2246 = vpop.permute.xlu0 %2245
      %2247 = vrot.lane.b32.xlu0 %v2240, 24
      %v2248 = vpop.permute.xlu0 %2247
      %2251 = vst.msk [vmem:[#allocation2] sm:$0xff] %vm1332, %v2246
      %2252 = vst.msk [vmem:[#allocation2 + $0x8] sm:$0x3] %vm1334, %v2248
      %v2253 = vld [vmem:[#allocation2] sm:$0xff]
      %v2254 = vld [vmem:[#allocation2 + $0x8] sm:$0x3]
      %s2255 = scalar_lea.vmem %s8, 16
      %v2256 = vld [vmem:[%s2255] sm:$0xf]
      %v2257 = vld [vmem:[%s2255 + $0x4] sm:$0xf]
      %v2258 = vld [vmem:[%s2255 + $0x8] sm:$0xf]
      %v2259 = vld [vmem:[%s2255 + $0xc] sm:$0xf]
      %v2260 = vpack.c.bf16 %v2254, %v2253
      %v2265 = vunpack.c.l.b16 %v2256
      %v2266 = vunpack.c.l.b16 %v2257
      %v2267 = vunpack.c.l.b16 %v2258
      %v2268 = vunpack.c.l.b16 %v2259
      %v2269 = vpack.c.b16 %v2266, %v2265
      %v2270 = vpack.c.b16 %v2268, %v2267
      %v2274 = vsel %vm653, %v2260, 0
      %2276 = vmatprep.subr.bf16.mxu0 0
      %2277 = vmatpush1.bf16.msra.mxu0 %v2269
      %2278 = vmatprep.subr.bf16.mxu0 0
      %2279 = vmatpush1.bf16.msra.mxu0 %v2270
      %2280 = vmatprep.subr.bf16.mxu0 0
      %2281 = vmatpush1.bf16.msra.mxu0 0
      %2282 = vmatprep.subr.bf16.mxu0 0
      %2283 = vmatpush1.bf16.msra.mxu0 0
      %2284 = vmatprep.subr.bf16.mxu0 0
      %2285 = vmatpush1.bf16.msra.mxu0 0
      %2286 = vmatprep.subr.bf16.mxu0 0
      %2287 = vmatpush1.bf16.msra.mxu0 0
      %2288 = vmatprep.subr.bf16.mxu0 0
      %2289 = vmatpush1.bf16.msra.mxu0 0
      %2290 = vmatprep.subr.bf16.mxu0 0
      %2291 = vmatpush1.bf16.msra.mxu0 0
      %2292 = vmatprep.subr.bf16.mxu0 0
      %2293 = vmatpush1.bf16.msra.mxu0 0
      %2294 = vmatprep.subr.bf16.mxu0 0
      %2295 = vmatpush1.bf16.msra.mxu0 0
      %2296 = vmatprep.subr.bf16.mxu0 0
      %2297 = vmatpush1.bf16.msra.mxu0 0
      %2298 = vmatprep.subr.bf16.mxu0 0
      %2299 = vmatpush1.bf16.msra.mxu0 0
      %2300 = vmatprep.subr.bf16.mxu0 0
      %2301 = vmatpush1.bf16.msra.mxu0 0
      %2302 = vmatprep.subr.bf16.mxu0 0
      %2303 = vmatpush1.bf16.msra.mxu0 0
      %2304 = vmatprep.subr.bf16.mxu0 0
      %2305 = vmatpush1.bf16.msra.mxu0 0
      %2306 = vmatprep.subr.bf16.mxu0 0
      %2307 = vmatpush1.bf16.msra.mxu0 0
      %2308 = vmatprep.mubr.bf16.mxu0 0
      %2309 = vmatmul.mubr.bf16.gmra.mrb[0].mxu0 %v2274
      %v2310 = vpop.f32.mrb[0].mxu0
      %v2311 = vadd.f32 0.0, %v2310
      %v2312 = vpop.f32.mrb[0].mxu0
      %v2313 = vpop.f32.mrb[0].mxu0
      %v2314 = vadd.f32 0.0, %v2313
      %v2315 = vpop.f32.mrb[0].mxu0
      %2316 = vdwg.mxu0
      %v2317 = vadd.f32 %v1617, %v2311
      %v2318 = vadd.f32 %v1618, %v2314
      %s2319 = scalar_lea.vmem %s9, 1
      %v2320 = vld [vmem:[%s2319] sm:$0x1]
      %v2322 = vlaneseq
      %v2323 = vshrl.u32 %v2322, 7
      %v2324 = vsub.s32 0, %v2323
      %v2325 = vrot.slane %v2320, %v2324
      %v2327 = vadd.f32 %v2317, %v2325
      %v2328 = vadd.f32 %v2318, %v2325
      %s2329 = scalar_lea.vmem %s10, 2
      %v2330 = vld [vmem:[%s2329] sm:$0x3]
      %v2331 = vsel %vm653, %v2327, 0.0
      %2332 = vadd.xlane.f32.xlu0 %v2331
      %v2333 = vpop.xlane.xlu0 %2332
      %v2334 = vsel %vm657, %v2328, 0.0
      %2335 = vadd.xlane.f32.xlu0 %v2334
      %v2336 = vpop.xlane.xlu0 %2335
      %v2337 = vmul.f32 %v2333, %v661
      %v2338 = vmul.f32 %v2336, %v661
      %v2339 = vsub.f32 %v2327, %v2337
      %v2340 = vsub.f32 %v2328, %v2338
      %v2341 = vmul.f32 %v2339, %v2339
      %v2342 = vmul.f32 %v2340, %v2340
      %v2343 = vsel %vm653, %v2341, 0.0
      %2344 = vadd.xlane.f32.xlu0 %v2343
      %v2345 = vpop.xlane.xlu0 %2344
      %v2346 = vsel %vm657, %v2342, 0.0
      %2347 = vadd.xlane.f32.xlu0 %v2346
      %v2348 = vpop.xlane.xlu0 %2347
      %v2349 = vmul.f32 %v2345, %v661
      %v2350 = vmul.f32 %v2348, %v661
      %v2351 = vadd.f32 %v2349, 1e-05
      %v2352 = vadd.f32 %v2350, 1e-05
      %v2353 = vrsqrt.pop %v2351
      %v2354 = vrsqrt.pop %v2352
      %v2355 = vmul.f32 %v2339, %v2353
      %v2356 = vmul.f32 %v2340, %v2354
      %v2357 = vlaneseq
      %v2358 = vshrl.u32 %v2357, 7
      %v2359 = vsub.s32 0, %v2358
      %v2360 = vrot.slane %v2330, %v2359
      %v2361 = vmul.f32 %v2355, %v2360
      %v2362 = vmul.f32 %v2356, %v2360
      %v2363 = vlaneseq
      %v2364 = vshrl.u32 %v2363, 7
      %v2365 = vsub.s32 1, %v2364
      %v2366 = vrot.slane %v2330, %v2365
      %v2367 = vadd.f32 %v2361, %v2366
      %v2368 = vadd.f32 %v2362, %v2366
      %s2369 = scalar_lea.vmem %s11, 16
      %v2370 = vld [vmem:[%s2369] sm:$0xf]
      %v2371 = vld [vmem:[%s2369 + $0x4] sm:$0xf]
      %v2372 = vld [vmem:[%s2369 + $0x8] sm:$0xf]
      %v2373 = vld [vmem:[%s2369 + $0xc] sm:$0xf]
      %v2374 = vpack.c.bf16 %v2368, %v2367
      %s2375 = scalar_lea.vmem %s12, 1
      %v2376 = vld [vmem:[%s2375] sm:$0x1]
      %v2378 = vlaneseq
      %v2379 = vshrl.u32 %v2378, 7
      %v2380 = vsub.s32 0, %v2379
      %v2381 = vrot.slane %v2376, %v2380
      %v2387 = vunpack.c.l.b16 %v2370
      %v2388 = vunpack.c.l.b16 %v2371
      %v2389 = vunpack.c.l.b16 %v2372
      %v2390 = vunpack.c.l.b16 %v2373
      %v2391 = vpack.c.b16 %v2388, %v2387
      %v2392 = vpack.c.b16 %v2390, %v2389
      %v2396 = vsel %vm653, %v2374, 0
      %2398 = vmatprep.subr.bf16.mxu0 0
      %2399 = vmatpush1.bf16.msra.mxu0 %v2391
      %2400 = vmatprep.subr.bf16.mxu0 0
      %2401 = vmatpush1.bf16.msra.mxu0 %v2392
      %2402 = vmatprep.subr.bf16.mxu0 0
      %2403 = vmatpush1.bf16.msra.mxu0 0
      %2404 = vmatprep.subr.bf16.mxu0 0
      %2405 = vmatpush1.bf16.msra.mxu0 0
      %2406 = vmatprep.subr.bf16.mxu0 0
      %2407 = vmatpush1.bf16.msra.mxu0 0
      %2408 = vmatprep.subr.bf16.mxu0 0
      %2409 = vmatpush1.bf16.msra.mxu0 0
      %2410 = vmatprep.subr.bf16.mxu0 0
      %2411 = vmatpush1.bf16.msra.mxu0 0
      %2412 = vmatprep.subr.bf16.mxu0 0
      %2413 = vmatpush1.bf16.msra.mxu0 0
      %2414 = vmatprep.subr.bf16.mxu0 0
      %2415 = vmatpush1.bf16.msra.mxu0 0
      %2416 = vmatprep.subr.bf16.mxu0 0
      %2417 = vmatpush1.bf16.msra.mxu0 0
      %2418 = vmatprep.subr.bf16.mxu0 0
      %2419 = vmatpush1.bf16.msra.mxu0 0
      %2420 = vmatprep.subr.bf16.mxu0 0
      %2421 = vmatpush1.bf16.msra.mxu0 0
      %2422 = vmatprep.subr.bf16.mxu0 0
      %2423 = vmatpush1.bf16.msra.mxu0 0
      %2424 = vmatprep.subr.bf16.mxu0 0
      %2425 = vmatpush1.bf16.msra.mxu0 0
      %2426 = vmatprep.subr.bf16.mxu0 0
      %2427 = vmatpush1.bf16.msra.mxu0 0
      %2428 = vmatprep.subr.bf16.mxu0 0
      %2429 = vmatpush1.bf16.msra.mxu0 0
      %2430 = vmatprep.mubr.bf16.mxu0 0
      %2431 = vmatmul.mubr.bf16.gmra.mrb[0].mxu0 %v2396
      %v2432 = vpop.f32.mrb[0].mxu0
      %v2433 = vadd.f32 %v2381, %v2432
      %v2434 = vpop.f32.mrb[0].mxu0
      %v2435 = vpop.f32.mrb[0].mxu0
      %v2436 = vadd.f32 %v2381, %v2435
      %v2437 = vpop.f32.mrb[0].mxu0
      %2438 = vdwg.mxu0
      %v2439 = vmul.f32 %v2433, 1.702
      %v2440 = vmul.f32 %v2436, 1.702
      %v2441 = vxor.u32 %v2439, 2147483648
      %v2442 = vxor.u32 %v2440, 2147483648
      %v2443 = vmul.f32 %v2441, 1.442695
      %v2444 = vpow.pop %v2443
      %v2445 = vmul.f32 %v2442, 1.442695
      %v2446 = vpow.pop %v2445
      %v2447 = vadd.f32 %v2444, 1.0
      %v2448 = vadd.f32 %v2446, 1.0
      %v2449 = vrcp.pop %v2447
      %v2450 = vmul.f32 1.0, %v2449
      %v2451 = vrcp.pop %v2448
      %v2452 = vmul.f32 1.0, %v2451
      %v2453 = vmul.f32 %v2433, %v2450
      %v2454 = vmul.f32 %v2436, %v2452
      %s2455 = scalar_lea.vmem %s13, 32
      %v2456 = vld [vmem:[%s2455] sm:$0xf]
      %v2457 = vld [vmem:[%s2455 + $0x4] sm:$0xf]
      %v2458 = vld [vmem:[%s2455 + $0x8] sm:$0xf]
      %v2459 = vld [vmem:[%s2455 + $0xc] sm:$0xf]
      %v2460 = vld [vmem:[%s2455 + $0x10] sm:$0xf]
      %v2461 = vld [vmem:[%s2455 + $0x14] sm:$0xf]
      %v2462 = vld [vmem:[%s2455 + $0x18] sm:$0xf]
      %v2463 = vld [vmem:[%s2455 + $0x1c] sm:$0xf]
      %v2464 = vpack.c.bf16 %v2454, %v2453
      %s2465 = scalar_lea.vmem %s14, 1
      %v2466 = vld [vmem:[%s2465] sm:$0x1]
      %v2468 = vlaneseq
      %v2469 = vshrl.u32 %v2468, 7
      %v2470 = vsub.s32 0, %v2469
      %v2471 = vrot.slane %v2466, %v2470
      %v2481 = vunpack.c.l.b16 %v2456
      %v2482 = vunpack.c.l.b16 %v2457
      %v2483 = vunpack.c.l.b16 %v2458
      %v2484 = vunpack.c.l.b16 %v2459
      %v2485 = vunpack.c.l.b16 %v2460
      %v2486 = vunpack.c.l.b16 %v2461
      %v2487 = vunpack.c.l.b16 %v2462
      %v2488 = vunpack.c.l.b16 %v2463
      %v2489 = vpack.c.b16 %v2482, %v2481
      %v2490 = vpack.c.b16 %v2484, %v2483
      %v2491 = vpack.c.b16 %v2486, %v2485
      %v2492 = vpack.c.b16 %v2488, %v2487
      %v2498 = vsel %vm607, %v2464, 0
      %2500 = vmatprep.subr.bf16.mxu0 0
      %2501 = vmatpush1.bf16.msra.mxu0 %v2489
      %2502 = vmatprep.subr.bf16.mxu0 0
      %2503 = vmatpush1.bf16.msra.mxu0 %v2490
      %2504 = vmatprep.subr.bf16.mxu0 0
      %2505 = vmatpush1.bf16.msra.mxu0 %v2491
      %2506 = vmatprep.subr.bf16.mxu0 0
      %2507 = vmatpush1.bf16.msra.mxu0 %v2492
      %2508 = vmatprep.subr.bf16.mxu0 0
      %2509 = vmatpush1.bf16.msra.mxu0 0
      %2510 = vmatprep.subr.bf16.mxu0 0
      %2511 = vmatpush1.bf16.msra.mxu0 0
      %2512 = vmatprep.subr.bf16.mxu0 0
      %2513 = vmatpush1.bf16.msra.mxu0 0
      %2514 = vmatprep.subr.bf16.mxu0 0
      %2515 = vmatpush1.bf16.msra.mxu0 0
      %2516 = vmatprep.subr.bf16.mxu0 0
      %2517 = vmatpush1.bf16.msra.mxu0 0
      %2518 = vmatprep.subr.bf16.mxu0 0
      %2519 = vmatpush1.bf16.msra.mxu0 0
      %2520 = vmatprep.subr.bf16.mxu0 0
      %2521 = vmatpush1.bf16.msra.mxu0 0
      %2522 = vmatprep.subr.bf16.mxu0 0
      %2523 = vmatpush1.bf16.msra.mxu0 0
      %2524 = vmatprep.subr.bf16.mxu0 0
      %2525 = vmatpush1.bf16.msra.mxu0 0
      %2526 = vmatprep.subr.bf16.mxu0 0
      %2527 = vmatpush1.bf16.msra.mxu0 0
      %2528 = vmatprep.subr.bf16.mxu0 0
      %2529 = vmatpush1.bf16.msra.mxu0 0
      %2530 = vmatprep.subr.bf16.mxu0 0
      %2531 = vmatpush1.bf16.msra.mxu0 0
      %2532 = vmatprep.mubr.bf16.mxu0 0
      %2533 = vmatmul.mubr.bf16.gmra.mrb[0].mxu0 %v2498
      %v2534 = vpop.f32.mrb[0].mxu0
      %v2535 = vadd.f32 %v2471, %v2534
      %v2536 = vpop.f32.mrb[0].mxu0
      %v2537 = vpop.f32.mrb[0].mxu0
      %v2538 = vadd.f32 %v2471, %v2537
      %v2539 = vpop.f32.mrb[0].mxu0
      %2540 = vdwg.mxu0
      %v2541 = vadd.f32 %v2327, %v2535
      %v2542 = vadd.f32 %v2328, %v2538
      %s2543 = scalar_lea.vmem %s5, 4
      %v2544 = vld [vmem:[%s2543] sm:$0x3]
      %v2545 = vsel %vm653, %v2541, 0.0
      %2546 = vadd.xlane.f32.xlu0 %v2545
      %v2547 = vpop.xlane.xlu0 %2546
      %v2548 = vsel %vm657, %v2542, 0.0
      %2549 = vadd.xlane.f32.xlu0 %v2548
      %v2550 = vpop.xlane.xlu0 %2549
      %v2551 = vmul.f32 %v2547, %v661
      %v2552 = vmul.f32 %v2550, %v661
      %v2553 = vsub.f32 %v2541, %v2551
      %v2554 = vsub.f32 %v2542, %v2552
      %v2555 = vmul.f32 %v2553, %v2553
      %v2556 = vmul.f32 %v2554, %v2554
      %v2557 = vsel %vm653, %v2555, 0.0
      %2558 = vadd.xlane.f32.xlu0 %v2557
      %v2559 = vpop.xlane.xlu0 %2558
      %v2560 = vsel %vm657, %v2556, 0.0
      %2561 = vadd.xlane.f32.xlu0 %v2560
      %v2562 = vpop.xlane.xlu0 %2561
      %v2563 = vmul.f32 %v2559, %v661
      %v2564 = vmul.f32 %v2562, %v661
      %v2565 = vadd.f32 %v2563, 1e-05
      %v2566 = vadd.f32 %v2564, 1e-05
      %v2567 = vrsqrt.pop %v2565
      %v2568 = vrsqrt.pop %v2566
      %v2569 = vmul.f32 %v2553, %v2567
      %v2570 = vmul.f32 %v2554, %v2568
      %v2571 = vlaneseq
      %v2572 = vshrl.u32 %v2571, 7
      %v2573 = vsub.s32 0, %v2572
      %v2574 = vrot.slane %v2544, %v2573
      %v2575 = vmul.f32 %v2569, %v2574
      %v2576 = vmul.f32 %v2570, %v2574
      %v2577 = vlaneseq
      %v2578 = vshrl.u32 %v2577, 7
      %v2579 = vsub.s32 1, %v2578
      %v2580 = vrot.slane %v2544, %v2579
      %v2581 = vadd.f32 %v2575, %v2580
      %v2582 = vadd.f32 %v2576, %v2580
      %s2583 = scalar_lea.vmem %s6, 32
      %v2584 = vld [vmem:[%s2583] sm:$0xf]
      %v2585 = vld [vmem:[%s2583 + $0x4] sm:$0xf]
      %v2586 = vld [vmem:[%s2583 + $0x8] sm:$0xf]
      %v2587 = vld [vmem:[%s2583 + $0xc] sm:$0xf]
      %v2588 = vpack.c.bf16 %v2582, %v2581
      %s2589 = scalar_lea.vmem %s7, 2
      %v2590 = vld [vmem:[%s2589] sm:$0x1]
      %v2592 = vlaneseq
      %v2593 = vshrl.u32 %v2592, 7
      %v2594 = vsub.s32 0, %v2593
      %v2595 = vrot.slane %v2590, %v2594
      %v2601 = vunpack.c.l.b16 %v2584
      %v2602 = vunpack.c.l.b16 %v2585
      %v2603 = vunpack.c.l.b16 %v2586
      %v2604 = vunpack.c.l.b16 %v2587
      %v2605 = vpack.c.b16 %v2602, %v2601
      %v2606 = vpack.c.b16 %v2604, %v2603
      %v2610 = vsel %vm653, %v2588, 0
      %2612 = vmatprep.subr.bf16.mxu0 0
      %2613 = vmatpush1.bf16.msra.mxu0 %v2605
      %2614 = vmatprep.subr.bf16.mxu0 0
      %2615 = vmatpush1.bf16.msra.mxu0 %v2606
      %2616 = vmatprep.subr.bf16.mxu0 0
      %2617 = vmatpush1.bf16.msra.mxu0 0
      %2618 = vmatprep.subr.bf16.mxu0 0
      %2619 = vmatpush1.bf16.msra.mxu0 0
      %2620 = vmatprep.subr.bf16.mxu0 0
      %2621 = vmatpush1.bf16.msra.mxu0 0
      %2622 = vmatprep.subr.bf16.mxu0 0
      %2623 = vmatpush1.bf16.msra.mxu0 0
      %2624 = vmatprep.subr.bf16.mxu0 0
      %2625 = vmatpush1.bf16.msra.mxu0 0
      %2626 = vmatprep.subr.bf16.mxu0 0
      %2627 = vmatpush1.bf16.msra.mxu0 0
      %2628 = vmatprep.subr.bf16.mxu0 0
      %2629 = vmatpush1.bf16.msra.mxu0 0
      %2630 = vmatprep.subr.bf16.mxu0 0
      %2631 = vmatpush1.bf16.msra.mxu0 0
      %2632 = vmatprep.subr.bf16.mxu0 0
      %2633 = vmatpush1.bf16.msra.mxu0 0
      %2634 = vmatprep.subr.bf16.mxu0 0
      %2635 = vmatpush1.bf16.msra.mxu0 0
      %2636 = vmatprep.subr.bf16.mxu0 0
      %2637 = vmatpush1.bf16.msra.mxu0 0
      %2638 = vmatprep.subr.bf16.mxu0 0
      %2639 = vmatpush1.bf16.msra.mxu0 0
      %2640 = vmatprep.subr.bf16.mxu0 0
      %2641 = vmatpush1.bf16.msra.mxu0 0
      %2642 = vmatprep.subr.bf16.mxu0 0
      %2643 = vmatpush1.bf16.msra.mxu0 0
      %2644 = vmatprep.mubr.bf16.mxu0 0
      %2645 = vmatmul.mubr.bf16.gmra.mrb[0].mxu0 %v2610
      %v2646 = vpop.f32.mrb[0].mxu0
      %v2647 = vadd.f32 %v2595, %v2646
      %v2648 = vpop.f32.mrb[0].mxu0
      %v2649 = vpop.f32.mrb[0].mxu0
      %v2650 = vadd.f32 %v2595, %v2649
      %v2651 = vpop.f32.mrb[0].mxu0
      %2652 = vdwg.mxu0
      %v2653 = vpack.c.bf16 %v2650, %v2647
      %2655 = vrot.lane.b32.xlu0 %v2653, 96
      %v2656 = vpop.permute.xlu0 %2655
      %v2658 = vsel %vm805, %v2653, 0
      %v2661 = vsel %vm805, %v2656, 0
      %2663 = vmatprep.subr.bf16.mxu0 0
      %2664 = vmatpush1.bf16.xpose.msra.mxu0 %v2661
      %2665 = vmatprep.subr.bf16.mxu0 0
      %2666 = vmatpush1.bf16.xpose.msra.mxu0 0
      %2667 = vmatprep.subr.bf16.mxu0 0
      %2668 = vmatpush1.bf16.xpose.msra.mxu0 0
      %2669 = vmatprep.subr.bf16.mxu0 0
      %2670 = vmatpush1.bf16.xpose.msra.mxu0 0
      %2671 = vmatprep.subr.bf16.mxu0 0
      %2672 = vmatpush1.bf16.xpose.msra.mxu0 0
      %2673 = vmatprep.subr.bf16.mxu0 0
      %2674 = vmatpush1.bf16.xpose.msra.mxu0 0
      %2675 = vmatprep.subr.bf16.mxu0 0
      %2676 = vmatpush1.bf16.xpose.msra.mxu0 0
      %2677 = vmatprep.subr.bf16.mxu0 0
      %2678 = vmatpush1.bf16.xpose.msra.mxu0 0
      %2679 = vmatprep.subr.bf16.mxu0 0
      %2680 = vmatpush1.bf16.xpose.msra.mxu0 0
      %2681 = vmatprep.subr.bf16.mxu0 0
      %2682 = vmatpush1.bf16.xpose.msra.mxu0 0
      %2683 = vmatprep.subr.bf16.mxu0 0
      %2684 = vmatpush1.bf16.xpose.msra.mxu0 0
      %2685 = vmatprep.subr.bf16.mxu0 0
      %2686 = vmatpush1.bf16.xpose.msra.mxu0 0
      %2687 = vmatprep.subr.bf16.mxu0 0
      %2688 = vmatpush1.bf16.xpose.msra.mxu0 0
      %2689 = vmatprep.subr.bf16.mxu0 0
      %2690 = vmatpush1.bf16.xpose.msra.mxu0 0
      %2691 = vmatprep.subr.bf16.mxu0 0
      %2692 = vmatpush1.bf16.xpose.msra.mxu0 0
      %2693 = vmatprep.subr.bf16.mxu0 0
      %2694 = vmatpush1.bf16.xpose.msra.mxu0 0
      %2695 = vmatprep.mubr.bf16.mxu0 0
      %2696 = vmatmul.mubr.bf16.gmra.mrb[0].mxu0 %v2658
      %v2697 = vpop.f32.mrb[0].mxu0
      %v2698 = vadd.f32 %v496, %v2697
      %v2699 = vpop.f32.mrb[0].mxu0
      %v2700 = vpop.f32.mrb[0].mxu0
      %v2701 = vadd.f32 %v497, %v2700
      %v2702 = vpop.f32.mrb[0].mxu0
      %2703 = vdwg.mxu0
      %v2704 = vsel %vm853, %v2698, -inf
      %2705 = vmax.xlane.f32.xlu0 %v2704
      %v2706 = vpop.xlane.xlu0 %2705
      %v2707 = vsel %vm857, %v2701, -inf
      %2708 = vmax.xlane.f32.xlu0 %v2707
      %v2709 = vpop.xlane.xlu0 %2708
      %v2710 = vsub.f32 %v2698, %v2706
      %v2711 = vsub.f32 %v2701, %v2709
      %v2712 = vmul.f32 %v2710, 1.442695
      %v2713 = vpow.pop %v2712
      %v2714 = vmul.f32 %v2711, 1.442695
      %v2715 = vpow.pop %v2714
      %v2716 = vsel %vm853, %v2713, 0.0
      %2717 = vadd.xlane.f32.xlu0 %v2716
      %v2718 = vpop.xlane.xlu0 %2717
      %v2719 = vsel %vm857, %v2715, 0.0
      %2720 = vadd.xlane.f32.xlu0 %v2719
      %v2721 = vpop.xlane.xlu0 %2720
      %v2722 = vrcp.pop %v2718
      %v2723 = vrcp.pop %v2721
      %v2724 = vmul.f32 %v2713, %v2722
      %v2725 = vmul.f32 %v2715, %v2723
      %v2726 = vpack.c.bf16 %v2725, %v2724
      %2727 = vrot.lane.b32.xlu0 %v2653, 64
      %v2728 = vpop.permute.xlu0 %2727
      %v2730 = vsel %vm853, %v2726, 0
      %v2733 = vsel %vm883, %v2728, 0
      %2735 = vmatprep.subr.bf16.mxu0 0
      %2736 = vmatpush1.bf16.msra.mxu0 %v2733
      %2737 = vmatprep.subr.bf16.mxu0 0
      %2738 = vmatpush1.bf16.msra.mxu0 0
      %2739 = vmatprep.subr.bf16.mxu0 0
      %2740 = vmatpush1.bf16.msra.mxu0 0
      %2741 = vmatprep.subr.bf16.mxu0 0
      %2742 = vmatpush1.bf16.msra.mxu0 0
      %2743 = vmatprep.subr.bf16.mxu0 0
      %2744 = vmatpush1.bf16.msra.mxu0 0
      %2745 = vmatprep.subr.bf16.mxu0 0
      %2746 = vmatpush1.bf16.msra.mxu0 0
      %2747 = vmatprep.subr.bf16.mxu0 0
      %2748 = vmatpush1.bf16.msra.mxu0 0
      %2749 = vmatprep.subr.bf16.mxu0 0
      %2750 = vmatpush1.bf16.msra.mxu0 0
      %2751 = vmatprep.subr.bf16.mxu0 0
      %2752 = vmatpush1.bf16.msra.mxu0 0
      %2753 = vmatprep.subr.bf16.mxu0 0
      %2754 = vmatpush1.bf16.msra.mxu0 0
      %2755 = vmatprep.subr.bf16.mxu0 0
      %2756 = vmatpush1.bf16.msra.mxu0 0
      %2757 = vmatprep.subr.bf16.mxu0 0
      %2758 = vmatpush1.bf16.msra.mxu0 0
      %2759 = vmatprep.subr.bf16.mxu0 0
      %2760 = vmatpush1.bf16.msra.mxu0 0
      %2761 = vmatprep.subr.bf16.mxu0 0
      %2762 = vmatpush1.bf16.msra.mxu0 0
      %2763 = vmatprep.subr.bf16.mxu0 0
      %2764 = vmatpush1.bf16.msra.mxu0 0
      %2765 = vmatprep.subr.bf16.mxu0 0
      %2766 = vmatpush1.bf16.msra.mxu0 0
      %2767 = vmatprep.mubr.bf16.mxu0 0
      %2768 = vmatmul.mubr.bf16.gmra.mrb[0].mxu0 %v2730
      %v2769 = vpop.f32.mrb[0].mxu0
      %v2770 = vadd.f32 0.0, %v2769
      %v2771 = vpop.f32.mrb[0].mxu0
      %v2772 = vpop.f32.mrb[0].mxu0
      %v2773 = vadd.f32 0.0, %v2772
      %v2774 = vpop.f32.mrb[0].mxu0
      %2775 = vdwg.mxu0
      %2776 = vst.msk [vmem:[#allocation2] sm:$0xff] %vm805, %v2770
      %2777 = vst.msk [vmem:[#allocation2 + $0x8] sm:$0x3] %vm929, %v2773
      %2778 = vrot.lane.b32.xlu0 %v2653, 120
      %v2779 = vpop.permute.xlu0 %2778
      %2780 = vrot.lane.b32.xlu0 %v2653, 88
      %v2781 = vpop.permute.xlu0 %2780
      %v2783 = vsel %vm805, %v2779, 0
      %v2786 = vsel %vm805, %v2781, 0
      %2788 = vmatprep.subr.bf16.mxu0 0
      %2789 = vmatpush1.bf16.xpose.msra.mxu0 %v2786
      %2790 = vmatprep.subr.bf16.mxu0 0
      %2791 = vmatpush1.bf16.xpose.msra.mxu0 0
      %2792 = vmatprep.subr.bf16.mxu0 0
      %2793 = vmatpush1.bf16.xpose.msra.mxu0 0
      %2794 = vmatprep.subr.bf16.mxu0 0
      %2795 = vmatpush1.bf16.xpose.msra.mxu0 0
      %2796 = vmatprep.subr.bf16.mxu0 0
      %2797 = vmatpush1.bf16.xpose.msra.mxu0 0
      %2798 = vmatprep.subr.bf16.mxu0 0
      %2799 = vmatpush1.bf16.xpose.msra.mxu0 0
      %2800 = vmatprep.subr.bf16.mxu0 0
      %2801 = vmatpush1.bf16.xpose.msra.mxu0 0
      %2802 = vmatprep.subr.bf16.mxu0 0
      %2803 = vmatpush1.bf16.xpose.msra.mxu0 0
      %2804 = vmatprep.subr.bf16.mxu0 0
      %2805 = vmatpush1.bf16.xpose.msra.mxu0 0
      %2806 = vmatprep.subr.bf16.mxu0 0
      %2807 = vmatpush1.bf16.xpose.msra.mxu0 0
      %2808 = vmatprep.subr.bf16.mxu0 0
      %2809 = vmatpush1.bf16.xpose.msra.mxu0 0
      %2810 = vmatprep.subr.bf16.mxu0 0
      %2811 = vmatpush1.bf16.xpose.msra.mxu0 0
      %2812 = vmatprep.subr.bf16.mxu0 0
      %2813 = vmatpush1.bf16.xpose.msra.mxu0 0
      %2814 = vmatprep.subr.bf16.mxu0 0
      %2815 = vmatpush1.bf16.xpose.msra.mxu0 0
      %2816 = vmatprep.subr.bf16.mxu0 0
      %2817 = vmatpush1.bf16.xpose.msra.mxu0 0
      %2818 = vmatprep.subr.bf16.mxu0 0
      %2819 = vmatpush1.bf16.xpose.msra.mxu0 0
      %2820 = vmatprep.mubr.bf16.mxu0 0
      %2821 = vmatmul.mubr.bf16.gmra.mrb[0].mxu0 %v2783
      %v2822 = vpop.f32.mrb[0].mxu0
      %v2823 = vadd.f32 %v496, %v2822
      %v2824 = vpop.f32.mrb[0].mxu0
      %v2825 = vpop.f32.mrb[0].mxu0
      %v2826 = vadd.f32 %v497, %v2825
      %v2827 = vpop.f32.mrb[0].mxu0
      %2828 = vdwg.mxu0
      %v2829 = vsel %vm853, %v2823, -inf
      %2830 = vmax.xlane.f32.xlu0 %v2829
      %v2831 = vpop.xlane.xlu0 %2830
      %v2832 = vsel %vm857, %v2826, -inf
      %2833 = vmax.xlane.f32.xlu0 %v2832
      %v2834 = vpop.xlane.xlu0 %2833
      %v2835 = vsub.f32 %v2823, %v2831
      %v2836 = vsub.f32 %v2826, %v2834
      %v2837 = vmul.f32 %v2835, 1.442695
      %v2838 = vpow.pop %v2837
      %v2839 = vmul.f32 %v2836, 1.442695
      %v2840 = vpow.pop %v2839
      %v2841 = vsel %vm853, %v2838, 0.0
      %2842 = vadd.xlane.f32.xlu0 %v2841
      %v2843 = vpop.xlane.xlu0 %2842
      %v2844 = vsel %vm857, %v2840, 0.0
      %2845 = vadd.xlane.f32.xlu0 %v2844
      %v2846 = vpop.xlane.xlu0 %2845
      %v2847 = vrcp.pop %v2843
      %v2848 = vrcp.pop %v2846
      %v2849 = vmul.f32 %v2838, %v2847
      %v2850 = vmul.f32 %v2840, %v2848
      %v2851 = vpack.c.bf16 %v2850, %v2849
      %2852 = vrot.lane.b32.xlu0 %v2653, 56
      %v2853 = vpop.permute.xlu0 %2852
      %v2855 = vsel %vm853, %v2851, 0
      %v2858 = vsel %vm883, %v2853, 0
      %2860 = vmatprep.subr.bf16.mxu0 0
      %2861 = vmatpush1.bf16.msra.mxu0 %v2858
      %2862 = vmatprep.subr.bf16.mxu0 0
      %2863 = vmatpush1.bf16.msra.mxu0 0
      %2864 = vmatprep.subr.bf16.mxu0 0
      %2865 = vmatpush1.bf16.msra.mxu0 0
      %2866 = vmatprep.subr.bf16.mxu0 0
      %2867 = vmatpush1.bf16.msra.mxu0 0
      %2868 = vmatprep.subr.bf16.mxu0 0
      %2869 = vmatpush1.bf16.msra.mxu0 0
      %2870 = vmatprep.subr.bf16.mxu0 0
      %2871 = vmatpush1.bf16.msra.mxu0 0
      %2872 = vmatprep.subr.bf16.mxu0 0
      %2873 = vmatpush1.bf16.msra.mxu0 0
      %2874 = vmatprep.subr.bf16.mxu0 0
      %2875 = vmatpush1.bf16.msra.mxu0 0
      %2876 = vmatprep.subr.bf16.mxu0 0
      %2877 = vmatpush1.bf16.msra.mxu0 0
      %2878 = vmatprep.subr.bf16.mxu0 0
      %2879 = vmatpush1.bf16.msra.mxu0 0
      %2880 = vmatprep.subr.bf16.mxu0 0
      %2881 = vmatpush1.bf16.msra.mxu0 0
      %2882 = vmatprep.subr.bf16.mxu0 0
      %2883 = vmatpush1.bf16.msra.mxu0 0
      %2884 = vmatprep.subr.bf16.mxu0 0
      %2885 = vmatpush1.bf16.msra.mxu0 0
      %2886 = vmatprep.subr.bf16.mxu0 0
      %2887 = vmatpush1.bf16.msra.mxu0 0
      %2888 = vmatprep.subr.bf16.mxu0 0
      %2889 = vmatpush1.bf16.msra.mxu0 0
      %2890 = vmatprep.subr.bf16.mxu0 0
      %2891 = vmatpush1.bf16.msra.mxu0 0
      %2892 = vmatprep.mubr.bf16.mxu0 0
      %2893 = vmatmul.mubr.bf16.gmra.mrb[0].mxu0 %v2855
      %v2894 = vpop.f32.mrb[0].mxu0
      %v2895 = vadd.f32 0.0, %v2894
      %v2896 = vpop.f32.mrb[0].mxu0
      %v2897 = vpop.f32.mrb[0].mxu0
      %v2898 = vadd.f32 0.0, %v2897
      %v2899 = vpop.f32.mrb[0].mxu0
      %2900 = vdwg.mxu0
      %2903 = vrot.lane.b32.xlu0 %v2895, 8
      %v2904 = vpop.permute.xlu0 %2903
      %2905 = vrot.lane.b32.xlu0 %v2898, 8
      %v2906 = vpop.permute.xlu0 %2905
      %2909 = vst.msk [vmem:[#allocation2] sm:$0xff] %vm1062, %v2904
      %2910 = vst.msk [vmem:[#allocation2 + $0x8] sm:$0x3] %vm1064, %v2906
      %2911 = vrot.lane.b32.xlu0 %v2653, 112
      %v2912 = vpop.permute.xlu0 %2911
      %2913 = vrot.lane.b32.xlu0 %v2653, 80
      %v2914 = vpop.permute.xlu0 %2913
      %v2916 = vsel %vm805, %v2912, 0
      %v2919 = vsel %vm805, %v2914, 0
      %2921 = vmatprep.subr.bf16.mxu0 0
      %2922 = vmatpush1.bf16.xpose.msra.mxu0 %v2919
      %2923 = vmatprep.subr.bf16.mxu0 0
      %2924 = vmatpush1.bf16.xpose.msra.mxu0 0
      %2925 = vmatprep.subr.bf16.mxu0 0
      %2926 = vmatpush1.bf16.xpose.msra.mxu0 0
      %2927 = vmatprep.subr.bf16.mxu0 0
      %2928 = vmatpush1.bf16.xpose.msra.mxu0 0
      %2929 = vmatprep.subr.bf16.mxu0 0
      %2930 = vmatpush1.bf16.xpose.msra.mxu0 0
      %2931 = vmatprep.subr.bf16.mxu0 0
      %2932 = vmatpush1.bf16.xpose.msra.mxu0 0
      %2933 = vmatprep.subr.bf16.mxu0 0
      %2934 = vmatpush1.bf16.xpose.msra.mxu0 0
      %2935 = vmatprep.subr.bf16.mxu0 0
      %2936 = vmatpush1.bf16.xpose.msra.mxu0 0
      %2937 = vmatprep.subr.bf16.mxu0 0
      %2938 = vmatpush1.bf16.xpose.msra.mxu0 0
      %2939 = vmatprep.subr.bf16.mxu0 0
      %2940 = vmatpush1.bf16.xpose.msra.mxu0 0
      %2941 = vmatprep.subr.bf16.mxu0 0
      %2942 = vmatpush1.bf16.xpose.msra.mxu0 0
      %2943 = vmatprep.subr.bf16.mxu0 0
      %2944 = vmatpush1.bf16.xpose.msra.mxu0 0
      %2945 = vmatprep.subr.bf16.mxu0 0
      %2946 = vmatpush1.bf16.xpose.msra.mxu0 0
      %2947 = vmatprep.subr.bf16.mxu0 0
      %2948 = vmatpush1.bf16.xpose.msra.mxu0 0
      %2949 = vmatprep.subr.bf16.mxu0 0
      %2950 = vmatpush1.bf16.xpose.msra.mxu0 0
      %2951 = vmatprep.subr.bf16.mxu0 0
      %2952 = vmatpush1.bf16.xpose.msra.mxu0 0
      %2953 = vmatprep.mubr.bf16.mxu0 0
      %2954 = vmatmul.mubr.bf16.gmra.mrb[0].mxu0 %v2916
      %v2955 = vpop.f32.mrb[0].mxu0
      %v2956 = vadd.f32 %v496, %v2955
      %v2957 = vpop.f32.mrb[0].mxu0
      %v2958 = vpop.f32.mrb[0].mxu0
      %v2959 = vadd.f32 %v497, %v2958
      %v2960 = vpop.f32.mrb[0].mxu0
      %2961 = vdwg.mxu0
      %v2962 = vsel %vm853, %v2956, -inf
      %2963 = vmax.xlane.f32.xlu0 %v2962
      %v2964 = vpop.xlane.xlu0 %2963
      %v2965 = vsel %vm857, %v2959, -inf
      %2966 = vmax.xlane.f32.xlu0 %v2965
      %v2967 = vpop.xlane.xlu0 %2966
      %v2968 = vsub.f32 %v2956, %v2964
      %v2969 = vsub.f32 %v2959, %v2967
      %v2970 = vmul.f32 %v2968, 1.442695
      %v2971 = vpow.pop %v2970
      %v2972 = vmul.f32 %v2969, 1.442695
      %v2973 = vpow.pop %v2972
      %v2974 = vsel %vm853, %v2971, 0.0
      %2975 = vadd.xlane.f32.xlu0 %v2974
      %v2976 = vpop.xlane.xlu0 %2975
      %v2977 = vsel %vm857, %v2973, 0.0
      %2978 = vadd.xlane.f32.xlu0 %v2977
      %v2979 = vpop.xlane.xlu0 %2978
      %v2980 = vrcp.pop %v2976
      %v2981 = vrcp.pop %v2979
      %v2982 = vmul.f32 %v2971, %v2980
      %v2983 = vmul.f32 %v2973, %v2981
      %v2984 = vpack.c.bf16 %v2983, %v2982
      %2985 = vrot.lane.b32.xlu0 %v2653, 48
      %v2986 = vpop.permute.xlu0 %2985
      %v2988 = vsel %vm853, %v2984, 0
      %v2991 = vsel %vm883, %v2986, 0
      %2993 = vmatprep.subr.bf16.mxu0 0
      %2994 = vmatpush1.bf16.msra.mxu0 %v2991
      %2995 = vmatprep.subr.bf16.mxu0 0
      %2996 = vmatpush1.bf16.msra.mxu0 0
      %2997 = vmatprep.subr.bf16.mxu0 0
      %2998 = vmatpush1.bf16.msra.mxu0 0
      %2999 = vmatprep.subr.bf16.mxu0 0
      %3000 = vmatpush1.bf16.msra.mxu0 0
      %3001 = vmatprep.subr.bf16.mxu0 0
      %3002 = vmatpush1.bf16.msra.mxu0 0
      %3003 = vmatprep.subr.bf16.mxu0 0
      %3004 = vmatpush1.bf16.msra.mxu0 0
      %3005 = vmatprep.subr.bf16.mxu0 0
      %3006 = vmatpush1.bf16.msra.mxu0 0
      %3007 = vmatprep.subr.bf16.mxu0 0
      %3008 = vmatpush1.bf16.msra.mxu0 0
      %3009 = vmatprep.subr.bf16.mxu0 0
      %3010 = vmatpush1.bf16.msra.mxu0 0
      %3011 = vmatprep.subr.bf16.mxu0 0
      %3012 = vmatpush1.bf16.msra.mxu0 0
      %3013 = vmatprep.subr.bf16.mxu0 0
      %3014 = vmatpush1.bf16.msra.mxu0 0
      %3015 = vmatprep.subr.bf16.mxu0 0
      %3016 = vmatpush1.bf16.msra.mxu0 0
      %3017 = vmatprep.subr.bf16.mxu0 0
      %3018 = vmatpush1.bf16.msra.mxu0 0
      %3019 = vmatprep.subr.bf16.mxu0 0
      %3020 = vmatpush1.bf16.msra.mxu0 0
      %3021 = vmatprep.subr.bf16.mxu0 0
      %3022 = vmatpush1.bf16.msra.mxu0 0
      %3023 = vmatprep.subr.bf16.mxu0 0
      %3024 = vmatpush1.bf16.msra.mxu0 0
      %3025 = vmatprep.mubr.bf16.mxu0 0
      %3026 = vmatmul.mubr.bf16.gmra.mrb[0].mxu0 %v2988
      %v3027 = vpop.f32.mrb[0].mxu0
      %v3028 = vadd.f32 0.0, %v3027
      %v3029 = vpop.f32.mrb[0].mxu0
      %v3030 = vpop.f32.mrb[0].mxu0
      %v3031 = vadd.f32 0.0, %v3030
      %v3032 = vpop.f32.mrb[0].mxu0
      %3033 = vdwg.mxu0
      %3036 = vrot.lane.b32.xlu0 %v3028, 16
      %v3037 = vpop.permute.xlu0 %3036
      %3038 = vrot.lane.b32.xlu0 %v3031, 16
      %v3039 = vpop.permute.xlu0 %3038
      %3042 = vst.msk [vmem:[#allocation2] sm:$0xff] %vm1197, %v3037
      %3043 = vst.msk [vmem:[#allocation2 + $0x8] sm:$0x3] %vm1199, %v3039
      %3044 = vrot.lane.b32.xlu0 %v2653, 104
      %v3045 = vpop.permute.xlu0 %3044
      %3046 = vrot.lane.b32.xlu0 %v2653, 72
      %v3047 = vpop.permute.xlu0 %3046
      %v3049 = vsel %vm805, %v3045, 0
      %v3052 = vsel %vm805, %v3047, 0
      %3054 = vmatprep.subr.bf16.mxu0 0
      %3055 = vmatpush1.bf16.xpose.msra.mxu0 %v3052
      %3056 = vmatprep.subr.bf16.mxu0 0
      %3057 = vmatpush1.bf16.xpose.msra.mxu0 0
      %3058 = vmatprep.subr.bf16.mxu0 0
      %3059 = vmatpush1.bf16.xpose.msra.mxu0 0
      %3060 = vmatprep.subr.bf16.mxu0 0
      %3061 = vmatpush1.bf16.xpose.msra.mxu0 0
      %3062 = vmatprep.subr.bf16.mxu0 0
      %3063 = vmatpush1.bf16.xpose.msra.mxu0 0
      %3064 = vmatprep.subr.bf16.mxu0 0
      %3065 = vmatpush1.bf16.xpose.msra.mxu0 0
      %3066 = vmatprep.subr.bf16.mxu0 0
      %3067 = vmatpush1.bf16.xpose.msra.mxu0 0
      %3068 = vmatprep.subr.bf16.mxu0 0
      %3069 = vmatpush1.bf16.xpose.msra.mxu0 0
      %3070 = vmatprep.subr.bf16.mxu0 0
      %3071 = vmatpush1.bf16.xpose.msra.mxu0 0
      %3072 = vmatprep.subr.bf16.mxu0 0
      %3073 = vmatpush1.bf16.xpose.msra.mxu0 0
      %3074 = vmatprep.subr.bf16.mxu0 0
      %3075 = vmatpush1.bf16.xpose.msra.mxu0 0
      %3076 = vmatprep.subr.bf16.mxu0 0
      %3077 = vmatpush1.bf16.xpose.msra.mxu0 0
      %3078 = vmatprep.subr.bf16.mxu0 0
      %3079 = vmatpush1.bf16.xpose.msra.mxu0 0
      %3080 = vmatprep.subr.bf16.mxu0 0
      %3081 = vmatpush1.bf16.xpose.msra.mxu0 0
      %3082 = vmatprep.subr.bf16.mxu0 0
      %3083 = vmatpush1.bf16.xpose.msra.mxu0 0
      %3084 = vmatprep.subr.bf16.mxu0 0
      %3085 = vmatpush1.bf16.xpose.msra.mxu0 0
      %3086 = vmatprep.mubr.bf16.mxu0 0
      %3087 = vmatmul.mubr.bf16.gmra.mrb[0].mxu0 %v3049
      %v3088 = vpop.f32.mrb[0].mxu0
      %v3089 = vadd.f32 %v496, %v3088
      %v3090 = vpop.f32.mrb[0].mxu0
      %v3091 = vpop.f32.mrb[0].mxu0
      %v3092 = vadd.f32 %v497, %v3091
      %v3093 = vpop.f32.mrb[0].mxu0
      %3094 = vdwg.mxu0
      %v3095 = vsel %vm853, %v3089, -inf
      %3096 = vmax.xlane.f32.xlu0 %v3095
      %v3097 = vpop.xlane.xlu0 %3096
      %v3098 = vsel %vm857, %v3092, -inf
      %3099 = vmax.xlane.f32.xlu0 %v3098
      %v3100 = vpop.xlane.xlu0 %3099
      %v3101 = vsub.f32 %v3089, %v3097
      %v3102 = vsub.f32 %v3092, %v3100
      %v3103 = vmul.f32 %v3101, 1.442695
      %v3104 = vpow.pop %v3103
      %v3105 = vmul.f32 %v3102, 1.442695
      %v3106 = vpow.pop %v3105
      %v3107 = vsel %vm853, %v3104, 0.0
      %3108 = vadd.xlane.f32.xlu0 %v3107
      %v3109 = vpop.xlane.xlu0 %3108
      %v3110 = vsel %vm857, %v3106, 0.0
      %3111 = vadd.xlane.f32.xlu0 %v3110
      %v3112 = vpop.xlane.xlu0 %3111
      %v3113 = vrcp.pop %v3109
      %v3114 = vrcp.pop %v3112
      %v3115 = vmul.f32 %v3104, %v3113
      %v3116 = vmul.f32 %v3106, %v3114
      %v3117 = vpack.c.bf16 %v3116, %v3115
      %3118 = vrot.lane.b32.xlu0 %v2653, 40
      %v3119 = vpop.permute.xlu0 %3118
      %v3121 = vsel %vm853, %v3117, 0
      %v3124 = vsel %vm883, %v3119, 0
      %3126 = vmatprep.subr.bf16.mxu0 0
      %3127 = vmatpush1.bf16.msra.mxu0 %v3124
      %3128 = vmatprep.subr.bf16.mxu0 0
      %3129 = vmatpush1.bf16.msra.mxu0 0
      %3130 = vmatprep.subr.bf16.mxu0 0
      %3131 = vmatpush1.bf16.msra.mxu0 0
      %3132 = vmatprep.subr.bf16.mxu0 0
      %3133 = vmatpush1.bf16.msra.mxu0 0
      %3134 = vmatprep.subr.bf16.mxu0 0
      %3135 = vmatpush1.bf16.msra.mxu0 0
      %3136 = vmatprep.subr.bf16.mxu0 0
      %3137 = vmatpush1.bf16.msra.mxu0 0
      %3138 = vmatprep.subr.bf16.mxu0 0
      %3139 = vmatpush1.bf16.msra.mxu0 0
      %3140 = vmatprep.subr.bf16.mxu0 0
      %3141 = vmatpush1.bf16.msra.mxu0 0
      %3142 = vmatprep.subr.bf16.mxu0 0
      %3143 = vmatpush1.bf16.msra.mxu0 0
      %3144 = vmatprep.subr.bf16.mxu0 0
      %3145 = vmatpush1.bf16.msra.mxu0 0
      %3146 = vmatprep.subr.bf16.mxu0 0
      %3147 = vmatpush1.bf16.msra.mxu0 0
      %3148 = vmatprep.subr.bf16.mxu0 0
      %3149 = vmatpush1.bf16.msra.mxu0 0
      %3150 = vmatprep.subr.bf16.mxu0 0
      %3151 = vmatpush1.bf16.msra.mxu0 0
      %3152 = vmatprep.subr.bf16.mxu0 0
      %3153 = vmatpush1.bf16.msra.mxu0 0
      %3154 = vmatprep.subr.bf16.mxu0 0
      %3155 = vmatpush1.bf16.msra.mxu0 0
      %3156 = vmatprep.subr.bf16.mxu0 0
      %3157 = vmatpush1.bf16.msra.mxu0 0
      %3158 = vmatprep.mubr.bf16.mxu0 0
      %3159 = vmatmul.mubr.bf16.gmra.mrb[0].mxu0 %v3121
      %v3160 = vpop.f32.mrb[0].mxu0
      %v3161 = vadd.f32 0.0, %v3160
      %v3162 = vpop.f32.mrb[0].mxu0
      %v3163 = vpop.f32.mrb[0].mxu0
      %v3164 = vadd.f32 0.0, %v3163
      %v3165 = vpop.f32.mrb[0].mxu0
      %3166 = vdwg.mxu0
      %3169 = vrot.lane.b32.xlu0 %v3161, 24
      %v3170 = vpop.permute.xlu0 %3169
      %3171 = vrot.lane.b32.xlu0 %v3164, 24
      %v3172 = vpop.permute.xlu0 %3171
      %3175 = vst.msk [vmem:[#allocation2] sm:$0xff] %vm1332, %v3170
      %3176 = vst.msk [vmem:[#allocation2 + $0x8] sm:$0x3] %vm1334, %v3172
      %3177 = vst.msk [vmem:[%s494] sm:$0xff] %vm653, %v2541
      %3178 = vst.msk [vmem:[%s494 + $0x8] sm:$0x3] %vm657, %v2542
      %p3179 = scmp.lt.s32.totalorder %s26, 1
      %s3180 = scalar_select %p3179, %s26, 1
      %s3181 = smul.addr %s3180, 2
      %s3182 = smul.addr %s3181, 8
      %s3183 = scalar_lea.vmem %s15, %s3182
      // Predicated region
      $region81: #{clip_vision_tower_forward.1} parent=79 // pred_check
        %p3184 = pneg %p364
      $region82: #{clip_vision_tower_forward.1} parent=79 // pred_check_branch
        %3186 = sbr.rel (%p3184) target = $region84
      $region83: #{clip_vision_tower_forward.1} parent=79 // pred_region
        _
      $region84: #{clip_vision_tower_forward.1} parent=79 // pred_fallthru
        _
    $region80: #{clip_vision_tower_forward.1} parent=5 // pred_fallthru
      _
    %p3187 = scmp.le.s32.totalorder 2, %s21
    // Predicated region
    $region85: #{clip_vision_tower_forward.1} parent=5 // pred_check
      %p3188 = pneg %p3187
    $region86: #{clip_vision_tower_forward.1} parent=5 // pred_check_branch
      %3190 = sbr.rel (%p3188) target = $region88
    $region87: #{clip_vision_tower_forward.1} parent=5 // pred_region
      %s3191 = ssub.s32 %s21, 2
      // Predicated region
      $region89: #{clip_vision_tower_forward.1} parent=87 // pred_check
        %p3192 = pneg %p370
      $region90: #{clip_vision_tower_forward.1} parent=87 // pred_check_branch
        %3194 = sbr.rel (%p3192) target = $region92
      $region91: #{clip_vision_tower_forward.1} parent=87 // pred_region
        %p3195 = scmp.lt.s32.totalorder %s27, 1
        %s3196 = scalar_select %p3195, %s27, 1
        %s3197 = smul.addr %s3196, 2
        %s3198 = smul.addr %s3197, 8
        %s3199 = scalar_lea.vmem %s15, %s3198
      $region92: #{clip_vision_tower_forward.1} parent=87 // pred_fallthru
        _
    $region88: #{clip_vision_tower_forward.1} parent=5 // pred_fallthru
      _
  $region6: #{clip_vision_tower_forward.1} parent=0 // loop_footer
    %s25 = sadd.s32 1, %s21
  $region7: #{clip_vision_tower_forward.1} parent=0 // loop_footer_branch
    %20 = sbr.rel target = $region3
  $region8: #{clip_vision_tower_forward.1} parent=0 // loop_exit
    _

</llo_original>
